<compile_context>
chip_gen: v5e
topology: v5e:2x2
jax: 0.10.0
libtpu: 0.0.40
codegen_flags: <defaults>
</compile_context>

<pallas_src>
import functools

import jax
import jax.numpy as jnp
from jax.experimental import pallas as pl
from jax.experimental.pallas import tpu as pltpu

BN_EPS = 1e-5


# ---------------------------------------------------------------------------
# Helpers
# ---------------------------------------------------------------------------
def _round_up(x, m):
    return (x + m - 1) // m * m


def _pick_tile(dim, candidates):
    """Largest candidate tile that exactly divides `dim` (dim pre-padded)."""
    for c in candidates:
        if dim % c == 0:
            return c
    return candidates[-1]


# ---------------------------------------------------------------------------
# Core Pallas kernel: tiled matmul + fused bias (+ ReLU) epilogue
# ---------------------------------------------------------------------------
def _mm_bias_act_kernel(x_ref, w_ref, b_ref, o_ref, acc_ref, *, relu):
    """acc += x @ w over the K grid axis; on the last K step write
    maybe_relu(acc + bias) to the output tile."""
    k = pl.program_id(2)

    @pl.when(k == 0)
    def _init():
        acc_ref[...] = jnp.zeros_like(acc_ref)

    acc_ref[...] += jnp.dot(
        x_ref[...], w_ref[...], preferred_element_type=jnp.float32
    )

    @pl.when(k == pl.num_programs(2) - 1)
    def _finalize():
        y = acc_ref[...] + b_ref[...]
        if relu:
            y = jnp.maximum(y, 0.0)
        o_ref[...] = y.astype(o_ref.dtype)


def matmul_bias_act(x2d, w2d, bias, *, relu):
    """maybe_relu(x2d @ w2d + bias).

    x2d:(M,K) f32, w2d:(K,N) f32 (BN scale pre-folded), bias:(N,) f32.
    Inputs are cast to bf16 (f32 accumulation); M/K/N are padded to tile
    multiples (K,N lane-dense multiples of 128) and the result sliced back.
    """
    M, K = x2d.shape
    K2, N = w2d.shape
    assert K == K2, (K, K2)

    Mp = _round_up(M, 8)
    Kp = _round_up(K, 128)
    Np = _round_up(N, 128)

    tm = _pick_tile(Mp, (512, 256, 128, 64, 32, 16, 8))
    tk = _pick_tile(Kp, (512, 384, 256, 128))
    tn = _pick_tile(Np, (256, 128))

    # Zero-pad (padding contributes nothing to the dot) and cast to bf16.
    xp = jnp.pad(x2d.astype(jnp.bfloat16), ((0, Mp - M), (0, Kp - K)))
    wp = jnp.pad(w2d.astype(jnp.bfloat16), ((0, Kp - K), (0, Np - N)))
    bp = jnp.pad(bias.reshape(1, N).astype(jnp.float32), ((0, 0), (0, Np - N)))

    grid = (Mp // tm, Np // tn, Kp // tk)

    cost = pl.CostEstimate(
        flops=2 * Mp * Np * Kp,
        transcendentals=0,
        bytes_accessed=xp.size * 2 + wp.size * 2 + bp.size * 4 + Mp * Np * 4,
    )

    out = pl.pallas_call(
        functools.partial(_mm_bias_act_kernel, relu=relu),
        out_shape=jax.ShapeDtypeStruct((Mp, Np), jnp.float32),
        grid_spec=pltpu.PrefetchScalarGridSpec(
            num_scalar_prefetch=0,
            grid=grid,
            in_specs=[
                pl.BlockSpec((tm, tk), lambda i, j, k: (i, k)),
                pl.BlockSpec((tk, tn), lambda i, j, k: (k, j)),
                pl.BlockSpec((1, tn), lambda i, j, k: (0, j)),
            ],
            out_specs=pl.BlockSpec((tm, tn), lambda i, j, k: (i, j)),
            scratch_shapes=[pltpu.VMEM((tm, tn), jnp.float32)],
        ),
        compiler_params=pltpu.CompilerParams(
            dimension_semantics=("parallel", "parallel", "arbitrary"),
            vmem_limit_bytes=32 * 1024 * 1024,
        ),
        cost_estimate=cost,
    )(xp, wp, bp)

    return out[:M, :N]


# ---------------------------------------------------------------------------
# Glue: im2col (pure data movement, stays in plain JAX / XLA)
# ---------------------------------------------------------------------------
def im2col(x_nhwc, k, dilation, padding):
    """Dilated 'same'-style im2col.  Returns (N*H*W, K*K*C) in (kh, kw, c) order."""
    n, h, w, c = x_nhwc.shape
    if k == 1:
        return x_nhwc.reshape(n * h * w, c)
    xp = jnp.pad(x_nhwc, ((0, 0), (padding, padding), (padding, padding), (0, 0)))
    cols = []
    for kh in range(k):
        for kw in range(k):
            cols.append(
                xp[:, kh * dilation:kh * dilation + h, kw * dilation:kw * dilation + w, :]
            )
    return jnp.concatenate(cols, axis=-1).reshape(n * h * w, k * k * c)


# ---------------------------------------------------------------------------
# Parameter construction (deterministic, BN scale pre-folded into weights)
# ---------------------------------------------------------------------------
def make_params(key, in_channels, channels, num_classes, dilations):
    keys = jax.random.split(key, len(dilations) + 3)

    def kaiming(k, shape, fan_out):
        std = (2.0 / fan_out) ** 0.5
        return std * jax.random.normal(k, shape, jnp.float32)

    # Eval-mode BatchNorm affine: scale = 1/sqrt(var+eps) = 1/sqrt(1+eps), shift = 0.
    bn_scale = 1.0 / (1.0 + BN_EPS) ** 0.5
    zero_bias = jnp.zeros((channels,), jnp.float32)

    # image_pool 1x1 conv: (Cin, C), BN scale folded in.
    w_pool = kaiming(keys[0], (in_channels, channels), fan_out=channels) * bn_scale

    aspp = []
    for i, d in enumerate(dilations):
        k = 1 if d == 1 else 3
        w = kaiming(keys[1 + i], (k * k * in_channels, channels),
                    fan_out=k * k * channels) * bn_scale
        aspp.append((w, zero_bias))

    n_branches = len(dilations) + 1
    w_bottleneck = kaiming(
        keys[1 + len(dilations)],
        (9 * n_branches * channels, channels),
        fan_out=9 * channels,
    ) * bn_scale

    k1, k2 = jax.random.split(keys[2 + len(dilations)])
    w_seg = 0.05 * jax.random.normal(k1, (channels, num_classes), jnp.float32)
    b_seg = 0.05 * jax.random.normal(k2, (num_classes,), jnp.float32)

    return {
        "w_pool": w_pool,
        "b_pool": zero_bias,
        "aspp": aspp,
        "w_bottleneck": w_bottleneck,
        "b_bottleneck": zero_bias,
        "w_seg": w_seg,
        "b_seg": b_seg,
    }


# ---------------------------------------------------------------------------
# ASPPHead forward
# ---------------------------------------------------------------------------
def aspp_head_forward(x_nhwc, params, *, dilations, channels, num_classes):
    n, h, w, _ = x_nhwc.shape

    # --- image pool branch: AdaptiveAvgPool2d(1) + 1x1 ConvModule + bilinear up ---
    # Pool is tiny and bandwidth-trivial -> plain-JAX glue; matmul stays in Pallas.
    pooled = jnp.mean(x_nhwc, axis=(1, 2))                                   # (N, Cin)
    b0 = matmul_bias_act(pooled, params["w_pool"], params["b_pool"], relu=True)  # (N, C)
    branch0 = jnp.broadcast_to(b0[:, None, None, :], (n, h, w, channels))

    # --- ASPP branches (1x1 and dilated 3x3 convs) ---
    outs = [branch0]
    for d, (w_d, b_d) in zip(dilations, params["aspp"]):
        k = 1 if d == 1 else 3
        pad = 0 if d == 1 else d
        cols = im2col(x_nhwc, k, d, pad)            # (N*H*W, k*k*Cin)
        y = matmul_bias_act(cols, w_d, b_d, relu=True)
        outs.append(y.reshape(n, h, w, channels))

    # --- concat + bottleneck 3x3 ConvModule ---
    cat = jnp.concatenate(outs, axis=-1)            # (N, H, W, 5*C)
    cols_b = im2col(cat, 3, 1, 1)                   # (N*H*W, 9*5*C)
    feat = matmul_bias_act(cols_b, params["w_bottleneck"], params["b_bottleneck"],
                           relu=True)
    feat = feat.reshape(n, h, w, channels)

    # --- cls_seg: dropout = identity (eval) + 1x1 conv with bias, no BN/ReLU ---
    logits = matmul_bias_act(
        feat.reshape(n * h * w, channels), params["w_seg"], params["b_seg"], relu=False
    )
    return logits.reshape(n, h, w, num_classes)


# ---------------------------------------------------------------------------
if __name__ == "__main__":
    key = jax.random.PRNGKey(0)
    kx, kp = jax.random.split(key)

    N, H, W = 2, 16, 16
    in_channels, channels, num_classes = 8, 8, 4
    dilations = (1, 6, 12, 18)

    x = jax.random.normal(kx, (N, H, W, in_channels), jnp.float32)  # NHWC
    params = make_params(kp, in_channels, channels, num_classes, dilations)

    fwd = jax.jit(
        functools.partial(
            aspp_head_forward,
            dilations=dilations,
            channels=channels,
            num_classes=num_classes,
        )
    )
    out = fwd(x, params)
    jax.block_until_ready(out)
    assert out.shape == (N, H, W, num_classes), out.shape
    assert out.dtype == jnp.float32
    print("KERNEL_OK")
</pallas_src>

<mosaic_0001>
module attributes {stable_mosaic.version = 11 : i64} {
  func.func @_mm_bias_act_kernel(%arg0: i32, %arg1: i32, %arg2: i32, %arg3: memref<512x128xbf16, #tpu.memory_space<vmem>>, %arg4: memref<128x128xbf16, #tpu.memory_space<vmem>>, %arg5: memref<1x128xf32, #tpu.memory_space<vmem>>, %arg6: memref<512x128xf32, #tpu.memory_space<vmem>>, %arg7: memref<512x128xf32, #tpu.memory_space<vmem>>) attributes {dimension_semantics = [#tpu.dimension_semantics<parallel>, #tpu.dimension_semantics<parallel>, #tpu.dimension_semantics<arbitrary>], iteration_bounds = array<i64: 1, 1, 1>, scalar_prefetch = 0 : i64, scratch_operands = 1 : i64, tpu.core_type = #tpu.core_type<tc>, window_params = [{transform_indices = @transform_0, window_bounds = array<i64: 512, 128>}, {transform_indices = @transform_1, window_bounds = array<i64: 128, 128>}, {transform_indices = @transform_2, window_bounds = array<i64: 1, 128>}, {transform_indices = @transform_3, window_bounds = array<i64: 512, 128>}]} {
    %c0_i32 = arith.constant 0 : i32
    %0 = arith.cmpi eq, %arg2, %c0_i32 : i32
    %1 = arith.extui %0 : i1 to i32
    %c0_i32_0 = arith.constant 0 : i32
    %2 = arith.cmpi ne, %1, %c0_i32_0 : i32
    scf.if %2 {
      %cst_10 = arith.constant 0.000000e+00 : f32
      %12 = vector.broadcast %cst_10 : f32 to vector<512x128xf32>
      %c0_11 = arith.constant 0 : index
      %c0_12 = arith.constant 0 : index
      %13 = vector.load %arg7[%c0_11, %c0_12] : memref<512x128xf32, #tpu.memory_space<vmem>>, vector<512x128xf32>
      tpu.vector_store %arg7[%c0_11, %c0_12], %12 {strides = array<i32>} : memref<512x128xf32, #tpu.memory_space<vmem>>, vector<512x128xf32>,
    } else {
    }
    %c0 = arith.constant 0 : index
    %c0_1 = arith.constant 0 : index
    %3 = vector.load %arg7[%c0, %c0_1] : memref<512x128xf32, #tpu.memory_space<vmem>>, vector<512x128xf32>
    %c0_2 = arith.constant 0 : index
    %c0_3 = arith.constant 0 : index
    %4 = vector.load %arg3[%c0_2, %c0_3] : memref<512x128xbf16, #tpu.memory_space<vmem>>, vector<512x128xbf16>
    %c0_4 = arith.constant 0 : index
    %c0_5 = arith.constant 0 : index
    %5 = vector.load %arg4[%c0_4, %c0_5] : memref<128x128xbf16, #tpu.memory_space<vmem>>, vector<128x128xbf16>
    %cst = arith.constant dense<0.000000e+00> : vector<512x128xf32>
    %6 = tpu.matmul %4, %5, %cst {dimension_numbers = #tpu.dot_dimension_numbers<[1], [0], [0], [1], [0, 0, 1, 1], [], []>} : vector<512x128xbf16>, vector<128x128xbf16>, vector<512x128xf32> -> vector<512x128xf32>
    %7 = arith.addf %3, %6 : vector<512x128xf32>
    %c0_6 = arith.constant 0 : index
    %c0_7 = arith.constant 0 : index
    %8 = vector.load %arg7[%c0_6, %c0_7] : memref<512x128xf32, #tpu.memory_space<vmem>>, vector<512x128xf32>
    tpu.vector_store %arg7[%c0_6, %c0_7], %7 {strides = array<i32>} : memref<512x128xf32, #tpu.memory_space<vmem>>, vector<512x128xf32>,
    %c0_i32_8 = arith.constant 0 : i32
    %9 = arith.cmpi eq, %arg2, %c0_i32_8 : i32
    %10 = arith.extui %9 : i1 to i32
    %c0_i32_9 = arith.constant 0 : i32
    %11 = arith.cmpi ne, %10, %c0_i32_9 : i32
    scf.if %11 {
      %c0_10 = arith.constant 0 : index
      %c0_11 = arith.constant 0 : index
      %12 = vector.load %arg7[%c0_10, %c0_11] : memref<512x128xf32, #tpu.memory_space<vmem>>, vector<512x128xf32>
      %c0_12 = arith.constant 0 : index
      %c0_13 = arith.constant 0 : index
      %13 = vector.load %arg5[%c0_12, %c0_13] : memref<1x128xf32, #tpu.memory_space<vmem>>, vector<1x128xf32>
      %14 = vector.broadcast %13 : vector<1x128xf32> to vector<512x128xf32>
      %15 = arith.addf %12, %14 : vector<512x128xf32>
      %cst_14 = arith.constant 0.000000e+00 : f32
      %16 = vector.broadcast %cst_14 : f32 to vector<512x128xf32>
      %17 = arith.maximumf %15, %16 : vector<512x128xf32>
      %c0_15 = arith.constant 0 : index
      %c0_16 = arith.constant 0 : index
      %18 = vector.load %arg6[%c0_15, %c0_16] : memref<512x128xf32, #tpu.memory_space<vmem>>, vector<512x128xf32>
      tpu.vector_store %arg6[%c0_15, %c0_16], %17 {strides = array<i32>} : memref<512x128xf32, #tpu.memory_space<vmem>>, vector<512x128xf32>,
    } else {
    }
    return
  }
  func.func @transform_0(%arg0: i32, %arg1: i32, %arg2: i32) -> (i32, i32) {
    %c0_i32 = arith.constant 0 : i32
    return %arg0, %arg2 : i32, i32
  }
  func.func @transform_1(%arg0: i32, %arg1: i32, %arg2: i32) -> (i32, i32) {
    %c0_i32 = arith.constant 0 : i32
    return %arg2, %arg1 : i32, i32
  }
  func.func @transform_2(%arg0: i32, %arg1: i32, %arg2: i32) -> (i32, i32) {
    %c0_i32 = arith.constant 0 : i32
    %c0_i32_0 = arith.constant 0 : i32
    return %c0_i32, %arg1 : i32, i32
  }
  func.func @transform_3(%arg0: i32, %arg1: i32, %arg2: i32) -> (i32, i32) {
    %c0_i32 = arith.constant 0 : i32
    return %arg0, %arg1 : i32, i32
  }
}

module attributes {stable_mosaic.version = 11 : i64} {
  func.func @_mm_bias_act_kernel(%arg0: i32, %arg1: i32, %arg2: i32, %arg3: memref<8x128xbf16, #tpu.memory_space<vmem>>, %arg4: memref<128x128xbf16, #tpu.memory_space<vmem>>, %arg5: memref<1x128xf32, #tpu.memory_space<vmem>>, %arg6: memref<8x128xf32, #tpu.memory_space<vmem>>, %arg7: memref<8x128xf32, #tpu.memory_space<vmem>>) attributes {dimension_semantics = [#tpu.dimension_semantics<parallel>, #tpu.dimension_semantics<parallel>, #tpu.dimension_semantics<arbitrary>], iteration_bounds = array<i64: 1, 1, 1>, scalar_prefetch = 0 : i64, scratch_operands = 1 : i64, tpu.core_type = #tpu.core_type<tc>, window_params = [{transform_indices = @transform_0, window_bounds = array<i64: 8, 128>}, {transform_indices = @transform_1, window_bounds = array<i64: 128, 128>}, {transform_indices = @transform_2, window_bounds = array<i64: 1, 128>}, {transform_indices = @transform_3, window_bounds = array<i64: 8, 128>}]} {
    %c0_i32 = arith.constant 0 : i32
    %0 = arith.cmpi eq, %arg2, %c0_i32 : i32
    %1 = arith.extui %0 : i1 to i32
    %c0_i32_0 = arith.constant 0 : i32
    %2 = arith.cmpi ne, %1, %c0_i32_0 : i32
    scf.if %2 {
      %cst_10 = arith.constant 0.000000e+00 : f32
      %12 = vector.broadcast %cst_10 : f32 to vector<8x128xf32>
      %c0_11 = arith.constant 0 : index
      %c0_12 = arith.constant 0 : index
      %13 = vector.load %arg7[%c0_11, %c0_12] : memref<8x128xf32, #tpu.memory_space<vmem>>, vector<8x128xf32>
      tpu.vector_store %arg7[%c0_11, %c0_12], %12 {strides = array<i32>} : memref<8x128xf32, #tpu.memory_space<vmem>>, vector<8x128xf32>,
    } else {
    }
    %c0 = arith.constant 0 : index
    %c0_1 = arith.constant 0 : index
    %3 = vector.load %arg7[%c0, %c0_1] : memref<8x128xf32, #tpu.memory_space<vmem>>, vector<8x128xf32>
    %c0_2 = arith.constant 0 : index
    %c0_3 = arith.constant 0 : index
    %4 = vector.load %arg3[%c0_2, %c0_3] : memref<8x128xbf16, #tpu.memory_space<vmem>>, vector<8x128xbf16>
    %c0_4 = arith.constant 0 : index
    %c0_5 = arith.constant 0 : index
    %5 = vector.load %arg4[%c0_4, %c0_5] : memref<128x128xbf16, #tpu.memory_space<vmem>>, vector<128x128xbf16>
    %cst = arith.constant dense<0.000000e+00> : vector<8x128xf32>
    %6 = tpu.matmul %4, %5, %cst {dimension_numbers = #tpu.dot_dimension_numbers<[1], [0], [0], [1], [0, 0, 1, 1], [], []>} : vector<8x128xbf16>, vector<128x128xbf16>, vector<8x128xf32> -> vector<8x128xf32>
    %7 = arith.addf %3, %6 : vector<8x128xf32>
    %c0_6 = arith.constant 0 : index
    %c0_7 = arith.constant 0 : index
    %8 = vector.load %arg7[%c0_6, %c0_7] : memref<8x128xf32, #tpu.memory_space<vmem>>, vector<8x128xf32>
    tpu.vector_store %arg7[%c0_6, %c0_7], %7 {strides = array<i32>} : memref<8x128xf32, #tpu.memory_space<vmem>>, vector<8x128xf32>,
    %c0_i32_8 = arith.constant 0 : i32
    %9 = arith.cmpi eq, %arg2, %c0_i32_8 : i32
    %10 = arith.extui %9 : i1 to i32
    %c0_i32_9 = arith.constant 0 : i32
    %11 = arith.cmpi ne, %10, %c0_i32_9 : i32
    scf.if %11 {
      %c0_10 = arith.constant 0 : index
      %c0_11 = arith.constant 0 : index
      %12 = vector.load %arg7[%c0_10, %c0_11] : memref<8x128xf32, #tpu.memory_space<vmem>>, vector<8x128xf32>
      %c0_12 = arith.constant 0 : index
      %c0_13 = arith.constant 0 : index
      %13 = vector.load %arg5[%c0_12, %c0_13] : memref<1x128xf32, #tpu.memory_space<vmem>>, vector<1x128xf32>
      %14 = vector.broadcast %13 : vector<1x128xf32> to vector<8x128xf32>
      %15 = arith.addf %12, %14 : vector<8x128xf32>
      %cst_14 = arith.constant 0.000000e+00 : f32
      %16 = vector.broadcast %cst_14 : f32 to vector<8x128xf32>
      %17 = arith.maximumf %15, %16 : vector<8x128xf32>
      %c0_15 = arith.constant 0 : index
      %c0_16 = arith.constant 0 : index
      %18 = vector.load %arg6[%c0_15, %c0_16] : memref<8x128xf32, #tpu.memory_space<vmem>>, vector<8x128xf32>
      tpu.vector_store %arg6[%c0_15, %c0_16], %17 {strides = array<i32>} : memref<8x128xf32, #tpu.memory_space<vmem>>, vector<8x128xf32>,
    } else {
    }
    return
  }
  func.func @transform_0(%arg0: i32, %arg1: i32, %arg2: i32) -> (i32, i32) {
    %c0_i32 = arith.constant 0 : i32
    return %arg0, %arg2 : i32, i32
  }
  func.func @transform_1(%arg0: i32, %arg1: i32, %arg2: i32) -> (i32, i32) {
    %c0_i32 = arith.constant 0 : i32
    return %arg2, %arg1 : i32, i32
  }
  func.func @transform_2(%arg0: i32, %arg1: i32, %arg2: i32) -> (i32, i32) {
    %c0_i32 = arith.constant 0 : i32
    %c0_i32_0 = arith.constant 0 : i32
    return %c0_i32, %arg1 : i32, i32
  }
  func.func @transform_3(%arg0: i32, %arg1: i32, %arg2: i32) -> (i32, i32) {
    %c0_i32 = arith.constant 0 : i32
    return %arg0, %arg1 : i32, i32
  }
}

module attributes {stable_mosaic.version = 11 : i64} {
  func.func @_mm_bias_act_kernel(%arg0: i32, %arg1: i32, %arg2: i32, %arg3: memref<512x384xbf16, #tpu.memory_space<vmem>>, %arg4: memref<384x128xbf16, #tpu.memory_space<vmem>>, %arg5: memref<1x128xf32, #tpu.memory_space<vmem>>, %arg6: memref<512x128xf32, #tpu.memory_space<vmem>>, %arg7: memref<512x128xf32, #tpu.memory_space<vmem>>) attributes {dimension_semantics = [#tpu.dimension_semantics<parallel>, #tpu.dimension_semantics<parallel>, #tpu.dimension_semantics<arbitrary>], iteration_bounds = array<i64: 1, 1, 1>, scalar_prefetch = 0 : i64, scratch_operands = 1 : i64, tpu.core_type = #tpu.core_type<tc>, window_params = [{transform_indices = @transform_0, window_bounds = array<i64: 512, 384>}, {transform_indices = @transform_1, window_bounds = array<i64: 384, 128>}, {transform_indices = @transform_2, window_bounds = array<i64: 1, 128>}, {transform_indices = @transform_3, window_bounds = array<i64: 512, 128>}]} {
    %c0_i32 = arith.constant 0 : i32
    %0 = arith.cmpi eq, %arg2, %c0_i32 : i32
    %1 = arith.extui %0 : i1 to i32
    %c0_i32_0 = arith.constant 0 : i32
    %2 = arith.cmpi ne, %1, %c0_i32_0 : i32
    scf.if %2 {
      %cst_10 = arith.constant 0.000000e+00 : f32
      %12 = vector.broadcast %cst_10 : f32 to vector<512x128xf32>
      %c0_11 = arith.constant 0 : index
      %c0_12 = arith.constant 0 : index
      %13 = vector.load %arg7[%c0_11, %c0_12] : memref<512x128xf32, #tpu.memory_space<vmem>>, vector<512x128xf32>
      tpu.vector_store %arg7[%c0_11, %c0_12], %12 {strides = array<i32>} : memref<512x128xf32, #tpu.memory_space<vmem>>, vector<512x128xf32>,
    } else {
    }
    %c0 = arith.constant 0 : index
    %c0_1 = arith.constant 0 : index
    %3 = vector.load %arg7[%c0, %c0_1] : memref<512x128xf32, #tpu.memory_space<vmem>>, vector<512x128xf32>
    %c0_2 = arith.constant 0 : index
    %c0_3 = arith.constant 0 : index
    %4 = vector.load %arg3[%c0_2, %c0_3] : memref<512x384xbf16, #tpu.memory_space<vmem>>, vector<512x384xbf16>
    %c0_4 = arith.constant 0 : index
    %c0_5 = arith.constant 0 : index
    %5 = vector.load %arg4[%c0_4, %c0_5] : memref<384x128xbf16, #tpu.memory_space<vmem>>, vector<384x128xbf16>
    %cst = arith.constant dense<0.000000e+00> : vector<512x128xf32>
    %6 = tpu.matmul %4, %5, %cst {dimension_numbers = #tpu.dot_dimension_numbers<[1], [0], [0], [1], [0, 0, 1, 1], [], []>} : vector<512x384xbf16>, vector<384x128xbf16>, vector<512x128xf32> -> vector<512x128xf32>
    %7 = arith.addf %3, %6 : vector<512x128xf32>
    %c0_6 = arith.constant 0 : index
    %c0_7 = arith.constant 0 : index
    %8 = vector.load %arg7[%c0_6, %c0_7] : memref<512x128xf32, #tpu.memory_space<vmem>>, vector<512x128xf32>
    tpu.vector_store %arg7[%c0_6, %c0_7], %7 {strides = array<i32>} : memref<512x128xf32, #tpu.memory_space<vmem>>, vector<512x128xf32>,
    %c0_i32_8 = arith.constant 0 : i32
    %9 = arith.cmpi eq, %arg2, %c0_i32_8 : i32
    %10 = arith.extui %9 : i1 to i32
    %c0_i32_9 = arith.constant 0 : i32
    %11 = arith.cmpi ne, %10, %c0_i32_9 : i32
    scf.if %11 {
      %c0_10 = arith.constant 0 : index
      %c0_11 = arith.constant 0 : index
      %12 = vector.load %arg7[%c0_10, %c0_11] : memref<512x128xf32, #tpu.memory_space<vmem>>, vector<512x128xf32>
      %c0_12 = arith.constant 0 : index
      %c0_13 = arith.constant 0 : index
      %13 = vector.load %arg5[%c0_12, %c0_13] : memref<1x128xf32, #tpu.memory_space<vmem>>, vector<1x128xf32>
      %14 = vector.broadcast %13 : vector<1x128xf32> to vector<512x128xf32>
      %15 = arith.addf %12, %14 : vector<512x128xf32>
      %cst_14 = arith.constant 0.000000e+00 : f32
      %16 = vector.broadcast %cst_14 : f32 to vector<512x128xf32>
      %17 = arith.maximumf %15, %16 : vector<512x128xf32>
      %c0_15 = arith.constant 0 : index
      %c0_16 = arith.constant 0 : index
      %18 = vector.load %arg6[%c0_15, %c0_16] : memref<512x128xf32, #tpu.memory_space<vmem>>, vector<512x128xf32>
      tpu.vector_store %arg6[%c0_15, %c0_16], %17 {strides = array<i32>} : memref<512x128xf32, #tpu.memory_space<vmem>>, vector<512x128xf32>,
    } else {
    }
    return
  }
  func.func @transform_0(%arg0: i32, %arg1: i32, %arg2: i32) -> (i32, i32) {
    %c0_i32 = arith.constant 0 : i32
    return %arg0, %arg2 : i32, i32
  }
  func.func @transform_1(%arg0: i32, %arg1: i32, %arg2: i32) -> (i32, i32) {
    %c0_i32 = arith.constant 0 : i32
    return %arg2, %arg1 : i32, i32
  }
  func.func @transform_2(%arg0: i32, %arg1: i32, %arg2: i32) -> (i32, i32) {
    %c0_i32 = arith.constant 0 : i32
    %c0_i32_0 = arith.constant 0 : i32
    return %c0_i32, %arg1 : i32, i32
  }
  func.func @transform_3(%arg0: i32, %arg1: i32, %arg2: i32) -> (i32, i32) {
    %c0_i32 = arith.constant 0 : i32
    return %arg0, %arg1 : i32, i32
  }
}

module attributes {stable_mosaic.version = 11 : i64} {
  func.func @_mm_bias_act_kernel(%arg0: i32, %arg1: i32, %arg2: i32, %arg3: memref<512x128xbf16, #tpu.memory_space<vmem>>, %arg4: memref<128x128xbf16, #tpu.memory_space<vmem>>, %arg5: memref<1x128xf32, #tpu.memory_space<vmem>>, %arg6: memref<512x128xf32, #tpu.memory_space<vmem>>, %arg7: memref<512x128xf32, #tpu.memory_space<vmem>>) attributes {dimension_semantics = [#tpu.dimension_semantics<parallel>, #tpu.dimension_semantics<parallel>, #tpu.dimension_semantics<arbitrary>], iteration_bounds = array<i64: 1, 1, 1>, scalar_prefetch = 0 : i64, scratch_operands = 1 : i64, tpu.core_type = #tpu.core_type<tc>, window_params = [{transform_indices = @transform_0, window_bounds = array<i64: 512, 128>}, {transform_indices = @transform_1, window_bounds = array<i64: 128, 128>}, {transform_indices = @transform_2, window_bounds = array<i64: 1, 128>}, {transform_indices = @transform_3, window_bounds = array<i64: 512, 128>}]} {
    %c0_i32 = arith.constant 0 : i32
    %0 = arith.cmpi eq, %arg2, %c0_i32 : i32
    %1 = arith.extui %0 : i1 to i32
    %c0_i32_0 = arith.constant 0 : i32
    %2 = arith.cmpi ne, %1, %c0_i32_0 : i32
    scf.if %2 {
      %cst_10 = arith.constant 0.000000e+00 : f32
      %12 = vector.broadcast %cst_10 : f32 to vector<512x128xf32>
      %c0_11 = arith.constant 0 : index
      %c0_12 = arith.constant 0 : index
      %13 = vector.load %arg7[%c0_11, %c0_12] : memref<512x128xf32, #tpu.memory_space<vmem>>, vector<512x128xf32>
      tpu.vector_store %arg7[%c0_11, %c0_12], %12 {strides = array<i32>} : memref<512x128xf32, #tpu.memory_space<vmem>>, vector<512x128xf32>,
    } else {
    }
    %c0 = arith.constant 0 : index
    %c0_1 = arith.constant 0 : index
    %3 = vector.load %arg7[%c0, %c0_1] : memref<512x128xf32, #tpu.memory_space<vmem>>, vector<512x128xf32>
    %c0_2 = arith.constant 0 : index
    %c0_3 = arith.constant 0 : index
    %4 = vector.load %arg3[%c0_2, %c0_3] : memref<512x128xbf16, #tpu.memory_space<vmem>>, vector<512x128xbf16>
    %c0_4 = arith.constant 0 : index
    %c0_5 = arith.constant 0 : index
    %5 = vector.load %arg4[%c0_4, %c0_5] : memref<128x128xbf16, #tpu.memory_space<vmem>>, vector<128x128xbf16>
    %cst = arith.constant dense<0.000000e+00> : vector<512x128xf32>
    %6 = tpu.matmul %4, %5, %cst {dimension_numbers = #tpu.dot_dimension_numbers<[1], [0], [0], [1], [0, 0, 1, 1], [], []>} : vector<512x128xbf16>, vector<128x128xbf16>, vector<512x128xf32> -> vector<512x128xf32>
    %7 = arith.addf %3, %6 : vector<512x128xf32>
    %c0_6 = arith.constant 0 : index
    %c0_7 = arith.constant 0 : index
    %8 = vector.load %arg7[%c0_6, %c0_7] : memref<512x128xf32, #tpu.memory_space<vmem>>, vector<512x128xf32>
    tpu.vector_store %arg7[%c0_6, %c0_7], %7 {strides = array<i32>} : memref<512x128xf32, #tpu.memory_space<vmem>>, vector<512x128xf32>,
    %c0_i32_8 = arith.constant 0 : i32
    %9 = arith.cmpi eq, %arg2, %c0_i32_8 : i32
    %10 = arith.extui %9 : i1 to i32
    %c0_i32_9 = arith.constant 0 : i32
    %11 = arith.cmpi ne, %10, %c0_i32_9 : i32
    scf.if %11 {
      %c0_10 = arith.constant 0 : index
      %c0_11 = arith.constant 0 : index
      %12 = vector.load %arg7[%c0_10, %c0_11] : memref<512x128xf32, #tpu.memory_space<vmem>>, vector<512x128xf32>
      %c0_12 = arith.constant 0 : index
      %c0_13 = arith.constant 0 : index
      %13 = vector.load %arg5[%c0_12, %c0_13] : memref<1x128xf32, #tpu.memory_space<vmem>>, vector<1x128xf32>
      %14 = vector.broadcast %13 : vector<1x128xf32> to vector<512x128xf32>
      %15 = arith.addf %12, %14 : vector<512x128xf32>
      %c0_14 = arith.constant 0 : index
      %c0_15 = arith.constant 0 : index
      %16 = vector.load %arg6[%c0_14, %c0_15] : memref<512x128xf32, #tpu.memory_space<vmem>>, vector<512x128xf32>
      tpu.vector_store %arg6[%c0_14, %c0_15], %15 {strides = array<i32>} : memref<512x128xf32, #tpu.memory_space<vmem>>, vector<512x128xf32>,
    } else {
    }
    return
  }
  func.func @transform_0(%arg0: i32, %arg1: i32, %arg2: i32) -> (i32, i32) {
    %c0_i32 = arith.constant 0 : i32
    return %arg0, %arg2 : i32, i32
  }
  func.func @transform_1(%arg0: i32, %arg1: i32, %arg2: i32) -> (i32, i32) {
    %c0_i32 = arith.constant 0 : i32
    return %arg2, %arg1 : i32, i32
  }
  func.func @transform_2(%arg0: i32, %arg1: i32, %arg2: i32) -> (i32, i32) {
    %c0_i32 = arith.constant 0 : i32
    %c0_i32_0 = arith.constant 0 : i32
    return %c0_i32, %arg1 : i32, i32
  }
  func.func @transform_3(%arg0: i32, %arg1: i32, %arg2: i32) -> (i32, i32) {
    %c0_i32 = arith.constant 0 : i32
    return %arg0, %arg1 : i32, i32
  }
}

</mosaic_0001>

<llo_original>
// kernel: aspp_head_forward.10
$region0: #{aspp_head_forward.10}
  #allocation0 [shape = 'u32[]', space=smem, size = 0x4, offset = 0x4, fixed_abs, tag = 'smem constant byte address 0x4 - core index']
  #allocation1 [shape = 'u32[72,128]{1,0:T(1,128)}', space=vmem, size = 0x9000, scoped, tag = 'internal scratch']
  #allocation2 [shape = 'f32[512,128]{1,0:T(8,128)}', space=vmem, size = 0x40000, scoped, tag = 'scratch operand']
  %s0 = inlined_call_operand.vmem [shape: bf16[512,128], index: 0, kind: input, shape index: {}]
  %s1 = inlined_call_operand.vmem [shape: bf16[128,128], index: 1, kind: input, shape index: {}]
  %s2 = inlined_call_operand.vmem [shape: f32[1,128], index: 2, kind: input, shape index: {}]
  %s3 = inlined_call_operand.vmem [shape: f32[512,128], index: 3, kind: output, shape index: {}]
  %s4 = sld [smem:[#allocation0]]
  $region30: #{aspp_head_forward.10} parent=0
    _
  %s6 = ssub.s32 1, %s4
  %s7 = scalar_select 0, %s6, %s4
  // Predicated region
  $region2: #{aspp_head_forward.10} parent=0 // pred_check
    _
  $region3: #{aspp_head_forward.10} parent=0 // pred_check_branch
    %9 = sbr.rel (0) target = $region5
  $region4: #{aspp_head_forward.10} parent=0 // pred_region
    _
  $region5: #{aspp_head_forward.10} parent=0 // pred_fallthru
    _
  // Predicated region
  $region6: #{aspp_head_forward.10} parent=0 // pred_check
    _
  $region7: #{aspp_head_forward.10} parent=0 // pred_check_branch
    %11 = sbr.rel (0) target = $region9
  $region8: #{aspp_head_forward.10} parent=0 // pred_region
    _
  $region9: #{aspp_head_forward.10} parent=0 // pred_fallthru
    _
  // Predicated region
  $region10: #{aspp_head_forward.10} parent=0 // pred_check
    _
  $region11: #{aspp_head_forward.10} parent=0 // pred_check_branch
    %13 = sbr.rel (0) target = $region13
  $region12: #{aspp_head_forward.10} parent=0 // pred_region
    _
  $region13: #{aspp_head_forward.10} parent=0 // pred_fallthru
    _
  %p14 = scmp.eq.s32.totalorder 0, 0
  // Predicated region
  $region14: #{aspp_head_forward.10} parent=0 // pred_check
    %p15 = pneg %p14
  $region15: #{aspp_head_forward.10} parent=0 // pred_check_branch
    %17 = sbr.rel (%p15) target = $region17
  $region16: #{aspp_head_forward.10} parent=0 // pred_region
    %18 = vst [vmem:[#allocation2] sm:$0xff] 0.0
    %19 = vst [vmem:[#allocation2 + $0x8] sm:$0xff] 0.0
    %20 = vst [vmem:[#allocation2 + $0x10] sm:$0xff] 0.0
    %21 = vst [vmem:[#allocation2 + $0x18] sm:$0xff] 0.0
    %22 = vst [vmem:[#allocation2 + $0x20] sm:$0xff] 0.0
    %23 = vst [vmem:[#allocation2 + $0x28] sm:$0xff] 0.0
    %24 = vst [vmem:[#allocation2 + $0x30] sm:$0xff] 0.0
    %25 = vst [vmem:[#allocation2 + $0x38] sm:$0xff] 0.0
    %26 = vst [vmem:[#allocation2 + $0x40] sm:$0xff] 0.0
    %27 = vst [vmem:[#allocation2 + $0x48] sm:$0xff] 0.0
    %28 = vst [vmem:[#allocation2 + $0x50] sm:$0xff] 0.0
    %29 = vst [vmem:[#allocation2 + $0x58] sm:$0xff] 0.0
    %30 = vst [vmem:[#allocation2 + $0x60] sm:$0xff] 0.0
    %31 = vst [vmem:[#allocation2 + $0x68] sm:$0xff] 0.0
    %32 = vst [vmem:[#allocation2 + $0x70] sm:$0xff] 0.0
    %33 = vst [vmem:[#allocation2 + $0x78] sm:$0xff] 0.0
    %34 = vst [vmem:[#allocation2 + $0x80] sm:$0xff] 0.0
    %35 = vst [vmem:[#allocation2 + $0x88] sm:$0xff] 0.0
    %36 = vst [vmem:[#allocation2 + $0x90] sm:$0xff] 0.0
    %37 = vst [vmem:[#allocation2 + $0x98] sm:$0xff] 0.0
    %38 = vst [vmem:[#allocation2 + $0xa0] sm:$0xff] 0.0
    %39 = vst [vmem:[#allocation2 + $0xa8] sm:$0xff] 0.0
    %40 = vst [vmem:[#allocation2 + $0xb0] sm:$0xff] 0.0
    %41 = vst [vmem:[#allocation2 + $0xb8] sm:$0xff] 0.0
    %42 = vst [vmem:[#allocation2 + $0xc0] sm:$0xff] 0.0
    %43 = vst [vmem:[#allocation2 + $0xc8] sm:$0xff] 0.0
    %44 = vst [vmem:[#allocation2 + $0xd0] sm:$0xff] 0.0
    %45 = vst [vmem:[#allocation2 + $0xd8] sm:$0xff] 0.0
    %46 = vst [vmem:[#allocation2 + $0xe0] sm:$0xff] 0.0
    %47 = vst [vmem:[#allocation2 + $0xe8] sm:$0xff] 0.0
    %48 = vst [vmem:[#allocation2 + $0xf0] sm:$0xff] 0.0
    %49 = vst [vmem:[#allocation2 + $0xf8] sm:$0xff] 0.0
    %50 = vst [vmem:[#allocation2 + $0x100] sm:$0xff] 0.0
    %51 = vst [vmem:[#allocation2 + $0x108] sm:$0xff] 0.0
    %52 = vst [vmem:[#allocation2 + $0x110] sm:$0xff] 0.0
    %53 = vst [vmem:[#allocation2 + $0x118] sm:$0xff] 0.0
    %54 = vst [vmem:[#allocation2 + $0x120] sm:$0xff] 0.0
    %55 = vst [vmem:[#allocation2 + $0x128] sm:$0xff] 0.0
    %56 = vst [vmem:[#allocation2 + $0x130] sm:$0xff] 0.0
    %57 = vst [vmem:[#allocation2 + $0x138] sm:$0xff] 0.0
    %58 = vst [vmem:[#allocation2 + $0x140] sm:$0xff] 0.0
    %59 = vst [vmem:[#allocation2 + $0x148] sm:$0xff] 0.0
    %60 = vst [vmem:[#allocation2 + $0x150] sm:$0xff] 0.0
    %61 = vst [vmem:[#allocation2 + $0x158] sm:$0xff] 0.0
    %62 = vst [vmem:[#allocation2 + $0x160] sm:$0xff] 0.0
    %63 = vst [vmem:[#allocation2 + $0x168] sm:$0xff] 0.0
    %64 = vst [vmem:[#allocation2 + $0x170] sm:$0xff] 0.0
    %65 = vst [vmem:[#allocation2 + $0x178] sm:$0xff] 0.0
    %66 = vst [vmem:[#allocation2 + $0x180] sm:$0xff] 0.0
    %67 = vst [vmem:[#allocation2 + $0x188] sm:$0xff] 0.0
    %68 = vst [vmem:[#allocation2 + $0x190] sm:$0xff] 0.0
    %69 = vst [vmem:[#allocation2 + $0x198] sm:$0xff] 0.0
    %70 = vst [vmem:[#allocation2 + $0x1a0] sm:$0xff] 0.0
    %71 = vst [vmem:[#allocation2 + $0x1a8] sm:$0xff] 0.0
    %72 = vst [vmem:[#allocation2 + $0x1b0] sm:$0xff] 0.0
    %73 = vst [vmem:[#allocation2 + $0x1b8] sm:$0xff] 0.0
    %74 = vst [vmem:[#allocation2 + $0x1c0] sm:$0xff] 0.0
    %75 = vst [vmem:[#allocation2 + $0x1c8] sm:$0xff] 0.0
    %76 = vst [vmem:[#allocation2 + $0x1d0] sm:$0xff] 0.0
    %77 = vst [vmem:[#allocation2 + $0x1d8] sm:$0xff] 0.0
    %78 = vst [vmem:[#allocation2 + $0x1e0] sm:$0xff] 0.0
    %79 = vst [vmem:[#allocation2 + $0x1e8] sm:$0xff] 0.0
    %80 = vst [vmem:[#allocation2 + $0x1f0] sm:$0xff] 0.0
    %81 = vst [vmem:[#allocation2 + $0x1f8] sm:$0xff] 0.0
  $region17: #{aspp_head_forward.10} parent=0 // pred_fallthru
    _
  %v82 = vld [vmem:[#allocation2] sm:$0xff]
  %v83 = vld [vmem:[#allocation2 + $0x8] sm:$0xff]
  %v84 = vld [vmem:[#allocation2 + $0x10] sm:$0xff]
  %v85 = vld [vmem:[#allocation2 + $0x18] sm:$0xff]
  %v86 = vld [vmem:[#allocation2 + $0x20] sm:$0xff]
  %v87 = vld [vmem:[#allocation2 + $0x28] sm:$0xff]
  %v88 = vld [vmem:[#allocation2 + $0x30] sm:$0xff]
  %v89 = vld [vmem:[#allocation2 + $0x38] sm:$0xff]
  %v90 = vld [vmem:[#allocation2 + $0x40] sm:$0xff]
  %v91 = vld [vmem:[#allocation2 + $0x48] sm:$0xff]
  %v92 = vld [vmem:[#allocation2 + $0x50] sm:$0xff]
  %v93 = vld [vmem:[#allocation2 + $0x58] sm:$0xff]
  %v94 = vld [vmem:[#allocation2 + $0x60] sm:$0xff]
  %v95 = vld [vmem:[#allocation2 + $0x68] sm:$0xff]
  %v96 = vld [vmem:[#allocation2 + $0x70] sm:$0xff]
  %v97 = vld [vmem:[#allocation2 + $0x78] sm:$0xff]
  %v98 = vld [vmem:[#allocation2 + $0x80] sm:$0xff]
  %v99 = vld [vmem:[#allocation2 + $0x88] sm:$0xff]
  %v100 = vld [vmem:[#allocation2 + $0x90] sm:$0xff]
  %v101 = vld [vmem:[#allocation2 + $0x98] sm:$0xff]
  %v102 = vld [vmem:[#allocation2 + $0xa0] sm:$0xff]
  %v103 = vld [vmem:[#allocation2 + $0xa8] sm:$0xff]
  %v104 = vld [vmem:[#allocation2 + $0xb0] sm:$0xff]
  %v105 = vld [vmem:[#allocation2 + $0xb8] sm:$0xff]
  %v106 = vld [vmem:[#allocation2 + $0xc0] sm:$0xff]
  %v107 = vld [vmem:[#allocation2 + $0xc8] sm:$0xff]
  %v108 = vld [vmem:[#allocation2 + $0xd0] sm:$0xff]
  %v109 = vld [vmem:[#allocation2 + $0xd8] sm:$0xff]
  %v110 = vld [vmem:[#allocation2 + $0xe0] sm:$0xff]
  %v111 = vld [vmem:[#allocation2 + $0xe8] sm:$0xff]
  %v112 = vld [vmem:[#allocation2 + $0xf0] sm:$0xff]
  %v113 = vld [vmem:[#allocation2 + $0xf8] sm:$0xff]
  %v114 = vld [vmem:[#allocation2 + $0x100] sm:$0xff]
  %v115 = vld [vmem:[#allocation2 + $0x108] sm:$0xff]
  %v116 = vld [vmem:[#allocation2 + $0x110] sm:$0xff]
  %v117 = vld [vmem:[#allocation2 + $0x118] sm:$0xff]
  %v118 = vld [vmem:[#allocation2 + $0x120] sm:$0xff]
  %v119 = vld [vmem:[#allocation2 + $0x128] sm:$0xff]
  %v120 = vld [vmem:[#allocation2 + $0x130] sm:$0xff]
  %v121 = vld [vmem:[#allocation2 + $0x138] sm:$0xff]
  %v122 = vld [vmem:[#allocation2 + $0x140] sm:$0xff]
  %v123 = vld [vmem:[#allocation2 + $0x148] sm:$0xff]
  %v124 = vld [vmem:[#allocation2 + $0x150] sm:$0xff]
  %v125 = vld [vmem:[#allocation2 + $0x158] sm:$0xff]
  %v126 = vld [vmem:[#allocation2 + $0x160] sm:$0xff]
  %v127 = vld [vmem:[#allocation2 + $0x168] sm:$0xff]
  %v128 = vld [vmem:[#allocation2 + $0x170] sm:$0xff]
  %v129 = vld [vmem:[#allocation2 + $0x178] sm:$0xff]
  %v130 = vld [vmem:[#allocation2 + $0x180] sm:$0xff]
  %v131 = vld [vmem:[#allocation2 + $0x188] sm:$0xff]
  %v132 = vld [vmem:[#allocation2 + $0x190] sm:$0xff]
  %v133 = vld [vmem:[#allocation2 + $0x198] sm:$0xff]
  %v134 = vld [vmem:[#allocation2 + $0x1a0] sm:$0xff]
  %v135 = vld [vmem:[#allocation2 + $0x1a8] sm:$0xff]
  %v136 = vld [vmem:[#allocation2 + $0x1b0] sm:$0xff]
  %v137 = vld [vmem:[#allocation2 + $0x1b8] sm:$0xff]
  %v138 = vld [vmem:[#allocation2 + $0x1c0] sm:$0xff]
  %v139 = vld [vmem:[#allocation2 + $0x1c8] sm:$0xff]
  %v140 = vld [vmem:[#allocation2 + $0x1d0] sm:$0xff]
  %v141 = vld [vmem:[#allocation2 + $0x1d8] sm:$0xff]
  %v142 = vld [vmem:[#allocation2 + $0x1e0] sm:$0xff]
  %v143 = vld [vmem:[#allocation2 + $0x1e8] sm:$0xff]
  %v144 = vld [vmem:[#allocation2 + $0x1f0] sm:$0xff]
  %v145 = vld [vmem:[#allocation2 + $0x1f8] sm:$0xff]
  %v146 = vld [vmem:[%s0] sm:$0xf]
  %v147 = vld [vmem:[%s0 + $0x4] sm:$0xf]
  %v148 = vld [vmem:[%s0 + $0x8] sm:$0xf]
  %v149 = vld [vmem:[%s0 + $0xc] sm:$0xf]
  %v150 = vld [vmem:[%s0 + $0x10] sm:$0xf]
  %v151 = vld [vmem:[%s0 + $0x14] sm:$0xf]
  %v152 = vld [vmem:[%s0 + $0x18] sm:$0xf]
  %v153 = vld [vmem:[%s0 + $0x1c] sm:$0xf]
  %v154 = vld [vmem:[%s0 + $0x20] sm:$0xf]
  %v155 = vld [vmem:[%s0 + $0x24] sm:$0xf]
  %v156 = vld [vmem:[%s0 + $0x28] sm:$0xf]
  %v157 = vld [vmem:[%s0 + $0x2c] sm:$0xf]
  %v158 = vld [vmem:[%s0 + $0x30] sm:$0xf]
  %v159 = vld [vmem:[%s0 + $0x34] sm:$0xf]
  %v160 = vld [vmem:[%s0 + $0x38] sm:$0xf]
  %v161 = vld [vmem:[%s0 + $0x3c] sm:$0xf]
  %v162 = vld [vmem:[%s0 + $0x40] sm:$0xf]
  %v163 = vld [vmem:[%s0 + $0x44] sm:$0xf]
  %v164 = vld [vmem:[%s0 + $0x48] sm:$0xf]
  %v165 = vld [vmem:[%s0 + $0x4c] sm:$0xf]
  %v166 = vld [vmem:[%s0 + $0x50] sm:$0xf]
  %v167 = vld [vmem:[%s0 + $0x54] sm:$0xf]
  %v168 = vld [vmem:[%s0 + $0x58] sm:$0xf]
  %v169 = vld [vmem:[%s0 + $0x5c] sm:$0xf]
  %v170 = vld [vmem:[%s0 + $0x60] sm:$0xf]
  %v171 = vld [vmem:[%s0 + $0x64] sm:$0xf]
  %v172 = vld [vmem:[%s0 + $0x68] sm:$0xf]
  %v173 = vld [vmem:[%s0 + $0x6c] sm:$0xf]
  %v174 = vld [vmem:[%s0 + $0x70] sm:$0xf]
  %v175 = vld [vmem:[%s0 + $0x74] sm:$0xf]
  %v176 = vld [vmem:[%s0 + $0x78] sm:$0xf]
  %v177 = vld [vmem:[%s0 + $0x7c] sm:$0xf]
  %v178 = vld [vmem:[%s0 + $0x80] sm:$0xf]
  %v179 = vld [vmem:[%s0 + $0x84] sm:$0xf]
  %v180 = vld [vmem:[%s0 + $0x88] sm:$0xf]
  %v181 = vld [vmem:[%s0 + $0x8c] sm:$0xf]
  %v182 = vld [vmem:[%s0 + $0x90] sm:$0xf]
  %v183 = vld [vmem:[%s0 + $0x94] sm:$0xf]
  %v184 = vld [vmem:[%s0 + $0x98] sm:$0xf]
  %v185 = vld [vmem:[%s0 + $0x9c] sm:$0xf]
  %v186 = vld [vmem:[%s0 + $0xa0] sm:$0xf]
  %v187 = vld [vmem:[%s0 + $0xa4] sm:$0xf]
  %v188 = vld [vmem:[%s0 + $0xa8] sm:$0xf]
  %v189 = vld [vmem:[%s0 + $0xac] sm:$0xf]
  %v190 = vld [vmem:[%s0 + $0xb0] sm:$0xf]
  %v191 = vld [vmem:[%s0 + $0xb4] sm:$0xf]
  %v192 = vld [vmem:[%s0 + $0xb8] sm:$0xf]
  %v193 = vld [vmem:[%s0 + $0xbc] sm:$0xf]
  %v194 = vld [vmem:[%s0 + $0xc0] sm:$0xf]
  %v195 = vld [vmem:[%s0 + $0xc4] sm:$0xf]
  %v196 = vld [vmem:[%s0 + $0xc8] sm:$0xf]
  %v197 = vld [vmem:[%s0 + $0xcc] sm:$0xf]
  %v198 = vld [vmem:[%s0 + $0xd0] sm:$0xf]
  %v199 = vld [vmem:[%s0 + $0xd4] sm:$0xf]
  %v200 = vld [vmem:[%s0 + $0xd8] sm:$0xf]
  %v201 = vld [vmem:[%s0 + $0xdc] sm:$0xf]
  %v202 = vld [vmem:[%s0 + $0xe0] sm:$0xf]
  %v203 = vld [vmem:[%s0 + $0xe4] sm:$0xf]
  %v204 = vld [vmem:[%s0 + $0xe8] sm:$0xf]
  %v205 = vld [vmem:[%s0 + $0xec] sm:$0xf]
  %v206 = vld [vmem:[%s0 + $0xf0] sm:$0xf]
  %v207 = vld [vmem:[%s0 + $0xf4] sm:$0xf]
  %v208 = vld [vmem:[%s0 + $0xf8] sm:$0xf]
  %v209 = vld [vmem:[%s0 + $0xfc] sm:$0xf]
  %v210 = vld [vmem:[%s1] sm:$0xf]
  %v211 = vld [vmem:[%s1 + $0x4] sm:$0xf]
  %v212 = vld [vmem:[%s1 + $0x8] sm:$0xf]
  %v213 = vld [vmem:[%s1 + $0xc] sm:$0xf]
  %v214 = vld [vmem:[%s1 + $0x10] sm:$0xf]
  %v215 = vld [vmem:[%s1 + $0x14] sm:$0xf]
  %v216 = vld [vmem:[%s1 + $0x18] sm:$0xf]
  %v217 = vld [vmem:[%s1 + $0x1c] sm:$0xf]
  %v218 = vld [vmem:[%s1 + $0x20] sm:$0xf]
  %v219 = vld [vmem:[%s1 + $0x24] sm:$0xf]
  %v220 = vld [vmem:[%s1 + $0x28] sm:$0xf]
  %v221 = vld [vmem:[%s1 + $0x2c] sm:$0xf]
  %v222 = vld [vmem:[%s1 + $0x30] sm:$0xf]
  %v223 = vld [vmem:[%s1 + $0x34] sm:$0xf]
  %v224 = vld [vmem:[%s1 + $0x38] sm:$0xf]
  %v225 = vld [vmem:[%s1 + $0x3c] sm:$0xf]
  %v290 = vunpack.c.l.b16 %v146
  %v291 = vunpack.c.l.b16 %v147
  %v292 = vunpack.c.l.b16 %v148
  %v293 = vunpack.c.l.b16 %v149
  %v294 = vunpack.c.l.b16 %v150
  %v295 = vunpack.c.l.b16 %v151
  %v296 = vunpack.c.l.b16 %v152
  %v297 = vunpack.c.l.b16 %v153
  %v298 = vunpack.c.l.b16 %v154
  %v299 = vunpack.c.l.b16 %v155
  %v300 = vunpack.c.l.b16 %v156
  %v301 = vunpack.c.l.b16 %v157
  %v302 = vunpack.c.l.b16 %v158
  %v303 = vunpack.c.l.b16 %v159
  %v304 = vunpack.c.l.b16 %v160
  %v305 = vunpack.c.l.b16 %v161
  %v306 = vunpack.c.l.b16 %v162
  %v307 = vunpack.c.l.b16 %v163
  %v308 = vunpack.c.l.b16 %v164
  %v309 = vunpack.c.l.b16 %v165
  %v310 = vunpack.c.l.b16 %v166
  %v311 = vunpack.c.l.b16 %v167
  %v312 = vunpack.c.l.b16 %v168
  %v313 = vunpack.c.l.b16 %v169
  %v314 = vunpack.c.l.b16 %v170
  %v315 = vunpack.c.l.b16 %v171
  %v316 = vunpack.c.l.b16 %v172
  %v317 = vunpack.c.l.b16 %v173
  %v318 = vunpack.c.l.b16 %v174
  %v319 = vunpack.c.l.b16 %v175
  %v320 = vunpack.c.l.b16 %v176
  %v321 = vunpack.c.l.b16 %v177
  %v322 = vunpack.c.l.b16 %v178
  %v323 = vunpack.c.l.b16 %v179
  %v324 = vunpack.c.l.b16 %v180
  %v325 = vunpack.c.l.b16 %v181
  %v326 = vunpack.c.l.b16 %v182
  %v327 = vunpack.c.l.b16 %v183
  %v328 = vunpack.c.l.b16 %v184
  %v329 = vunpack.c.l.b16 %v185
  %v330 = vunpack.c.l.b16 %v186
  %v331 = vunpack.c.l.b16 %v187
  %v332 = vunpack.c.l.b16 %v188
  %v333 = vunpack.c.l.b16 %v189
  %v334 = vunpack.c.l.b16 %v190
  %v335 = vunpack.c.l.b16 %v191
  %v336 = vunpack.c.l.b16 %v192
  %v337 = vunpack.c.l.b16 %v193
  %v338 = vunpack.c.l.b16 %v194
  %v339 = vunpack.c.l.b16 %v195
  %v340 = vunpack.c.l.b16 %v196
  %v341 = vunpack.c.l.b16 %v197
  %v342 = vunpack.c.l.b16 %v198
  %v343 = vunpack.c.l.b16 %v199
  %v344 = vunpack.c.l.b16 %v200
  %v345 = vunpack.c.l.b16 %v201
  %v346 = vunpack.c.l.b16 %v202
  %v347 = vunpack.c.l.b16 %v203
  %v348 = vunpack.c.l.b16 %v204
  %v349 = vunpack.c.l.b16 %v205
  %v350 = vunpack.c.l.b16 %v206
  %v351 = vunpack.c.l.b16 %v207
  %v352 = vunpack.c.l.b16 %v208
  %v353 = vunpack.c.l.b16 %v209
  %v354 = vpack.c.b16 %v291, %v290
  %v355 = vpack.c.b16 %v293, %v292
  %v356 = vpack.c.b16 %v295, %v294
  %v357 = vpack.c.b16 %v297, %v296
  %v358 = vpack.c.b16 %v299, %v298
  %v359 = vpack.c.b16 %v301, %v300
  %v360 = vpack.c.b16 %v303, %v302
  %v361 = vpack.c.b16 %v305, %v304
  %v362 = vpack.c.b16 %v307, %v306
  %v363 = vpack.c.b16 %v309, %v308
  %v364 = vpack.c.b16 %v311, %v310
  %v365 = vpack.c.b16 %v313, %v312
  %v366 = vpack.c.b16 %v315, %v314
  %v367 = vpack.c.b16 %v317, %v316
  %v368 = vpack.c.b16 %v319, %v318
  %v369 = vpack.c.b16 %v321, %v320
  %v370 = vpack.c.b16 %v323, %v322
  %v371 = vpack.c.b16 %v325, %v324
  %v372 = vpack.c.b16 %v327, %v326
  %v373 = vpack.c.b16 %v329, %v328
  %v374 = vpack.c.b16 %v331, %v330
  %v375 = vpack.c.b16 %v333, %v332
  %v376 = vpack.c.b16 %v335, %v334
  %v377 = vpack.c.b16 %v337, %v336
  %v378 = vpack.c.b16 %v339, %v338
  %v379 = vpack.c.b16 %v341, %v340
  %v380 = vpack.c.b16 %v343, %v342
  %v381 = vpack.c.b16 %v345, %v344
  %v382 = vpack.c.b16 %v347, %v346
  %v383 = vpack.c.b16 %v349, %v348
  %v384 = vpack.c.b16 %v351, %v350
  %v385 = vpack.c.b16 %v353, %v352
  %v434 = vunpack.c.l.b16 %v210
  %v435 = vunpack.c.l.b16 %v211
  %v436 = vunpack.c.l.b16 %v212
  %v437 = vunpack.c.l.b16 %v213
  %v438 = vunpack.c.l.b16 %v214
  %v439 = vunpack.c.l.b16 %v215
  %v440 = vunpack.c.l.b16 %v216
  %v441 = vunpack.c.l.b16 %v217
  %v442 = vunpack.c.l.b16 %v218
  %v443 = vunpack.c.l.b16 %v219
  %v444 = vunpack.c.l.b16 %v220
  %v445 = vunpack.c.l.b16 %v221
  %v446 = vunpack.c.l.b16 %v222
  %v447 = vunpack.c.l.b16 %v223
  %v448 = vunpack.c.l.b16 %v224
  %v449 = vunpack.c.l.b16 %v225
  %v450 = vpack.c.b16 %v435, %v434
  %v451 = vpack.c.b16 %v437, %v436
  %v452 = vpack.c.b16 %v439, %v438
  %v453 = vpack.c.b16 %v441, %v440
  %v454 = vpack.c.b16 %v443, %v442
  %v455 = vpack.c.b16 %v445, %v444
  %v456 = vpack.c.b16 %v447, %v446
  %v457 = vpack.c.b16 %v449, %v448
  %466 = vmatpush.bf16.msra.mxu0 %v457
  %467 = vmatpush.bf16.msra.mxu0 %v456
  %468 = vmatpush.bf16.msra.mxu0 %v455
  %469 = vmatpush.bf16.msra.mxu0 %v454
  %470 = vmatpush.bf16.msra.mxu0 %v453
  %471 = vmatpush.bf16.msra.mxu0 %v452
  %472 = vmatpush.bf16.msra.mxu0 %v451
  %473 = vmatpush.bf16.msra.mxu0 %v450
  %474 = vmatmul.bf16.gmra.mxu0 %v354
  %v475 = vpop.f32.mrf.mxu0
  %v476 = vadd.f32 0.0, %v475
  %v477 = vpop.f32.mrf.mxu0
  %v478 = vadd.f32 0.0, %v477
  %479 = vmatmul.bf16.gmra.mxu0 %v355
  %v480 = vpop.f32.mrf.mxu0
  %v481 = vadd.f32 0.0, %v480
  %v482 = vpop.f32.mrf.mxu0
  %v483 = vadd.f32 0.0, %v482
  %484 = vmatmul.bf16.gmra.mxu0 %v356
  %v485 = vpop.f32.mrf.mxu0
  %v486 = vadd.f32 0.0, %v485
  %v487 = vpop.f32.mrf.mxu0
  %v488 = vadd.f32 0.0, %v487
  %489 = vmatmul.bf16.gmra.mxu0 %v357
  %v490 = vpop.f32.mrf.mxu0
  %v491 = vadd.f32 0.0, %v490
  %v492 = vpop.f32.mrf.mxu0
  %v493 = vadd.f32 0.0, %v492
  %494 = vmatmul.bf16.gmra.mxu0 %v358
  %v495 = vpop.f32.mrf.mxu0
  %v496 = vadd.f32 0.0, %v495
  %v497 = vpop.f32.mrf.mxu0
  %v498 = vadd.f32 0.0, %v497
  %499 = vmatmul.bf16.gmra.mxu0 %v359
  %v500 = vpop.f32.mrf.mxu0
  %v501 = vadd.f32 0.0, %v500
  %v502 = vpop.f32.mrf.mxu0
  %v503 = vadd.f32 0.0, %v502
  %504 = vmatmul.bf16.gmra.mxu0 %v360
  %v505 = vpop.f32.mrf.mxu0
  %v506 = vadd.f32 0.0, %v505
  %v507 = vpop.f32.mrf.mxu0
  %v508 = vadd.f32 0.0, %v507
  %509 = vmatmul.bf16.gmra.mxu0 %v361
  %v510 = vpop.f32.mrf.mxu0
  %v511 = vadd.f32 0.0, %v510
  %v512 = vpop.f32.mrf.mxu0
  %v513 = vadd.f32 0.0, %v512
  %514 = vmatmul.bf16.gmra.mxu0 %v362
  %v515 = vpop.f32.mrf.mxu0
  %v516 = vadd.f32 0.0, %v515
  %v517 = vpop.f32.mrf.mxu0
  %v518 = vadd.f32 0.0, %v517
  %519 = vmatmul.bf16.gmra.mxu0 %v363
  %v520 = vpop.f32.mrf.mxu0
  %v521 = vadd.f32 0.0, %v520
  %v522 = vpop.f32.mrf.mxu0
  %v523 = vadd.f32 0.0, %v522
  %524 = vmatmul.bf16.gmra.mxu0 %v364
  %v525 = vpop.f32.mrf.mxu0
  %v526 = vadd.f32 0.0, %v525
  %v527 = vpop.f32.mrf.mxu0
  %v528 = vadd.f32 0.0, %v527
  %529 = vmatmul.bf16.gmra.mxu0 %v365
  %v530 = vpop.f32.mrf.mxu0
  %v531 = vadd.f32 0.0, %v530
  %v532 = vpop.f32.mrf.mxu0
  %v533 = vadd.f32 0.0, %v532
  %534 = vmatmul.bf16.gmra.mxu0 %v366
  %v535 = vpop.f32.mrf.mxu0
  %v536 = vadd.f32 0.0, %v535
  %v537 = vpop.f32.mrf.mxu0
  %v538 = vadd.f32 0.0, %v537
  %539 = vmatmul.bf16.gmra.mxu0 %v367
  %v540 = vpop.f32.mrf.mxu0
  %v541 = vadd.f32 0.0, %v540
  %v542 = vpop.f32.mrf.mxu0
  %v543 = vadd.f32 0.0, %v542
  %544 = vmatmul.bf16.gmra.mxu0 %v368
  %v545 = vpop.f32.mrf.mxu0
  %v546 = vadd.f32 0.0, %v545
  %v547 = vpop.f32.mrf.mxu0
  %v548 = vadd.f32 0.0, %v547
  %549 = vmatmul.bf16.gmra.mxu0 %v369
  %v550 = vpop.f32.mrf.mxu0
  %v551 = vadd.f32 0.0, %v550
  %v552 = vpop.f32.mrf.mxu0
  %v553 = vadd.f32 0.0, %v552
  %554 = vmatmul.bf16.gmra.mxu0 %v370
  %v555 = vpop.f32.mrf.mxu0
  %v556 = vadd.f32 0.0, %v555
  %v557 = vpop.f32.mrf.mxu0
  %v558 = vadd.f32 0.0, %v557
  %559 = vmatmul.bf16.gmra.mxu0 %v371
  %v560 = vpop.f32.mrf.mxu0
  %v561 = vadd.f32 0.0, %v560
  %v562 = vpop.f32.mrf.mxu0
  %v563 = vadd.f32 0.0, %v562
  %564 = vmatmul.bf16.gmra.mxu0 %v372
  %v565 = vpop.f32.mrf.mxu0
  %v566 = vadd.f32 0.0, %v565
  %v567 = vpop.f32.mrf.mxu0
  %v568 = vadd.f32 0.0, %v567
  %569 = vmatmul.bf16.gmra.mxu0 %v373
  %v570 = vpop.f32.mrf.mxu0
  %v571 = vadd.f32 0.0, %v570
  %v572 = vpop.f32.mrf.mxu0
  %v573 = vadd.f32 0.0, %v572
  %574 = vmatmul.bf16.gmra.mxu0 %v374
  %v575 = vpop.f32.mrf.mxu0
  %v576 = vadd.f32 0.0, %v575
  %v577 = vpop.f32.mrf.mxu0
  %v578 = vadd.f32 0.0, %v577
  %579 = vmatmul.bf16.gmra.mxu0 %v375
  %v580 = vpop.f32.mrf.mxu0
  %v581 = vadd.f32 0.0, %v580
  %v582 = vpop.f32.mrf.mxu0
  %v583 = vadd.f32 0.0, %v582
  %584 = vmatmul.bf16.gmra.mxu0 %v376
  %v585 = vpop.f32.mrf.mxu0
  %v586 = vadd.f32 0.0, %v585
  %v587 = vpop.f32.mrf.mxu0
  %v588 = vadd.f32 0.0, %v587
  %589 = vmatmul.bf16.gmra.mxu0 %v377
  %v590 = vpop.f32.mrf.mxu0
  %v591 = vadd.f32 0.0, %v590
  %v592 = vpop.f32.mrf.mxu0
  %v593 = vadd.f32 0.0, %v592
  %594 = vmatmul.bf16.gmra.mxu0 %v378
  %v595 = vpop.f32.mrf.mxu0
  %v596 = vadd.f32 0.0, %v595
  %v597 = vpop.f32.mrf.mxu0
  %v598 = vadd.f32 0.0, %v597
  %599 = vmatmul.bf16.gmra.mxu0 %v379
  %v600 = vpop.f32.mrf.mxu0
  %v601 = vadd.f32 0.0, %v600
  %v602 = vpop.f32.mrf.mxu0
  %v603 = vadd.f32 0.0, %v602
  %604 = vmatmul.bf16.gmra.mxu0 %v380
  %v605 = vpop.f32.mrf.mxu0
  %v606 = vadd.f32 0.0, %v605
  %v607 = vpop.f32.mrf.mxu0
  %v608 = vadd.f32 0.0, %v607
  %609 = vmatmul.bf16.gmra.mxu0 %v381
  %v610 = vpop.f32.mrf.mxu0
  %v611 = vadd.f32 0.0, %v610
  %v612 = vpop.f32.mrf.mxu0
  %v613 = vadd.f32 0.0, %v612
  %614 = vmatmul.bf16.gmra.mxu0 %v382
  %v615 = vpop.f32.mrf.mxu0
  %v616 = vadd.f32 0.0, %v615
  %v617 = vpop.f32.mrf.mxu0
  %v618 = vadd.f32 0.0, %v617
  %619 = vmatmul.bf16.gmra.mxu0 %v383
  %v620 = vpop.f32.mrf.mxu0
  %v621 = vadd.f32 0.0, %v620
  %v622 = vpop.f32.mrf.mxu0
  %v623 = vadd.f32 0.0, %v622
  %624 = vmatmul.bf16.gmra.mxu0 %v384
  %v625 = vpop.f32.mrf.mxu0
  %v626 = vadd.f32 0.0, %v625
  %v627 = vpop.f32.mrf.mxu0
  %v628 = vadd.f32 0.0, %v627
  %629 = vmatmul.bf16.gmra.mxu0 %v385
  %v630 = vpop.f32.mrf.mxu0
  %v631 = vadd.f32 0.0, %v630
  %v632 = vpop.f32.mrf.mxu0
  %v633 = vadd.f32 0.0, %v632
  %634 = vdwg.mxu0
  %v635 = vadd.f32 %v82, %v476
  %v636 = vadd.f32 %v83, %v478
  %v637 = vadd.f32 %v84, %v481
  %v638 = vadd.f32 %v85, %v483
  %v639 = vadd.f32 %v86, %v486
  %v640 = vadd.f32 %v87, %v488
  %v641 = vadd.f32 %v88, %v491
  %v642 = vadd.f32 %v89, %v493
  %v643 = vadd.f32 %v90, %v496
  %v644 = vadd.f32 %v91, %v498
  %v645 = vadd.f32 %v92, %v501
  %v646 = vadd.f32 %v93, %v503
  %v647 = vadd.f32 %v94, %v506
  %v648 = vadd.f32 %v95, %v508
  %v649 = vadd.f32 %v96, %v511
  %v650 = vadd.f32 %v97, %v513
  %v651 = vadd.f32 %v98, %v516
  %v652 = vadd.f32 %v99, %v518
  %v653 = vadd.f32 %v100, %v521
  %v654 = vadd.f32 %v101, %v523
  %v655 = vadd.f32 %v102, %v526
  %v656 = vadd.f32 %v103, %v528
  %v657 = vadd.f32 %v104, %v531
  %v658 = vadd.f32 %v105, %v533
  %v659 = vadd.f32 %v106, %v536
  %v660 = vadd.f32 %v107, %v538
  %v661 = vadd.f32 %v108, %v541
  %v662 = vadd.f32 %v109, %v543
  %v663 = vadd.f32 %v110, %v546
  %v664 = vadd.f32 %v111, %v548
  %v665 = vadd.f32 %v112, %v551
  %v666 = vadd.f32 %v113, %v553
  %v667 = vadd.f32 %v114, %v556
  %v668 = vadd.f32 %v115, %v558
  %v669 = vadd.f32 %v116, %v561
  %v670 = vadd.f32 %v117, %v563
  %v671 = vadd.f32 %v118, %v566
  %v672 = vadd.f32 %v119, %v568
  %v673 = vadd.f32 %v120, %v571
  %v674 = vadd.f32 %v121, %v573
  %v675 = vadd.f32 %v122, %v576
  %v676 = vadd.f32 %v123, %v578
  %v677 = vadd.f32 %v124, %v581
  %v678 = vadd.f32 %v125, %v583
  %v679 = vadd.f32 %v126, %v586
  %v680 = vadd.f32 %v127, %v588
  %v681 = vadd.f32 %v128, %v591
  %v682 = vadd.f32 %v129, %v593
  %v683 = vadd.f32 %v130, %v596
  %v684 = vadd.f32 %v131, %v598
  %v685 = vadd.f32 %v132, %v601
  %v686 = vadd.f32 %v133, %v603
  %v687 = vadd.f32 %v134, %v606
  %v688 = vadd.f32 %v135, %v608
  %v689 = vadd.f32 %v136, %v611
  %v690 = vadd.f32 %v137, %v613
  %v691 = vadd.f32 %v138, %v616
  %v692 = vadd.f32 %v139, %v618
  %v693 = vadd.f32 %v140, %v621
  %v694 = vadd.f32 %v141, %v623
  %v695 = vadd.f32 %v142, %v626
  %v696 = vadd.f32 %v143, %v628
  %v697 = vadd.f32 %v144, %v631
  %v698 = vadd.f32 %v145, %v633
  %699 = vst [vmem:[#allocation2] sm:$0xff] %v635
  %700 = vst [vmem:[#allocation2 + $0x8] sm:$0xff] %v636
  %701 = vst [vmem:[#allocation2 + $0x10] sm:$0xff] %v637
  %702 = vst [vmem:[#allocation2 + $0x18] sm:$0xff] %v638
  %703 = vst [vmem:[#allocation2 + $0x20] sm:$0xff] %v639
  %704 = vst [vmem:[#allocation2 + $0x28] sm:$0xff] %v640
  %705 = vst [vmem:[#allocation2 + $0x30] sm:$0xff] %v641
  %706 = vst [vmem:[#allocation2 + $0x38] sm:$0xff] %v642
  %707 = vst [vmem:[#allocation2 + $0x40] sm:$0xff] %v643
  %708 = vst [vmem:[#allocation2 + $0x48] sm:$0xff] %v644
  %709 = vst [vmem:[#allocation2 + $0x50] sm:$0xff] %v645
  %710 = vst [vmem:[#allocation2 + $0x58] sm:$0xff] %v646
  %711 = vst [vmem:[#allocation2 + $0x60] sm:$0xff] %v647
  %712 = vst [vmem:[#allocation2 + $0x68] sm:$0xff] %v648
  %713 = vst [vmem:[#allocation2 + $0x70] sm:$0xff] %v649
  %714 = vst [vmem:[#allocation2 + $0x78] sm:$0xff] %v650
  %715 = vst [vmem:[#allocation2 + $0x80] sm:$0xff] %v651
  %716 = vst [vmem:[#allocation2 + $0x88] sm:$0xff] %v652
  %717 = vst [vmem:[#allocation2 + $0x90] sm:$0xff] %v653
  %718 = vst [vmem:[#allocation2 + $0x98] sm:$0xff] %v654
  %719 = vst [vmem:[#allocation2 + $0xa0] sm:$0xff] %v655
  %720 = vst [vmem:[#allocation2 + $0xa8] sm:$0xff] %v656
  %721 = vst [vmem:[#allocation2 + $0xb0] sm:$0xff] %v657
  %722 = vst [vmem:[#allocation2 + $0xb8] sm:$0xff] %v658
  %723 = vst [vmem:[#allocation2 + $0xc0] sm:$0xff] %v659
  %724 = vst [vmem:[#allocation2 + $0xc8] sm:$0xff] %v660
  %725 = vst [vmem:[#allocation2 + $0xd0] sm:$0xff] %v661
  %726 = vst [vmem:[#allocation2 + $0xd8] sm:$0xff] %v662
  %727 = vst [vmem:[#allocation2 + $0xe0] sm:$0xff] %v663
  %728 = vst [vmem:[#allocation2 + $0xe8] sm:$0xff] %v664
  %729 = vst [vmem:[#allocation2 + $0xf0] sm:$0xff] %v665
  %730 = vst [vmem:[#allocation2 + $0xf8] sm:$0xff] %v666
  %731 = vst [vmem:[#allocation2 + $0x100] sm:$0xff] %v667
  %732 = vst [vmem:[#allocation2 + $0x108] sm:$0xff] %v668
  %733 = vst [vmem:[#allocation2 + $0x110] sm:$0xff] %v669
  %734 = vst [vmem:[#allocation2 + $0x118] sm:$0xff] %v670
  %735 = vst [vmem:[#allocation2 + $0x120] sm:$0xff] %v671
  %736 = vst [vmem:[#allocation2 + $0x128] sm:$0xff] %v672
  %737 = vst [vmem:[#allocation2 + $0x130] sm:$0xff] %v673
  %738 = vst [vmem:[#allocation2 + $0x138] sm:$0xff] %v674
  %739 = vst [vmem:[#allocation2 + $0x140] sm:$0xff] %v675
  %740 = vst [vmem:[#allocation2 + $0x148] sm:$0xff] %v676
  %741 = vst [vmem:[#allocation2 + $0x150] sm:$0xff] %v677
  %742 = vst [vmem:[#allocation2 + $0x158] sm:$0xff] %v678
  %743 = vst [vmem:[#allocation2 + $0x160] sm:$0xff] %v679
  %744 = vst [vmem:[#allocation2 + $0x168] sm:$0xff] %v680
  %745 = vst [vmem:[#allocation2 + $0x170] sm:$0xff] %v681
  %746 = vst [vmem:[#allocation2 + $0x178] sm:$0xff] %v682
  %747 = vst [vmem:[#allocation2 + $0x180] sm:$0xff] %v683
  %748 = vst [vmem:[#allocation2 + $0x188] sm:$0xff] %v684
  %749 = vst [vmem:[#allocation2 + $0x190] sm:$0xff] %v685
  %750 = vst [vmem:[#allocation2 + $0x198] sm:$0xff] %v686
  %751 = vst [vmem:[#allocation2 + $0x1a0] sm:$0xff] %v687
  %752 = vst [vmem:[#allocation2 + $0x1a8] sm:$0xff] %v688
  %753 = vst [vmem:[#allocation2 + $0x1b0] sm:$0xff] %v689
  %754 = vst [vmem:[#allocation2 + $0x1b8] sm:$0xff] %v690
  %755 = vst [vmem:[#allocation2 + $0x1c0] sm:$0xff] %v691
  %756 = vst [vmem:[#allocation2 + $0x1c8] sm:$0xff] %v692
  %757 = vst [vmem:[#allocation2 + $0x1d0] sm:$0xff] %v693
  %758 = vst [vmem:[#allocation2 + $0x1d8] sm:$0xff] %v694
  %759 = vst [vmem:[#allocation2 + $0x1e0] sm:$0xff] %v695
  %760 = vst [vmem:[#allocation2 + $0x1e8] sm:$0xff] %v696
  %761 = vst [vmem:[#allocation2 + $0x1f0] sm:$0xff] %v697
  %762 = vst [vmem:[#allocation2 + $0x1f8] sm:$0xff] %v698
  // Predicated region
  $region18: #{aspp_head_forward.10} parent=0 // pred_check
    %p763 = pneg %p14
  $region19: #{aspp_head_forward.10} parent=0 // pred_check_branch
    %765 = sbr.rel (%p763) target = $region21
  $region20: #{aspp_head_forward.10} parent=0 // pred_region
    %v766 = vld [vmem:[#allocation2] sm:$0xff]
    %v767 = vld [vmem:[#allocation2 + $0x8] sm:$0xff]
    %v768 = vld [vmem:[#allocation2 + $0x10] sm:$0xff]
    %v769 = vld [vmem:[#allocation2 + $0x18] sm:$0xff]
    %v770 = vld [vmem:[#allocation2 + $0x20] sm:$0xff]
    %v771 = vld [vmem:[#allocation2 + $0x28] sm:$0xff]
    %v772 = vld [vmem:[#allocation2 + $0x30] sm:$0xff]
    %v773 = vld [vmem:[#allocation2 + $0x38] sm:$0xff]
    %v774 = vld [vmem:[#allocation2 + $0x40] sm:$0xff]
    %v775 = vld [vmem:[#allocation2 + $0x48] sm:$0xff]
    %v776 = vld [vmem:[#allocation2 + $0x50] sm:$0xff]
    %v777 = vld [vmem:[#allocation2 + $0x58] sm:$0xff]
    %v778 = vld [vmem:[#allocation2 + $0x60] sm:$0xff]
    %v779 = vld [vmem:[#allocation2 + $0x68] sm:$0xff]
    %v780 = vld [vmem:[#allocation2 + $0x70] sm:$0xff]
    %v781 = vld [vmem:[#allocation2 + $0x78] sm:$0xff]
    %v782 = vld [vmem:[#allocation2 + $0x80] sm:$0xff]
    %v783 = vld [vmem:[#allocation2 + $0x88] sm:$0xff]
    %v784 = vld [vmem:[#allocation2 + $0x90] sm:$0xff]
    %v785 = vld [vmem:[#allocation2 + $0x98] sm:$0xff]
    %v786 = vld [vmem:[#allocation2 + $0xa0] sm:$0xff]
    %v787 = vld [vmem:[#allocation2 + $0xa8] sm:$0xff]
    %v788 = vld [vmem:[#allocation2 + $0xb0] sm:$0xff]
    %v789 = vld [vmem:[#allocation2 + $0xb8] sm:$0xff]
    %v790 = vld [vmem:[#allocation2 + $0xc0] sm:$0xff]
    %v791 = vld [vmem:[#allocation2 + $0xc8] sm:$0xff]
    %v792 = vld [vmem:[#allocation2 + $0xd0] sm:$0xff]
    %v793 = vld [vmem:[#allocation2 + $0xd8] sm:$0xff]
    %v794 = vld [vmem:[#allocation2 + $0xe0] sm:$0xff]
    %v795 = vld [vmem:[#allocation2 + $0xe8] sm:$0xff]
    %v796 = vld [vmem:[#allocation2 + $0xf0] sm:$0xff]
    %v797 = vld [vmem:[#allocation2 + $0xf8] sm:$0xff]
    %v798 = vld [vmem:[#allocation2 + $0x100] sm:$0xff]
    %v799 = vld [vmem:[#allocation2 + $0x108] sm:$0xff]
    %v800 = vld [vmem:[#allocation2 + $0x110] sm:$0xff]
    %v801 = vld [vmem:[#allocation2 + $0x118] sm:$0xff]
    %v802 = vld [vmem:[#allocation2 + $0x120] sm:$0xff]
    %v803 = vld [vmem:[#allocation2 + $0x128] sm:$0xff]
    %v804 = vld [vmem:[#allocation2 + $0x130] sm:$0xff]
    %v805 = vld [vmem:[#allocation2 + $0x138] sm:$0xff]
    %v806 = vld [vmem:[#allocation2 + $0x140] sm:$0xff]
    %v807 = vld [vmem:[#allocation2 + $0x148] sm:$0xff]
    %v808 = vld [vmem:[#allocation2 + $0x150] sm:$0xff]
    %v809 = vld [vmem:[#allocation2 + $0x158] sm:$0xff]
    %v810 = vld [vmem:[#allocation2 + $0x160] sm:$0xff]
    %v811 = vld [vmem:[#allocation2 + $0x168] sm:$0xff]
    %v812 = vld [vmem:[#allocation2 + $0x170] sm:$0xff]
    %v813 = vld [vmem:[#allocation2 + $0x178] sm:$0xff]
    %v814 = vld [vmem:[#allocation2 + $0x180] sm:$0xff]
    %v815 = vld [vmem:[#allocation2 + $0x188] sm:$0xff]
    %v816 = vld [vmem:[#allocation2 + $0x190] sm:$0xff]
    %v817 = vld [vmem:[#allocation2 + $0x198] sm:$0xff]
    %v818 = vld [vmem:[#allocation2 + $0x1a0] sm:$0xff]
    %v819 = vld [vmem:[#allocation2 + $0x1a8] sm:$0xff]
    %v820 = vld [vmem:[#allocation2 + $0x1b0] sm:$0xff]
    %v821 = vld [vmem:[#allocation2 + $0x1b8] sm:$0xff]
    %v822 = vld [vmem:[#allocation2 + $0x1c0] sm:$0xff]
    %v823 = vld [vmem:[#allocation2 + $0x1c8] sm:$0xff]
    %v824 = vld [vmem:[#allocation2 + $0x1d0] sm:$0xff]
    %v825 = vld [vmem:[#allocation2 + $0x1d8] sm:$0xff]
    %v826 = vld [vmem:[#allocation2 + $0x1e0] sm:$0xff]
    %v827 = vld [vmem:[#allocation2 + $0x1e8] sm:$0xff]
    %v828 = vld [vmem:[#allocation2 + $0x1f0] sm:$0xff]
    %v829 = vld [vmem:[#allocation2 + $0x1f8] sm:$0xff]
    %v830 = vld [vmem:[%s2] sm:$0x1]
    %v832 = vperm.slane %v830, 0
    %v834 = vadd.f32 %v766, %v832
    %v835 = vadd.f32 %v767, %v832
    %v836 = vadd.f32 %v768, %v832
    %v837 = vadd.f32 %v769, %v832
    %v838 = vadd.f32 %v770, %v832
    %v839 = vadd.f32 %v771, %v832
    %v840 = vadd.f32 %v772, %v832
    %v841 = vadd.f32 %v773, %v832
    %v842 = vadd.f32 %v774, %v832
    %v843 = vadd.f32 %v775, %v832
    %v844 = vadd.f32 %v776, %v832
    %v845 = vadd.f32 %v777, %v832
    %v846 = vadd.f32 %v778, %v832
    %v847 = vadd.f32 %v779, %v832
    %v848 = vadd.f32 %v780, %v832
    %v849 = vadd.f32 %v781, %v832
    %v850 = vadd.f32 %v782, %v832
    %v851 = vadd.f32 %v783, %v832
    %v852 = vadd.f32 %v784, %v832
    %v853 = vadd.f32 %v785, %v832
    %v854 = vadd.f32 %v786, %v832
    %v855 = vadd.f32 %v787, %v832
    %v856 = vadd.f32 %v788, %v832
    %v857 = vadd.f32 %v789, %v832
    %v858 = vadd.f32 %v790, %v832
    %v859 = vadd.f32 %v791, %v832
    %v860 = vadd.f32 %v792, %v832
    %v861 = vadd.f32 %v793, %v832
    %v862 = vadd.f32 %v794, %v832
    %v863 = vadd.f32 %v795, %v832
    %v864 = vadd.f32 %v796, %v832
    %v865 = vadd.f32 %v797, %v832
    %v866 = vadd.f32 %v798, %v832
    %v867 = vadd.f32 %v799, %v832
    %v868 = vadd.f32 %v800, %v832
    %v869 = vadd.f32 %v801, %v832
    %v870 = vadd.f32 %v802, %v832
    %v871 = vadd.f32 %v803, %v832
    %v872 = vadd.f32 %v804, %v832
    %v873 = vadd.f32 %v805, %v832
    %v874 = vadd.f32 %v806, %v832
    %v875 = vadd.f32 %v807, %v832
    %v876 = vadd.f32 %v808, %v832
    %v877 = vadd.f32 %v809, %v832
    %v878 = vadd.f32 %v810, %v832
    %v879 = vadd.f32 %v811, %v832
    %v880 = vadd.f32 %v812, %v832
    %v881 = vadd.f32 %v813, %v832
    %v882 = vadd.f32 %v814, %v832
    %v883 = vadd.f32 %v815, %v832
    %v884 = vadd.f32 %v816, %v832
    %v885 = vadd.f32 %v817, %v832
    %v886 = vadd.f32 %v818, %v832
    %v887 = vadd.f32 %v819, %v832
    %v888 = vadd.f32 %v820, %v832
    %v889 = vadd.f32 %v821, %v832
    %v890 = vadd.f32 %v822, %v832
    %v891 = vadd.f32 %v823, %v832
    %v892 = vadd.f32 %v824, %v832
    %v893 = vadd.f32 %v825, %v832
    %v894 = vadd.f32 %v826, %v832
    %v895 = vadd.f32 %v827, %v832
    %v896 = vadd.f32 %v828, %v832
    %v897 = vadd.f32 %v829, %v832
    %v898 = vmax.f32 %v834, 0.0
    %v899 = vmax.f32 %v835, 0.0
    %v900 = vmax.f32 %v836, 0.0
    %v901 = vmax.f32 %v837, 0.0
    %v902 = vmax.f32 %v838, 0.0
    %v903 = vmax.f32 %v839, 0.0
    %v904 = vmax.f32 %v840, 0.0
    %v905 = vmax.f32 %v841, 0.0
    %v906 = vmax.f32 %v842, 0.0
    %v907 = vmax.f32 %v843, 0.0
    %v908 = vmax.f32 %v844, 0.0
    %v909 = vmax.f32 %v845, 0.0
    %v910 = vmax.f32 %v846, 0.0
    %v911 = vmax.f32 %v847, 0.0
    %v912 = vmax.f32 %v848, 0.0
    %v913 = vmax.f32 %v849, 0.0
    %v914 = vmax.f32 %v850, 0.0
    %v915 = vmax.f32 %v851, 0.0
    %v916 = vmax.f32 %v852, 0.0
    %v917 = vmax.f32 %v853, 0.0
    %v918 = vmax.f32 %v854, 0.0
    %v919 = vmax.f32 %v855, 0.0
    %v920 = vmax.f32 %v856, 0.0
    %v921 = vmax.f32 %v857, 0.0
    %v922 = vmax.f32 %v858, 0.0
    %v923 = vmax.f32 %v859, 0.0
    %v924 = vmax.f32 %v860, 0.0
    %v925 = vmax.f32 %v861, 0.0
    %v926 = vmax.f32 %v862, 0.0
    %v927 = vmax.f32 %v863, 0.0
    %v928 = vmax.f32 %v864, 0.0
    %v929 = vmax.f32 %v865, 0.0
    %v930 = vmax.f32 %v866, 0.0
    %v931 = vmax.f32 %v867, 0.0
    %v932 = vmax.f32 %v868, 0.0
    %v933 = vmax.f32 %v869, 0.0
    %v934 = vmax.f32 %v870, 0.0
    %v935 = vmax.f32 %v871, 0.0
    %v936 = vmax.f32 %v872, 0.0
    %v937 = vmax.f32 %v873, 0.0
    %v938 = vmax.f32 %v874, 0.0
    %v939 = vmax.f32 %v875, 0.0
    %v940 = vmax.f32 %v876, 0.0
    %v941 = vmax.f32 %v877, 0.0
    %v942 = vmax.f32 %v878, 0.0
    %v943 = vmax.f32 %v879, 0.0
    %v944 = vmax.f32 %v880, 0.0
    %v945 = vmax.f32 %v881, 0.0
    %v946 = vmax.f32 %v882, 0.0
    %v947 = vmax.f32 %v883, 0.0
    %v948 = vmax.f32 %v884, 0.0
    %v949 = vmax.f32 %v885, 0.0
    %v950 = vmax.f32 %v886, 0.0
    %v951 = vmax.f32 %v887, 0.0
    %v952 = vmax.f32 %v888, 0.0
    %v953 = vmax.f32 %v889, 0.0
    %v954 = vmax.f32 %v890, 0.0
    %v955 = vmax.f32 %v891, 0.0
    %v956 = vmax.f32 %v892, 0.0
    %v957 = vmax.f32 %v893, 0.0
    %v958 = vmax.f32 %v894, 0.0
    %v959 = vmax.f32 %v895, 0.0
    %v960 = vmax.f32 %v896, 0.0
    %v961 = vmax.f32 %v897, 0.0
    %962 = vst [vmem:[%s3] sm:$0xff] %v898
    %963 = vst [vmem:[%s3 + $0x8] sm:$0xff] %v899
    %964 = vst [vmem:[%s3 + $0x10] sm:$0xff] %v900
    %965 = vst [vmem:[%s3 + $0x18] sm:$0xff] %v901
    %966 = vst [vmem:[%s3 + $0x20] sm:$0xff] %v902
    %967 = vst [vmem:[%s3 + $0x28] sm:$0xff] %v903
    %968 = vst [vmem:[%s3 + $0x30] sm:$0xff] %v904
    %969 = vst [vmem:[%s3 + $0x38] sm:$0xff] %v905
    %970 = vst [vmem:[%s3 + $0x40] sm:$0xff] %v906
    %971 = vst [vmem:[%s3 + $0x48] sm:$0xff] %v907
    %972 = vst [vmem:[%s3 + $0x50] sm:$0xff] %v908
    %973 = vst [vmem:[%s3 + $0x58] sm:$0xff] %v909
    %974 = vst [vmem:[%s3 + $0x60] sm:$0xff] %v910
    %975 = vst [vmem:[%s3 + $0x68] sm:$0xff] %v911
    %976 = vst [vmem:[%s3 + $0x70] sm:$0xff] %v912
    %977 = vst [vmem:[%s3 + $0x78] sm:$0xff] %v913
    %978 = vst [vmem:[%s3 + $0x80] sm:$0xff] %v914
    %979 = vst [vmem:[%s3 + $0x88] sm:$0xff] %v915
    %980 = vst [vmem:[%s3 + $0x90] sm:$0xff] %v916
    %981 = vst [vmem:[%s3 + $0x98] sm:$0xff] %v917
    %982 = vst [vmem:[%s3 + $0xa0] sm:$0xff] %v918
    %983 = vst [vmem:[%s3 + $0xa8] sm:$0xff] %v919
    %984 = vst [vmem:[%s3 + $0xb0] sm:$0xff] %v920
    %985 = vst [vmem:[%s3 + $0xb8] sm:$0xff] %v921
    %986 = vst [vmem:[%s3 + $0xc0] sm:$0xff] %v922
    %987 = vst [vmem:[%s3 + $0xc8] sm:$0xff] %v923
    %988 = vst [vmem:[%s3 + $0xd0] sm:$0xff] %v924
    %989 = vst [vmem:[%s3 + $0xd8] sm:$0xff] %v925
    %990 = vst [vmem:[%s3 + $0xe0] sm:$0xff] %v926
    %991 = vst [vmem:[%s3 + $0xe8] sm:$0xff] %v927
    %992 = vst [vmem:[%s3 + $0xf0] sm:$0xff] %v928
    %993 = vst [vmem:[%s3 + $0xf8] sm:$0xff] %v929
    %994 = vst [vmem:[%s3 + $0x100] sm:$0xff] %v930
    %995 = vst [vmem:[%s3 + $0x108] sm:$0xff] %v931
    %996 = vst [vmem:[%s3 + $0x110] sm:$0xff] %v932
    %997 = vst [vmem:[%s3 + $0x118] sm:$0xff] %v933
    %998 = vst [vmem:[%s3 + $0x120] sm:$0xff] %v934
    %999 = vst [vmem:[%s3 + $0x128] sm:$0xff] %v935
    %1000 = vst [vmem:[%s3 + $0x130] sm:$0xff] %v936
    %1001 = vst [vmem:[%s3 + $0x138] sm:$0xff] %v937
    %1002 = vst [vmem:[%s3 + $0x140] sm:$0xff] %v938
    %1003 = vst [vmem:[%s3 + $0x148] sm:$0xff] %v939
    %1004 = vst [vmem:[%s3 + $0x150] sm:$0xff] %v940
    %1005 = vst [vmem:[%s3 + $0x158] sm:$0xff] %v941
    %1006 = vst [vmem:[%s3 + $0x160] sm:$0xff] %v942
    %1007 = vst [vmem:[%s3 + $0x168] sm:$0xff] %v943
    %1008 = vst [vmem:[%s3 + $0x170] sm:$0xff] %v944
    %1009 = vst [vmem:[%s3 + $0x178] sm:$0xff] %v945
    %1010 = vst [vmem:[%s3 + $0x180] sm:$0xff] %v946
    %1011 = vst [vmem:[%s3 + $0x188] sm:$0xff] %v947
    %1012 = vst [vmem:[%s3 + $0x190] sm:$0xff] %v948
    %1013 = vst [vmem:[%s3 + $0x198] sm:$0xff] %v949
    %1014 = vst [vmem:[%s3 + $0x1a0] sm:$0xff] %v950
    %1015 = vst [vmem:[%s3 + $0x1a8] sm:$0xff] %v951
    %1016 = vst [vmem:[%s3 + $0x1b0] sm:$0xff] %v952
    %1017 = vst [vmem:[%s3 + $0x1b8] sm:$0xff] %v953
    %1018 = vst [vmem:[%s3 + $0x1c0] sm:$0xff] %v954
    %1019 = vst [vmem:[%s3 + $0x1c8] sm:$0xff] %v955
    %1020 = vst [vmem:[%s3 + $0x1d0] sm:$0xff] %v956
    %1021 = vst [vmem:[%s3 + $0x1d8] sm:$0xff] %v957
    %1022 = vst [vmem:[%s3 + $0x1e0] sm:$0xff] %v958
    %1023 = vst [vmem:[%s3 + $0x1e8] sm:$0xff] %v959
    %1024 = vst [vmem:[%s3 + $0x1f0] sm:$0xff] %v960
    %1025 = vst [vmem:[%s3 + $0x1f8] sm:$0xff] %v961
  $region21: #{aspp_head_forward.10} parent=0 // pred_fallthru
    _
  // Predicated region
  $region22: #{aspp_head_forward.10} parent=0 // pred_check
    _
  $region23: #{aspp_head_forward.10} parent=0 // pred_check_branch
    %1027 = sbr.rel (0) target = $region25
  $region24: #{aspp_head_forward.10} parent=0 // pred_region
    _
  $region25: #{aspp_head_forward.10} parent=0 // pred_fallthru
    _
  // Predicated region
  $region26: #{aspp_head_forward.10} parent=0 // pred_check
    _
  $region27: #{aspp_head_forward.10} parent=0 // pred_check_branch
    %1029 = sbr.rel (0) target = $region29
  $region28: #{aspp_head_forward.10} parent=0 // pred_region
    _
  $region29: #{aspp_head_forward.10} parent=0 // pred_fallthru
    _

// kernel: aspp_head_forward.7
$region0: #{aspp_head_forward.7}
  #allocation0 [shape = 'u32[]', space=smem, size = 0x4, offset = 0x4, fixed_abs, tag = 'smem constant byte address 0x4 - core index']
  #allocation1 [shape = 'u32[72,128]{1,0:T(1,128)}', space=vmem, size = 0x9000, scoped, tag = 'internal scratch']
  #allocation2 [shape = 'f32[8,128]{1,0:T(8,128)}', space=vmem, size = 0x1000, scoped, tag = 'scratch operand']
  %s0 = inlined_call_operand.vmem [shape: bf16[8,128], index: 0, kind: input, shape index: {}]
  %s1 = inlined_call_operand.vmem [shape: bf16[128,128], index: 1, kind: input, shape index: {}]
  %s2 = inlined_call_operand.vmem [shape: f32[1,128], index: 2, kind: input, shape index: {}]
  %s3 = inlined_call_operand.vmem [shape: f32[8,128], index: 3, kind: output, shape index: {}]
  %s4 = sld [smem:[#allocation0]]
  $region30: #{aspp_head_forward.7} parent=0
    _
  %s6 = ssub.s32 1, %s4
  %s7 = scalar_select 0, %s6, %s4
  // Predicated region
  $region2: #{aspp_head_forward.7} parent=0 // pred_check
    _
  $region3: #{aspp_head_forward.7} parent=0 // pred_check_branch
    %9 = sbr.rel (0) target = $region5
  $region4: #{aspp_head_forward.7} parent=0 // pred_region
    _
  $region5: #{aspp_head_forward.7} parent=0 // pred_fallthru
    _
  // Predicated region
  $region6: #{aspp_head_forward.7} parent=0 // pred_check
    _
  $region7: #{aspp_head_forward.7} parent=0 // pred_check_branch
    %11 = sbr.rel (0) target = $region9
  $region8: #{aspp_head_forward.7} parent=0 // pred_region
    _
  $region9: #{aspp_head_forward.7} parent=0 // pred_fallthru
    _
  // Predicated region
  $region10: #{aspp_head_forward.7} parent=0 // pred_check
    _
  $region11: #{aspp_head_forward.7} parent=0 // pred_check_branch
    %13 = sbr.rel (0) target = $region13
  $region12: #{aspp_head_forward.7} parent=0 // pred_region
    _
  $region13: #{aspp_head_forward.7} parent=0 // pred_fallthru
    _
  %p14 = scmp.eq.s32.totalorder 0, 0
  // Predicated region
  $region14: #{aspp_head_forward.7} parent=0 // pred_check
    %p15 = pneg %p14
  $region15: #{aspp_head_forward.7} parent=0 // pred_check_branch
    %17 = sbr.rel (%p15) target = $region17
  $region16: #{aspp_head_forward.7} parent=0 // pred_region
    %18 = vst [vmem:[#allocation2] sm:$0xff] 0.0
  $region17: #{aspp_head_forward.7} parent=0 // pred_fallthru
    _
  %v19 = vld [vmem:[#allocation2] sm:$0xff]
  %v20 = vld [vmem:[%s0] sm:$0xf]
  %v21 = vld [vmem:[%s1] sm:$0xf]
  %v22 = vld [vmem:[%s1 + $0x4] sm:$0xf]
  %v23 = vld [vmem:[%s1 + $0x8] sm:$0xf]
  %v24 = vld [vmem:[%s1 + $0xc] sm:$0xf]
  %v25 = vld [vmem:[%s1 + $0x10] sm:$0xf]
  %v26 = vld [vmem:[%s1 + $0x14] sm:$0xf]
  %v27 = vld [vmem:[%s1 + $0x18] sm:$0xf]
  %v28 = vld [vmem:[%s1 + $0x1c] sm:$0xf]
  %v29 = vld [vmem:[%s1 + $0x20] sm:$0xf]
  %v30 = vld [vmem:[%s1 + $0x24] sm:$0xf]
  %v31 = vld [vmem:[%s1 + $0x28] sm:$0xf]
  %v32 = vld [vmem:[%s1 + $0x2c] sm:$0xf]
  %v33 = vld [vmem:[%s1 + $0x30] sm:$0xf]
  %v34 = vld [vmem:[%s1 + $0x34] sm:$0xf]
  %v35 = vld [vmem:[%s1 + $0x38] sm:$0xf]
  %v36 = vld [vmem:[%s1 + $0x3c] sm:$0xf]
  %v53 = vunpack.c.l.b16 %v21
  %v54 = vunpack.c.l.b16 %v22
  %v55 = vunpack.c.l.b16 %v23
  %v56 = vunpack.c.l.b16 %v24
  %v57 = vunpack.c.l.b16 %v25
  %v58 = vunpack.c.l.b16 %v26
  %v59 = vunpack.c.l.b16 %v27
  %v60 = vunpack.c.l.b16 %v28
  %v61 = vunpack.c.l.b16 %v29
  %v62 = vunpack.c.l.b16 %v30
  %v63 = vunpack.c.l.b16 %v31
  %v64 = vunpack.c.l.b16 %v32
  %v65 = vunpack.c.l.b16 %v33
  %v66 = vunpack.c.l.b16 %v34
  %v67 = vunpack.c.l.b16 %v35
  %v68 = vunpack.c.l.b16 %v36
  %v69 = vpack.c.b16 %v54, %v53
  %v70 = vpack.c.b16 %v56, %v55
  %v71 = vpack.c.b16 %v58, %v57
  %v72 = vpack.c.b16 %v60, %v59
  %v73 = vpack.c.b16 %v62, %v61
  %v74 = vpack.c.b16 %v64, %v63
  %v75 = vpack.c.b16 %v66, %v65
  %v76 = vpack.c.b16 %v68, %v67
  %85 = vmatpush.bf16.msra.mxu0 %v76
  %86 = vmatpush.bf16.msra.mxu0 %v75
  %87 = vmatpush.bf16.msra.mxu0 %v74
  %88 = vmatpush.bf16.msra.mxu0 %v73
  %89 = vmatpush.bf16.msra.mxu0 %v72
  %90 = vmatpush.bf16.msra.mxu0 %v71
  %91 = vmatpush.bf16.msra.mxu0 %v70
  %92 = vmatpush.bf16.msra.mxu0 %v69
  %93 = vmatmul.bf16.gmra.mxu0 %v20
  %v94 = vpop.f32.mrf.mxu0
  %v95 = vadd.f32 0.0, %v94
  %v96 = vpop.f32.mrf.mxu0
  %97 = vdwg.mxu0
  %v98 = vadd.f32 %v19, %v95
  %99 = vst [vmem:[#allocation2] sm:$0xff] %v98
  // Predicated region
  $region18: #{aspp_head_forward.7} parent=0 // pred_check
    %p100 = pneg %p14
  $region19: #{aspp_head_forward.7} parent=0 // pred_check_branch
    %102 = sbr.rel (%p100) target = $region21
  $region20: #{aspp_head_forward.7} parent=0 // pred_region
    %v103 = vld [vmem:[#allocation2] sm:$0xff]
    %v104 = vld [vmem:[%s2] sm:$0x1]
    %v106 = vperm.slane %v104, 0
    %v108 = vadd.f32 %v103, %v106
    %v109 = vmax.f32 %v108, 0.0
    %110 = vst [vmem:[%s3] sm:$0xff] %v109
  $region21: #{aspp_head_forward.7} parent=0 // pred_fallthru
    _
  // Predicated region
  $region22: #{aspp_head_forward.7} parent=0 // pred_check
    _
  $region23: #{aspp_head_forward.7} parent=0 // pred_check_branch
    %112 = sbr.rel (0) target = $region25
  $region24: #{aspp_head_forward.7} parent=0 // pred_region
    _
  $region25: #{aspp_head_forward.7} parent=0 // pred_fallthru
    _
  // Predicated region
  $region26: #{aspp_head_forward.7} parent=0 // pred_check
    _
  $region27: #{aspp_head_forward.7} parent=0 // pred_check_branch
    %114 = sbr.rel (0) target = $region29
  $region28: #{aspp_head_forward.7} parent=0 // pred_region
    _
  $region29: #{aspp_head_forward.7} parent=0 // pred_fallthru
    _

// kernel: aspp_head_forward.12
$region0: #{aspp_head_forward.12}
  #allocation0 [shape = 'u32[]', space=smem, size = 0x4, offset = 0x4, fixed_abs, tag = 'smem constant byte address 0x4 - core index']
  #allocation1 [shape = 'u32[72,128]{1,0:T(1,128)}', space=vmem, size = 0x9000, scoped, tag = 'internal scratch']
  #allocation2 [shape = 'f32[512,128]{1,0:T(8,128)}', space=vmem, size = 0x40000, scoped, tag = 'scratch operand']
  %s0 = inlined_call_operand.vmem [shape: bf16[512,384], index: 0, kind: input, shape index: {}]
  %s1 = inlined_call_operand.vmem [shape: bf16[384,128], index: 1, kind: input, shape index: {}]
  %s2 = inlined_call_operand.vmem [shape: f32[1,128], index: 2, kind: input, shape index: {}]
  %s3 = inlined_call_operand.vmem [shape: f32[512,128], index: 3, kind: output, shape index: {}]
  %s4 = sld [smem:[#allocation0]]
  $region30: #{aspp_head_forward.12} parent=0
    _
  %s6 = ssub.s32 1, %s4
  %s7 = scalar_select 0, %s6, %s4
  // Predicated region
  $region2: #{aspp_head_forward.12} parent=0 // pred_check
    _
  $region3: #{aspp_head_forward.12} parent=0 // pred_check_branch
    %9 = sbr.rel (0) target = $region5
  $region4: #{aspp_head_forward.12} parent=0 // pred_region
    _
  $region5: #{aspp_head_forward.12} parent=0 // pred_fallthru
    _
  // Predicated region
  $region6: #{aspp_head_forward.12} parent=0 // pred_check
    _
  $region7: #{aspp_head_forward.12} parent=0 // pred_check_branch
    %11 = sbr.rel (0) target = $region9
  $region8: #{aspp_head_forward.12} parent=0 // pred_region
    _
  $region9: #{aspp_head_forward.12} parent=0 // pred_fallthru
    _
  // Predicated region
  $region10: #{aspp_head_forward.12} parent=0 // pred_check
    _
  $region11: #{aspp_head_forward.12} parent=0 // pred_check_branch
    %13 = sbr.rel (0) target = $region13
  $region12: #{aspp_head_forward.12} parent=0 // pred_region
    _
  $region13: #{aspp_head_forward.12} parent=0 // pred_fallthru
    _
  %p14 = scmp.eq.s32.totalorder 0, 0
  // Predicated region
  $region14: #{aspp_head_forward.12} parent=0 // pred_check
    %p15 = pneg %p14
  $region15: #{aspp_head_forward.12} parent=0 // pred_check_branch
    %17 = sbr.rel (%p15) target = $region17
  $region16: #{aspp_head_forward.12} parent=0 // pred_region
    %18 = vst [vmem:[#allocation2] sm:$0xff] 0.0
    %19 = vst [vmem:[#allocation2 + $0x8] sm:$0xff] 0.0
    %20 = vst [vmem:[#allocation2 + $0x10] sm:$0xff] 0.0
    %21 = vst [vmem:[#allocation2 + $0x18] sm:$0xff] 0.0
    %22 = vst [vmem:[#allocation2 + $0x20] sm:$0xff] 0.0
    %23 = vst [vmem:[#allocation2 + $0x28] sm:$0xff] 0.0
    %24 = vst [vmem:[#allocation2 + $0x30] sm:$0xff] 0.0
    %25 = vst [vmem:[#allocation2 + $0x38] sm:$0xff] 0.0
    %26 = vst [vmem:[#allocation2 + $0x40] sm:$0xff] 0.0
    %27 = vst [vmem:[#allocation2 + $0x48] sm:$0xff] 0.0
    %28 = vst [vmem:[#allocation2 + $0x50] sm:$0xff] 0.0
    %29 = vst [vmem:[#allocation2 + $0x58] sm:$0xff] 0.0
    %30 = vst [vmem:[#allocation2 + $0x60] sm:$0xff] 0.0
    %31 = vst [vmem:[#allocation2 + $0x68] sm:$0xff] 0.0
    %32 = vst [vmem:[#allocation2 + $0x70] sm:$0xff] 0.0
    %33 = vst [vmem:[#allocation2 + $0x78] sm:$0xff] 0.0
    %34 = vst [vmem:[#allocation2 + $0x80] sm:$0xff] 0.0
    %35 = vst [vmem:[#allocation2 + $0x88] sm:$0xff] 0.0
    %36 = vst [vmem:[#allocation2 + $0x90] sm:$0xff] 0.0
    %37 = vst [vmem:[#allocation2 + $0x98] sm:$0xff] 0.0
    %38 = vst [vmem:[#allocation2 + $0xa0] sm:$0xff] 0.0
    %39 = vst [vmem:[#allocation2 + $0xa8] sm:$0xff] 0.0
    %40 = vst [vmem:[#allocation2 + $0xb0] sm:$0xff] 0.0
    %41 = vst [vmem:[#allocation2 + $0xb8] sm:$0xff] 0.0
    %42 = vst [vmem:[#allocation2 + $0xc0] sm:$0xff] 0.0
    %43 = vst [vmem:[#allocation2 + $0xc8] sm:$0xff] 0.0
    %44 = vst [vmem:[#allocation2 + $0xd0] sm:$0xff] 0.0
    %45 = vst [vmem:[#allocation2 + $0xd8] sm:$0xff] 0.0
    %46 = vst [vmem:[#allocation2 + $0xe0] sm:$0xff] 0.0
    %47 = vst [vmem:[#allocation2 + $0xe8] sm:$0xff] 0.0
    %48 = vst [vmem:[#allocation2 + $0xf0] sm:$0xff] 0.0
    %49 = vst [vmem:[#allocation2 + $0xf8] sm:$0xff] 0.0
    %50 = vst [vmem:[#allocation2 + $0x100] sm:$0xff] 0.0
    %51 = vst [vmem:[#allocation2 + $0x108] sm:$0xff] 0.0
    %52 = vst [vmem:[#allocation2 + $0x110] sm:$0xff] 0.0
    %53 = vst [vmem:[#allocation2 + $0x118] sm:$0xff] 0.0
    %54 = vst [vmem:[#allocation2 + $0x120] sm:$0xff] 0.0
    %55 = vst [vmem:[#allocation2 + $0x128] sm:$0xff] 0.0
    %56 = vst [vmem:[#allocation2 + $0x130] sm:$0xff] 0.0
    %57 = vst [vmem:[#allocation2 + $0x138] sm:$0xff] 0.0
    %58 = vst [vmem:[#allocation2 + $0x140] sm:$0xff] 0.0
    %59 = vst [vmem:[#allocation2 + $0x148] sm:$0xff] 0.0
    %60 = vst [vmem:[#allocation2 + $0x150] sm:$0xff] 0.0
    %61 = vst [vmem:[#allocation2 + $0x158] sm:$0xff] 0.0
    %62 = vst [vmem:[#allocation2 + $0x160] sm:$0xff] 0.0
    %63 = vst [vmem:[#allocation2 + $0x168] sm:$0xff] 0.0
    %64 = vst [vmem:[#allocation2 + $0x170] sm:$0xff] 0.0
    %65 = vst [vmem:[#allocation2 + $0x178] sm:$0xff] 0.0
    %66 = vst [vmem:[#allocation2 + $0x180] sm:$0xff] 0.0
    %67 = vst [vmem:[#allocation2 + $0x188] sm:$0xff] 0.0
    %68 = vst [vmem:[#allocation2 + $0x190] sm:$0xff] 0.0
    %69 = vst [vmem:[#allocation2 + $0x198] sm:$0xff] 0.0
    %70 = vst [vmem:[#allocation2 + $0x1a0] sm:$0xff] 0.0
    %71 = vst [vmem:[#allocation2 + $0x1a8] sm:$0xff] 0.0
    %72 = vst [vmem:[#allocation2 + $0x1b0] sm:$0xff] 0.0
    %73 = vst [vmem:[#allocation2 + $0x1b8] sm:$0xff] 0.0
    %74 = vst [vmem:[#allocation2 + $0x1c0] sm:$0xff] 0.0
    %75 = vst [vmem:[#allocation2 + $0x1c8] sm:$0xff] 0.0
    %76 = vst [vmem:[#allocation2 + $0x1d0] sm:$0xff] 0.0
    %77 = vst [vmem:[#allocation2 + $0x1d8] sm:$0xff] 0.0
    %78 = vst [vmem:[#allocation2 + $0x1e0] sm:$0xff] 0.0
    %79 = vst [vmem:[#allocation2 + $0x1e8] sm:$0xff] 0.0
    %80 = vst [vmem:[#allocation2 + $0x1f0] sm:$0xff] 0.0
    %81 = vst [vmem:[#allocation2 + $0x1f8] sm:$0xff] 0.0
  $region17: #{aspp_head_forward.12} parent=0 // pred_fallthru
    _
  %v82 = vld [vmem:[#allocation2] sm:$0xff]
  %v83 = vld [vmem:[#allocation2 + $0x8] sm:$0xff]
  %v84 = vld [vmem:[#allocation2 + $0x10] sm:$0xff]
  %v85 = vld [vmem:[#allocation2 + $0x18] sm:$0xff]
  %v86 = vld [vmem:[#allocation2 + $0x20] sm:$0xff]
  %v87 = vld [vmem:[#allocation2 + $0x28] sm:$0xff]
  %v88 = vld [vmem:[#allocation2 + $0x30] sm:$0xff]
  %v89 = vld [vmem:[#allocation2 + $0x38] sm:$0xff]
  %v90 = vld [vmem:[#allocation2 + $0x40] sm:$0xff]
  %v91 = vld [vmem:[#allocation2 + $0x48] sm:$0xff]
  %v92 = vld [vmem:[#allocation2 + $0x50] sm:$0xff]
  %v93 = vld [vmem:[#allocation2 + $0x58] sm:$0xff]
  %v94 = vld [vmem:[#allocation2 + $0x60] sm:$0xff]
  %v95 = vld [vmem:[#allocation2 + $0x68] sm:$0xff]
  %v96 = vld [vmem:[#allocation2 + $0x70] sm:$0xff]
  %v97 = vld [vmem:[#allocation2 + $0x78] sm:$0xff]
  %v98 = vld [vmem:[#allocation2 + $0x80] sm:$0xff]
  %v99 = vld [vmem:[#allocation2 + $0x88] sm:$0xff]
  %v100 = vld [vmem:[#allocation2 + $0x90] sm:$0xff]
  %v101 = vld [vmem:[#allocation2 + $0x98] sm:$0xff]
  %v102 = vld [vmem:[#allocation2 + $0xa0] sm:$0xff]
  %v103 = vld [vmem:[#allocation2 + $0xa8] sm:$0xff]
  %v104 = vld [vmem:[#allocation2 + $0xb0] sm:$0xff]
  %v105 = vld [vmem:[#allocation2 + $0xb8] sm:$0xff]
  %v106 = vld [vmem:[#allocation2 + $0xc0] sm:$0xff]
  %v107 = vld [vmem:[#allocation2 + $0xc8] sm:$0xff]
  %v108 = vld [vmem:[#allocation2 + $0xd0] sm:$0xff]
  %v109 = vld [vmem:[#allocation2 + $0xd8] sm:$0xff]
  %v110 = vld [vmem:[#allocation2 + $0xe0] sm:$0xff]
  %v111 = vld [vmem:[#allocation2 + $0xe8] sm:$0xff]
  %v112 = vld [vmem:[#allocation2 + $0xf0] sm:$0xff]
  %v113 = vld [vmem:[#allocation2 + $0xf8] sm:$0xff]
  %v114 = vld [vmem:[#allocation2 + $0x100] sm:$0xff]
  %v115 = vld [vmem:[#allocation2 + $0x108] sm:$0xff]
  %v116 = vld [vmem:[#allocation2 + $0x110] sm:$0xff]
  %v117 = vld [vmem:[#allocation2 + $0x118] sm:$0xff]
  %v118 = vld [vmem:[#allocation2 + $0x120] sm:$0xff]
  %v119 = vld [vmem:[#allocation2 + $0x128] sm:$0xff]
  %v120 = vld [vmem:[#allocation2 + $0x130] sm:$0xff]
  %v121 = vld [vmem:[#allocation2 + $0x138] sm:$0xff]
  %v122 = vld [vmem:[#allocation2 + $0x140] sm:$0xff]
  %v123 = vld [vmem:[#allocation2 + $0x148] sm:$0xff]
  %v124 = vld [vmem:[#allocation2 + $0x150] sm:$0xff]
  %v125 = vld [vmem:[#allocation2 + $0x158] sm:$0xff]
  %v126 = vld [vmem:[#allocation2 + $0x160] sm:$0xff]
  %v127 = vld [vmem:[#allocation2 + $0x168] sm:$0xff]
  %v128 = vld [vmem:[#allocation2 + $0x170] sm:$0xff]
  %v129 = vld [vmem:[#allocation2 + $0x178] sm:$0xff]
  %v130 = vld [vmem:[#allocation2 + $0x180] sm:$0xff]
  %v131 = vld [vmem:[#allocation2 + $0x188] sm:$0xff]
  %v132 = vld [vmem:[#allocation2 + $0x190] sm:$0xff]
  %v133 = vld [vmem:[#allocation2 + $0x198] sm:$0xff]
  %v134 = vld [vmem:[#allocation2 + $0x1a0] sm:$0xff]
  %v135 = vld [vmem:[#allocation2 + $0x1a8] sm:$0xff]
  %v136 = vld [vmem:[#allocation2 + $0x1b0] sm:$0xff]
  %v137 = vld [vmem:[#allocation2 + $0x1b8] sm:$0xff]
  %v138 = vld [vmem:[#allocation2 + $0x1c0] sm:$0xff]
  %v139 = vld [vmem:[#allocation2 + $0x1c8] sm:$0xff]
  %v140 = vld [vmem:[#allocation2 + $0x1d0] sm:$0xff]
  %v141 = vld [vmem:[#allocation2 + $0x1d8] sm:$0xff]
  %v142 = vld [vmem:[#allocation2 + $0x1e0] sm:$0xff]
  %v143 = vld [vmem:[#allocation2 + $0x1e8] sm:$0xff]
  %v144 = vld [vmem:[#allocation2 + $0x1f0] sm:$0xff]
  %v145 = vld [vmem:[#allocation2 + $0x1f8] sm:$0xff]
  %v146 = vld [vmem:[%s0] sm:$0xff]
  %v147 = vld [vmem:[%s0 + $0x8] sm:$0xf]
  %v148 = vld [vmem:[%s0 + $0xc] sm:$0xff]
  %v149 = vld [vmem:[%s0 + $0x14] sm:$0xf]
  %v150 = vld [vmem:[%s0 + $0x18] sm:$0xff]
  %v151 = vld [vmem:[%s0 + $0x20] sm:$0xf]
  %v152 = vld [vmem:[%s0 + $0x24] sm:$0xff]
  %v153 = vld [vmem:[%s0 + $0x2c] sm:$0xf]
  %v154 = vld [vmem:[%s0 + $0x30] sm:$0xff]
  %v155 = vld [vmem:[%s0 + $0x38] sm:$0xf]
  %v156 = vld [vmem:[%s0 + $0x3c] sm:$0xff]
  %v157 = vld [vmem:[%s0 + $0x44] sm:$0xf]
  %v158 = vld [vmem:[%s0 + $0x48] sm:$0xff]
  %v159 = vld [vmem:[%s0 + $0x50] sm:$0xf]
  %v160 = vld [vmem:[%s0 + $0x54] sm:$0xff]
  %v161 = vld [vmem:[%s0 + $0x5c] sm:$0xf]
  %v162 = vld [vmem:[%s0 + $0x60] sm:$0xff]
  %v163 = vld [vmem:[%s0 + $0x68] sm:$0xf]
  %v164 = vld [vmem:[%s0 + $0x6c] sm:$0xff]
  %v165 = vld [vmem:[%s0 + $0x74] sm:$0xf]
  %v166 = vld [vmem:[%s0 + $0x78] sm:$0xff]
  %v167 = vld [vmem:[%s0 + $0x80] sm:$0xf]
  %v168 = vld [vmem:[%s0 + $0x84] sm:$0xff]
  %v169 = vld [vmem:[%s0 + $0x8c] sm:$0xf]
  %v170 = vld [vmem:[%s0 + $0x90] sm:$0xff]
  %v171 = vld [vmem:[%s0 + $0x98] sm:$0xf]
  %v172 = vld [vmem:[%s0 + $0x9c] sm:$0xff]
  %v173 = vld [vmem:[%s0 + $0xa4] sm:$0xf]
  %v174 = vld [vmem:[%s0 + $0xa8] sm:$0xff]
  %v175 = vld [vmem:[%s0 + $0xb0] sm:$0xf]
  %v176 = vld [vmem:[%s0 + $0xb4] sm:$0xff]
  %v177 = vld [vmem:[%s0 + $0xbc] sm:$0xf]
  %v178 = vld [vmem:[%s0 + $0xc0] sm:$0xff]
  %v179 = vld [vmem:[%s0 + $0xc8] sm:$0xf]
  %v180 = vld [vmem:[%s0 + $0xcc] sm:$0xff]
  %v181 = vld [vmem:[%s0 + $0xd4] sm:$0xf]
  %v182 = vld [vmem:[%s0 + $0xd8] sm:$0xff]
  %v183 = vld [vmem:[%s0 + $0xe0] sm:$0xf]
  %v184 = vld [vmem:[%s0 + $0xe4] sm:$0xff]
  %v185 = vld [vmem:[%s0 + $0xec] sm:$0xf]
  %v186 = vld [vmem:[%s0 + $0xf0] sm:$0xff]
  %v187 = vld [vmem:[%s0 + $0xf8] sm:$0xf]
  %v188 = vld [vmem:[%s0 + $0xfc] sm:$0xff]
  %v189 = vld [vmem:[%s0 + $0x104] sm:$0xf]
  %v190 = vld [vmem:[%s0 + $0x108] sm:$0xff]
  %v191 = vld [vmem:[%s0 + $0x110] sm:$0xf]
  %v192 = vld [vmem:[%s0 + $0x114] sm:$0xff]
  %v193 = vld [vmem:[%s0 + $0x11c] sm:$0xf]
  %v194 = vld [vmem:[%s0 + $0x120] sm:$0xff]
  %v195 = vld [vmem:[%s0 + $0x128] sm:$0xf]
  %v196 = vld [vmem:[%s0 + $0x12c] sm:$0xff]
  %v197 = vld [vmem:[%s0 + $0x134] sm:$0xf]
  %v198 = vld [vmem:[%s0 + $0x138] sm:$0xff]
  %v199 = vld [vmem:[%s0 + $0x140] sm:$0xf]
  %v200 = vld [vmem:[%s0 + $0x144] sm:$0xff]
  %v201 = vld [vmem:[%s0 + $0x14c] sm:$0xf]
  %v202 = vld [vmem:[%s0 + $0x150] sm:$0xff]
  %v203 = vld [vmem:[%s0 + $0x158] sm:$0xf]
  %v204 = vld [vmem:[%s0 + $0x15c] sm:$0xff]
  %v205 = vld [vmem:[%s0 + $0x164] sm:$0xf]
  %v206 = vld [vmem:[%s0 + $0x168] sm:$0xff]
  %v207 = vld [vmem:[%s0 + $0x170] sm:$0xf]
  %v208 = vld [vmem:[%s0 + $0x174] sm:$0xff]
  %v209 = vld [vmem:[%s0 + $0x17c] sm:$0xf]
  %v210 = vld [vmem:[%s0 + $0x180] sm:$0xff]
  %v211 = vld [vmem:[%s0 + $0x188] sm:$0xf]
  %v212 = vld [vmem:[%s0 + $0x18c] sm:$0xff]
  %v213 = vld [vmem:[%s0 + $0x194] sm:$0xf]
  %v214 = vld [vmem:[%s0 + $0x198] sm:$0xff]
  %v215 = vld [vmem:[%s0 + $0x1a0] sm:$0xf]
  %v216 = vld [vmem:[%s0 + $0x1a4] sm:$0xff]
  %v217 = vld [vmem:[%s0 + $0x1ac] sm:$0xf]
  %v218 = vld [vmem:[%s0 + $0x1b0] sm:$0xff]
  %v219 = vld [vmem:[%s0 + $0x1b8] sm:$0xf]
  %v220 = vld [vmem:[%s0 + $0x1bc] sm:$0xff]
  %v221 = vld [vmem:[%s0 + $0x1c4] sm:$0xf]
  %v222 = vld [vmem:[%s0 + $0x1c8] sm:$0xff]
  %v223 = vld [vmem:[%s0 + $0x1d0] sm:$0xf]
  %v224 = vld [vmem:[%s0 + $0x1d4] sm:$0xff]
  %v225 = vld [vmem:[%s0 + $0x1dc] sm:$0xf]
  %v226 = vld [vmem:[%s0 + $0x1e0] sm:$0xff]
  %v227 = vld [vmem:[%s0 + $0x1e8] sm:$0xf]
  %v228 = vld [vmem:[%s0 + $0x1ec] sm:$0xff]
  %v229 = vld [vmem:[%s0 + $0x1f4] sm:$0xf]
  %v230 = vld [vmem:[%s0 + $0x1f8] sm:$0xff]
  %v231 = vld [vmem:[%s0 + $0x200] sm:$0xf]
  %v232 = vld [vmem:[%s0 + $0x204] sm:$0xff]
  %v233 = vld [vmem:[%s0 + $0x20c] sm:$0xf]
  %v234 = vld [vmem:[%s0 + $0x210] sm:$0xff]
  %v235 = vld [vmem:[%s0 + $0x218] sm:$0xf]
  %v236 = vld [vmem:[%s0 + $0x21c] sm:$0xff]
  %v237 = vld [vmem:[%s0 + $0x224] sm:$0xf]
  %v238 = vld [vmem:[%s0 + $0x228] sm:$0xff]
  %v239 = vld [vmem:[%s0 + $0x230] sm:$0xf]
  %v240 = vld [vmem:[%s0 + $0x234] sm:$0xff]
  %v241 = vld [vmem:[%s0 + $0x23c] sm:$0xf]
  %v242 = vld [vmem:[%s0 + $0x240] sm:$0xff]
  %v243 = vld [vmem:[%s0 + $0x248] sm:$0xf]
  %v244 = vld [vmem:[%s0 + $0x24c] sm:$0xff]
  %v245 = vld [vmem:[%s0 + $0x254] sm:$0xf]
  %v246 = vld [vmem:[%s0 + $0x258] sm:$0xff]
  %v247 = vld [vmem:[%s0 + $0x260] sm:$0xf]
  %v248 = vld [vmem:[%s0 + $0x264] sm:$0xff]
  %v249 = vld [vmem:[%s0 + $0x26c] sm:$0xf]
  %v250 = vld [vmem:[%s0 + $0x270] sm:$0xff]
  %v251 = vld [vmem:[%s0 + $0x278] sm:$0xf]
  %v252 = vld [vmem:[%s0 + $0x27c] sm:$0xff]
  %v253 = vld [vmem:[%s0 + $0x284] sm:$0xf]
  %v254 = vld [vmem:[%s0 + $0x288] sm:$0xff]
  %v255 = vld [vmem:[%s0 + $0x290] sm:$0xf]
  %v256 = vld [vmem:[%s0 + $0x294] sm:$0xff]
  %v257 = vld [vmem:[%s0 + $0x29c] sm:$0xf]
  %v258 = vld [vmem:[%s0 + $0x2a0] sm:$0xff]
  %v259 = vld [vmem:[%s0 + $0x2a8] sm:$0xf]
  %v260 = vld [vmem:[%s0 + $0x2ac] sm:$0xff]
  %v261 = vld [vmem:[%s0 + $0x2b4] sm:$0xf]
  %v262 = vld [vmem:[%s0 + $0x2b8] sm:$0xff]
  %v263 = vld [vmem:[%s0 + $0x2c0] sm:$0xf]
  %v264 = vld [vmem:[%s0 + $0x2c4] sm:$0xff]
  %v265 = vld [vmem:[%s0 + $0x2cc] sm:$0xf]
  %v266 = vld [vmem:[%s0 + $0x2d0] sm:$0xff]
  %v267 = vld [vmem:[%s0 + $0x2d8] sm:$0xf]
  %v268 = vld [vmem:[%s0 + $0x2dc] sm:$0xff]
  %v269 = vld [vmem:[%s0 + $0x2e4] sm:$0xf]
  %v270 = vld [vmem:[%s0 + $0x2e8] sm:$0xff]
  %v271 = vld [vmem:[%s0 + $0x2f0] sm:$0xf]
  %v272 = vld [vmem:[%s0 + $0x2f4] sm:$0xff]
  %v273 = vld [vmem:[%s0 + $0x2fc] sm:$0xf]
  %v274 = vld [vmem:[%s1] sm:$0xf]
  %v275 = vld [vmem:[%s1 + $0x4] sm:$0xf]
  %v276 = vld [vmem:[%s1 + $0x8] sm:$0xf]
  %v277 = vld [vmem:[%s1 + $0xc] sm:$0xf]
  %v278 = vld [vmem:[%s1 + $0x10] sm:$0xf]
  %v279 = vld [vmem:[%s1 + $0x14] sm:$0xf]
  %v280 = vld [vmem:[%s1 + $0x18] sm:$0xf]
  %v281 = vld [vmem:[%s1 + $0x1c] sm:$0xf]
  %v282 = vld [vmem:[%s1 + $0x20] sm:$0xf]
  %v283 = vld [vmem:[%s1 + $0x24] sm:$0xf]
  %v284 = vld [vmem:[%s1 + $0x28] sm:$0xf]
  %v285 = vld [vmem:[%s1 + $0x2c] sm:$0xf]
  %v286 = vld [vmem:[%s1 + $0x30] sm:$0xf]
  %v287 = vld [vmem:[%s1 + $0x34] sm:$0xf]
  %v288 = vld [vmem:[%s1 + $0x38] sm:$0xf]
  %v289 = vld [vmem:[%s1 + $0x3c] sm:$0xf]
  %v290 = vld [vmem:[%s1 + $0x40] sm:$0xf]
  %v291 = vld [vmem:[%s1 + $0x44] sm:$0xf]
  %v292 = vld [vmem:[%s1 + $0x48] sm:$0xf]
  %v293 = vld [vmem:[%s1 + $0x4c] sm:$0xf]
  %v294 = vld [vmem:[%s1 + $0x50] sm:$0xf]
  %v295 = vld [vmem:[%s1 + $0x54] sm:$0xf]
  %v296 = vld [vmem:[%s1 + $0x58] sm:$0xf]
  %v297 = vld [vmem:[%s1 + $0x5c] sm:$0xf]
  %v298 = vld [vmem:[%s1 + $0x60] sm:$0xf]
  %v299 = vld [vmem:[%s1 + $0x64] sm:$0xf]
  %v300 = vld [vmem:[%s1 + $0x68] sm:$0xf]
  %v301 = vld [vmem:[%s1 + $0x6c] sm:$0xf]
  %v302 = vld [vmem:[%s1 + $0x70] sm:$0xf]
  %v303 = vld [vmem:[%s1 + $0x74] sm:$0xf]
  %v304 = vld [vmem:[%s1 + $0x78] sm:$0xf]
  %v305 = vld [vmem:[%s1 + $0x7c] sm:$0xf]
  %v306 = vld [vmem:[%s1 + $0x80] sm:$0xf]
  %v307 = vld [vmem:[%s1 + $0x84] sm:$0xf]
  %v308 = vld [vmem:[%s1 + $0x88] sm:$0xf]
  %v309 = vld [vmem:[%s1 + $0x8c] sm:$0xf]
  %v310 = vld [vmem:[%s1 + $0x90] sm:$0xf]
  %v311 = vld [vmem:[%s1 + $0x94] sm:$0xf]
  %v312 = vld [vmem:[%s1 + $0x98] sm:$0xf]
  %v313 = vld [vmem:[%s1 + $0x9c] sm:$0xf]
  %v314 = vld [vmem:[%s1 + $0xa0] sm:$0xf]
  %v315 = vld [vmem:[%s1 + $0xa4] sm:$0xf]
  %v316 = vld [vmem:[%s1 + $0xa8] sm:$0xf]
  %v317 = vld [vmem:[%s1 + $0xac] sm:$0xf]
  %v318 = vld [vmem:[%s1 + $0xb0] sm:$0xf]
  %v319 = vld [vmem:[%s1 + $0xb4] sm:$0xf]
  %v320 = vld [vmem:[%s1 + $0xb8] sm:$0xf]
  %v321 = vld [vmem:[%s1 + $0xbc] sm:$0xf]
  %v450 = vunpack.c.l.b16 %v146
  %v451 = vunpack.c.h.b16 %v146
  %v452 = vunpack.c.l.b16 %v147
  %v453 = vunpack.c.l.b16 %v148
  %v454 = vunpack.c.h.b16 %v148
  %v455 = vunpack.c.l.b16 %v149
  %v456 = vunpack.c.l.b16 %v150
  %v457 = vunpack.c.h.b16 %v150
  %v458 = vunpack.c.l.b16 %v151
  %v459 = vunpack.c.l.b16 %v152
  %v460 = vunpack.c.h.b16 %v152
  %v461 = vunpack.c.l.b16 %v153
  %v462 = vunpack.c.l.b16 %v154
  %v463 = vunpack.c.h.b16 %v154
  %v464 = vunpack.c.l.b16 %v155
  %v465 = vunpack.c.l.b16 %v156
  %v466 = vunpack.c.h.b16 %v156
  %v467 = vunpack.c.l.b16 %v157
  %v468 = vunpack.c.l.b16 %v158
  %v469 = vunpack.c.h.b16 %v158
  %v470 = vunpack.c.l.b16 %v159
  %v471 = vunpack.c.l.b16 %v160
  %v472 = vunpack.c.h.b16 %v160
  %v473 = vunpack.c.l.b16 %v161
  %v474 = vunpack.c.l.b16 %v162
  %v475 = vunpack.c.h.b16 %v162
  %v476 = vunpack.c.l.b16 %v163
  %v477 = vunpack.c.l.b16 %v164
  %v478 = vunpack.c.h.b16 %v164
  %v479 = vunpack.c.l.b16 %v165
  %v480 = vunpack.c.l.b16 %v166
  %v481 = vunpack.c.h.b16 %v166
  %v482 = vunpack.c.l.b16 %v167
  %v483 = vunpack.c.l.b16 %v168
  %v484 = vunpack.c.h.b16 %v168
  %v485 = vunpack.c.l.b16 %v169
  %v486 = vunpack.c.l.b16 %v170
  %v487 = vunpack.c.h.b16 %v170
  %v488 = vunpack.c.l.b16 %v171
  %v489 = vunpack.c.l.b16 %v172
  %v490 = vunpack.c.h.b16 %v172
  %v491 = vunpack.c.l.b16 %v173
  %v492 = vunpack.c.l.b16 %v174
  %v493 = vunpack.c.h.b16 %v174
  %v494 = vunpack.c.l.b16 %v175
  %v495 = vunpack.c.l.b16 %v176
  %v496 = vunpack.c.h.b16 %v176
  %v497 = vunpack.c.l.b16 %v177
  %v498 = vunpack.c.l.b16 %v178
  %v499 = vunpack.c.h.b16 %v178
  %v500 = vunpack.c.l.b16 %v179
  %v501 = vunpack.c.l.b16 %v180
  %v502 = vunpack.c.h.b16 %v180
  %v503 = vunpack.c.l.b16 %v181
  %v504 = vunpack.c.l.b16 %v182
  %v505 = vunpack.c.h.b16 %v182
  %v506 = vunpack.c.l.b16 %v183
  %v507 = vunpack.c.l.b16 %v184
  %v508 = vunpack.c.h.b16 %v184
  %v509 = vunpack.c.l.b16 %v185
  %v510 = vunpack.c.l.b16 %v186
  %v511 = vunpack.c.h.b16 %v186
  %v512 = vunpack.c.l.b16 %v187
  %v513 = vunpack.c.l.b16 %v188
  %v514 = vunpack.c.h.b16 %v188
  %v515 = vunpack.c.l.b16 %v189
  %v516 = vunpack.c.l.b16 %v190
  %v517 = vunpack.c.h.b16 %v190
  %v518 = vunpack.c.l.b16 %v191
  %v519 = vunpack.c.l.b16 %v192
  %v520 = vunpack.c.h.b16 %v192
  %v521 = vunpack.c.l.b16 %v193
  %v522 = vunpack.c.l.b16 %v194
  %v523 = vunpack.c.h.b16 %v194
  %v524 = vunpack.c.l.b16 %v195
  %v525 = vunpack.c.l.b16 %v196
  %v526 = vunpack.c.h.b16 %v196
  %v527 = vunpack.c.l.b16 %v197
  %v528 = vunpack.c.l.b16 %v198
  %v529 = vunpack.c.h.b16 %v198
  %v530 = vunpack.c.l.b16 %v199
  %v531 = vunpack.c.l.b16 %v200
  %v532 = vunpack.c.h.b16 %v200
  %v533 = vunpack.c.l.b16 %v201
  %v534 = vunpack.c.l.b16 %v202
  %v535 = vunpack.c.h.b16 %v202
  %v536 = vunpack.c.l.b16 %v203
  %v537 = vunpack.c.l.b16 %v204
  %v538 = vunpack.c.h.b16 %v204
  %v539 = vunpack.c.l.b16 %v205
  %v540 = vunpack.c.l.b16 %v206
  %v541 = vunpack.c.h.b16 %v206
  %v542 = vunpack.c.l.b16 %v207
  %v543 = vunpack.c.l.b16 %v208
  %v544 = vunpack.c.h.b16 %v208
  %v545 = vunpack.c.l.b16 %v209
  %v546 = vunpack.c.l.b16 %v210
  %v547 = vunpack.c.h.b16 %v210
  %v548 = vunpack.c.l.b16 %v211
  %v549 = vunpack.c.l.b16 %v212
  %v550 = vunpack.c.h.b16 %v212
  %v551 = vunpack.c.l.b16 %v213
  %v552 = vunpack.c.l.b16 %v214
  %v553 = vunpack.c.h.b16 %v214
  %v554 = vunpack.c.l.b16 %v215
  %v555 = vunpack.c.l.b16 %v216
  %v556 = vunpack.c.h.b16 %v216
  %v557 = vunpack.c.l.b16 %v217
  %v558 = vunpack.c.l.b16 %v218
  %v559 = vunpack.c.h.b16 %v218
  %v560 = vunpack.c.l.b16 %v219
  %v561 = vunpack.c.l.b16 %v220
  %v562 = vunpack.c.h.b16 %v220
  %v563 = vunpack.c.l.b16 %v221
  %v564 = vunpack.c.l.b16 %v222
  %v565 = vunpack.c.h.b16 %v222
  %v566 = vunpack.c.l.b16 %v223
  %v567 = vunpack.c.l.b16 %v224
  %v568 = vunpack.c.h.b16 %v224
  %v569 = vunpack.c.l.b16 %v225
  %v570 = vunpack.c.l.b16 %v226
  %v571 = vunpack.c.h.b16 %v226
  %v572 = vunpack.c.l.b16 %v227
  %v573 = vunpack.c.l.b16 %v228
  %v574 = vunpack.c.h.b16 %v228
  %v575 = vunpack.c.l.b16 %v229
  %v576 = vunpack.c.l.b16 %v230
  %v577 = vunpack.c.h.b16 %v230
  %v578 = vunpack.c.l.b16 %v231
  %v579 = vunpack.c.l.b16 %v232
  %v580 = vunpack.c.h.b16 %v232
  %v581 = vunpack.c.l.b16 %v233
  %v582 = vunpack.c.l.b16 %v234
  %v583 = vunpack.c.h.b16 %v234
  %v584 = vunpack.c.l.b16 %v235
  %v585 = vunpack.c.l.b16 %v236
  %v586 = vunpack.c.h.b16 %v236
  %v587 = vunpack.c.l.b16 %v237
  %v588 = vunpack.c.l.b16 %v238
  %v589 = vunpack.c.h.b16 %v238
  %v590 = vunpack.c.l.b16 %v239
  %v591 = vunpack.c.l.b16 %v240
  %v592 = vunpack.c.h.b16 %v240
  %v593 = vunpack.c.l.b16 %v241
  %v594 = vunpack.c.l.b16 %v242
  %v595 = vunpack.c.h.b16 %v242
  %v596 = vunpack.c.l.b16 %v243
  %v597 = vunpack.c.l.b16 %v244
  %v598 = vunpack.c.h.b16 %v244
  %v599 = vunpack.c.l.b16 %v245
  %v600 = vunpack.c.l.b16 %v246
  %v601 = vunpack.c.h.b16 %v246
  %v602 = vunpack.c.l.b16 %v247
  %v603 = vunpack.c.l.b16 %v248
  %v604 = vunpack.c.h.b16 %v248
  %v605 = vunpack.c.l.b16 %v249
  %v606 = vunpack.c.l.b16 %v250
  %v607 = vunpack.c.h.b16 %v250
  %v608 = vunpack.c.l.b16 %v251
  %v609 = vunpack.c.l.b16 %v252
  %v610 = vunpack.c.h.b16 %v252
  %v611 = vunpack.c.l.b16 %v253
  %v612 = vunpack.c.l.b16 %v254
  %v613 = vunpack.c.h.b16 %v254
  %v614 = vunpack.c.l.b16 %v255
  %v615 = vunpack.c.l.b16 %v256
  %v616 = vunpack.c.h.b16 %v256
  %v617 = vunpack.c.l.b16 %v257
  %v618 = vunpack.c.l.b16 %v258
  %v619 = vunpack.c.h.b16 %v258
  %v620 = vunpack.c.l.b16 %v259
  %v621 = vunpack.c.l.b16 %v260
  %v622 = vunpack.c.h.b16 %v260
  %v623 = vunpack.c.l.b16 %v261
  %v624 = vunpack.c.l.b16 %v262
  %v625 = vunpack.c.h.b16 %v262
  %v626 = vunpack.c.l.b16 %v263
  %v627 = vunpack.c.l.b16 %v264
  %v628 = vunpack.c.h.b16 %v264
  %v629 = vunpack.c.l.b16 %v265
  %v630 = vunpack.c.l.b16 %v266
  %v631 = vunpack.c.h.b16 %v266
  %v632 = vunpack.c.l.b16 %v267
  %v633 = vunpack.c.l.b16 %v268
  %v634 = vunpack.c.h.b16 %v268
  %v635 = vunpack.c.l.b16 %v269
  %v636 = vunpack.c.l.b16 %v270
  %v637 = vunpack.c.h.b16 %v270
  %v638 = vunpack.c.l.b16 %v271
  %v639 = vunpack.c.l.b16 %v272
  %v640 = vunpack.c.h.b16 %v272
  %v641 = vunpack.c.l.b16 %v273
  %v642 = vpack.c.b16 %v453, %v450
  %v643 = vpack.c.b16 %v454, %v451
  %v644 = vpack.c.b16 %v455, %v452
  %v645 = vpack.c.b16 %v459, %v456
  %v646 = vpack.c.b16 %v460, %v457
  %v647 = vpack.c.b16 %v461, %v458
  %v648 = vpack.c.b16 %v465, %v462
  %v649 = vpack.c.b16 %v466, %v463
  %v650 = vpack.c.b16 %v467, %v464
  %v651 = vpack.c.b16 %v471, %v468
  %v652 = vpack.c.b16 %v472, %v469
  %v653 = vpack.c.b16 %v473, %v470
  %v654 = vpack.c.b16 %v477, %v474
  %v655 = vpack.c.b16 %v478, %v475
  %v656 = vpack.c.b16 %v479, %v476
  %v657 = vpack.c.b16 %v483, %v480
  %v658 = vpack.c.b16 %v484, %v481
  %v659 = vpack.c.b16 %v485, %v482
  %v660 = vpack.c.b16 %v489, %v486
  %v661 = vpack.c.b16 %v490, %v487
  %v662 = vpack.c.b16 %v491, %v488
  %v663 = vpack.c.b16 %v495, %v492
  %v664 = vpack.c.b16 %v496, %v493
  %v665 = vpack.c.b16 %v497, %v494
  %v666 = vpack.c.b16 %v501, %v498
  %v667 = vpack.c.b16 %v502, %v499
  %v668 = vpack.c.b16 %v503, %v500
  %v669 = vpack.c.b16 %v507, %v504
  %v670 = vpack.c.b16 %v508, %v505
  %v671 = vpack.c.b16 %v509, %v506
  %v672 = vpack.c.b16 %v513, %v510
  %v673 = vpack.c.b16 %v514, %v511
  %v674 = vpack.c.b16 %v515, %v512
  %v675 = vpack.c.b16 %v519, %v516
  %v676 = vpack.c.b16 %v520, %v517
  %v677 = vpack.c.b16 %v521, %v518
  %v678 = vpack.c.b16 %v525, %v522
  %v679 = vpack.c.b16 %v526, %v523
  %v680 = vpack.c.b16 %v527, %v524
  %v681 = vpack.c.b16 %v531, %v528
  %v682 = vpack.c.b16 %v532, %v529
  %v683 = vpack.c.b16 %v533, %v530
  %v684 = vpack.c.b16 %v537, %v534
  %v685 = vpack.c.b16 %v538, %v535
  %v686 = vpack.c.b16 %v539, %v536
  %v687 = vpack.c.b16 %v543, %v540
  %v688 = vpack.c.b16 %v544, %v541
  %v689 = vpack.c.b16 %v545, %v542
  %v690 = vpack.c.b16 %v549, %v546
  %v691 = vpack.c.b16 %v550, %v547
  %v692 = vpack.c.b16 %v551, %v548
  %v693 = vpack.c.b16 %v555, %v552
  %v694 = vpack.c.b16 %v556, %v553
  %v695 = vpack.c.b16 %v557, %v554
  %v696 = vpack.c.b16 %v561, %v558
  %v697 = vpack.c.b16 %v562, %v559
  %v698 = vpack.c.b16 %v563, %v560
  %v699 = vpack.c.b16 %v567, %v564
  %v700 = vpack.c.b16 %v568, %v565
  %v701 = vpack.c.b16 %v569, %v566
  %v702 = vpack.c.b16 %v573, %v570
  %v703 = vpack.c.b16 %v574, %v571
  %v704 = vpack.c.b16 %v575, %v572
  %v705 = vpack.c.b16 %v579, %v576
  %v706 = vpack.c.b16 %v580, %v577
  %v707 = vpack.c.b16 %v581, %v578
  %v708 = vpack.c.b16 %v585, %v582
  %v709 = vpack.c.b16 %v586, %v583
  %v710 = vpack.c.b16 %v587, %v584
  %v711 = vpack.c.b16 %v591, %v588
  %v712 = vpack.c.b16 %v592, %v589
  %v713 = vpack.c.b16 %v593, %v590
  %v714 = vpack.c.b16 %v597, %v594
  %v715 = vpack.c.b16 %v598, %v595
  %v716 = vpack.c.b16 %v599, %v596
  %v717 = vpack.c.b16 %v603, %v600
  %v718 = vpack.c.b16 %v604, %v601
  %v719 = vpack.c.b16 %v605, %v602
  %v720 = vpack.c.b16 %v609, %v606
  %v721 = vpack.c.b16 %v610, %v607
  %v722 = vpack.c.b16 %v611, %v608
  %v723 = vpack.c.b16 %v615, %v612
  %v724 = vpack.c.b16 %v616, %v613
  %v725 = vpack.c.b16 %v617, %v614
  %v726 = vpack.c.b16 %v621, %v618
  %v727 = vpack.c.b16 %v622, %v619
  %v728 = vpack.c.b16 %v623, %v620
  %v729 = vpack.c.b16 %v627, %v624
  %v730 = vpack.c.b16 %v628, %v625
  %v731 = vpack.c.b16 %v629, %v626
  %v732 = vpack.c.b16 %v633, %v630
  %v733 = vpack.c.b16 %v634, %v631
  %v734 = vpack.c.b16 %v635, %v632
  %v735 = vpack.c.b16 %v639, %v636
  %v736 = vpack.c.b16 %v640, %v637
  %v737 = vpack.c.b16 %v641, %v638
  %v882 = vunpack.c.l.b16 %v274
  %v883 = vunpack.c.l.b16 %v275
  %v884 = vunpack.c.l.b16 %v276
  %v885 = vunpack.c.l.b16 %v277
  %v886 = vunpack.c.l.b16 %v278
  %v887 = vunpack.c.l.b16 %v279
  %v888 = vunpack.c.l.b16 %v280
  %v889 = vunpack.c.l.b16 %v281
  %v890 = vunpack.c.l.b16 %v282
  %v891 = vunpack.c.l.b16 %v283
  %v892 = vunpack.c.l.b16 %v284
  %v893 = vunpack.c.l.b16 %v285
  %v894 = vunpack.c.l.b16 %v286
  %v895 = vunpack.c.l.b16 %v287
  %v896 = vunpack.c.l.b16 %v288
  %v897 = vunpack.c.l.b16 %v289
  %v898 = vunpack.c.l.b16 %v290
  %v899 = vunpack.c.l.b16 %v291
  %v900 = vunpack.c.l.b16 %v292
  %v901 = vunpack.c.l.b16 %v293
  %v902 = vunpack.c.l.b16 %v294
  %v903 = vunpack.c.l.b16 %v295
  %v904 = vunpack.c.l.b16 %v296
  %v905 = vunpack.c.l.b16 %v297
  %v906 = vunpack.c.l.b16 %v298
  %v907 = vunpack.c.l.b16 %v299
  %v908 = vunpack.c.l.b16 %v300
  %v909 = vunpack.c.l.b16 %v301
  %v910 = vunpack.c.l.b16 %v302
  %v911 = vunpack.c.l.b16 %v303
  %v912 = vunpack.c.l.b16 %v304
  %v913 = vunpack.c.l.b16 %v305
  %v914 = vunpack.c.l.b16 %v306
  %v915 = vunpack.c.l.b16 %v307
  %v916 = vunpack.c.l.b16 %v308
  %v917 = vunpack.c.l.b16 %v309
  %v918 = vunpack.c.l.b16 %v310
  %v919 = vunpack.c.l.b16 %v311
  %v920 = vunpack.c.l.b16 %v312
  %v921 = vunpack.c.l.b16 %v313
  %v922 = vunpack.c.l.b16 %v314
  %v923 = vunpack.c.l.b16 %v315
  %v924 = vunpack.c.l.b16 %v316
  %v925 = vunpack.c.l.b16 %v317
  %v926 = vunpack.c.l.b16 %v318
  %v927 = vunpack.c.l.b16 %v319
  %v928 = vunpack.c.l.b16 %v320
  %v929 = vunpack.c.l.b16 %v321
  %v930 = vpack.c.b16 %v883, %v882
  %v931 = vpack.c.b16 %v885, %v884
  %v932 = vpack.c.b16 %v887, %v886
  %v933 = vpack.c.b16 %v889, %v888
  %v934 = vpack.c.b16 %v891, %v890
  %v935 = vpack.c.b16 %v893, %v892
  %v936 = vpack.c.b16 %v895, %v894
  %v937 = vpack.c.b16 %v897, %v896
  %v938 = vpack.c.b16 %v899, %v898
  %v939 = vpack.c.b16 %v901, %v900
  %v940 = vpack.c.b16 %v903, %v902
  %v941 = vpack.c.b16 %v905, %v904
  %v942 = vpack.c.b16 %v907, %v906
  %v943 = vpack.c.b16 %v909, %v908
  %v944 = vpack.c.b16 %v911, %v910
  %v945 = vpack.c.b16 %v913, %v912
  %v946 = vpack.c.b16 %v915, %v914
  %v947 = vpack.c.b16 %v917, %v916
  %v948 = vpack.c.b16 %v919, %v918
  %v949 = vpack.c.b16 %v921, %v920
  %v950 = vpack.c.b16 %v923, %v922
  %v951 = vpack.c.b16 %v925, %v924
  %v952 = vpack.c.b16 %v927, %v926
  %v953 = vpack.c.b16 %v929, %v928
  %978 = vmatpush.bf16.msra.mxu0 %v937
  %979 = vmatpush.bf16.msra.mxu0 %v936
  %980 = vmatpush.bf16.msra.mxu0 %v935
  %981 = vmatpush.bf16.msra.mxu0 %v934
  %982 = vmatpush.bf16.msra.mxu0 %v933
  %983 = vmatpush.bf16.msra.mxu0 %v932
  %984 = vmatpush.bf16.msra.mxu0 %v931
  %985 = vmatpush.bf16.msra.mxu0 %v930
  %986 = vmatmul.bf16.gmra.mxu0 %v642
  %v987 = vpop.f32.mrf.mxu0
  %v988 = vadd.f32 0.0, %v987
  %v989 = vpop.f32.mrf.mxu0
  %v990 = vadd.f32 0.0, %v989
  %991 = vmatmul.bf16.gmra.mxu0 %v645
  %v992 = vpop.f32.mrf.mxu0
  %v993 = vadd.f32 0.0, %v992
  %v994 = vpop.f32.mrf.mxu0
  %v995 = vadd.f32 0.0, %v994
  %996 = vmatmul.bf16.gmra.mxu0 %v648
  %v997 = vpop.f32.mrf.mxu0
  %v998 = vadd.f32 0.0, %v997
  %v999 = vpop.f32.mrf.mxu0
  %v1000 = vadd.f32 0.0, %v999
  %1001 = vmatmul.bf16.gmra.mxu0 %v651
  %v1002 = vpop.f32.mrf.mxu0
  %v1003 = vadd.f32 0.0, %v1002
  %v1004 = vpop.f32.mrf.mxu0
  %v1005 = vadd.f32 0.0, %v1004
  %1006 = vmatmul.bf16.gmra.mxu0 %v654
  %v1007 = vpop.f32.mrf.mxu0
  %v1008 = vadd.f32 0.0, %v1007
  %v1009 = vpop.f32.mrf.mxu0
  %v1010 = vadd.f32 0.0, %v1009
  %1011 = vmatmul.bf16.gmra.mxu0 %v657
  %v1012 = vpop.f32.mrf.mxu0
  %v1013 = vadd.f32 0.0, %v1012
  %v1014 = vpop.f32.mrf.mxu0
  %v1015 = vadd.f32 0.0, %v1014
  %1016 = vmatmul.bf16.gmra.mxu0 %v660
  %v1017 = vpop.f32.mrf.mxu0
  %v1018 = vadd.f32 0.0, %v1017
  %v1019 = vpop.f32.mrf.mxu0
  %v1020 = vadd.f32 0.0, %v1019
  %1021 = vmatmul.bf16.gmra.mxu0 %v663
  %v1022 = vpop.f32.mrf.mxu0
  %v1023 = vadd.f32 0.0, %v1022
  %v1024 = vpop.f32.mrf.mxu0
  %v1025 = vadd.f32 0.0, %v1024
  %1026 = vmatmul.bf16.gmra.mxu0 %v666
  %v1027 = vpop.f32.mrf.mxu0
  %v1028 = vadd.f32 0.0, %v1027
  %v1029 = vpop.f32.mrf.mxu0
  %v1030 = vadd.f32 0.0, %v1029
  %1031 = vmatmul.bf16.gmra.mxu0 %v669
  %v1032 = vpop.f32.mrf.mxu0
  %v1033 = vadd.f32 0.0, %v1032
  %v1034 = vpop.f32.mrf.mxu0
  %v1035 = vadd.f32 0.0, %v1034
  %1036 = vmatmul.bf16.gmra.mxu0 %v672
  %v1037 = vpop.f32.mrf.mxu0
  %v1038 = vadd.f32 0.0, %v1037
  %v1039 = vpop.f32.mrf.mxu0
  %v1040 = vadd.f32 0.0, %v1039
  %1041 = vmatmul.bf16.gmra.mxu0 %v675
  %v1042 = vpop.f32.mrf.mxu0
  %v1043 = vadd.f32 0.0, %v1042
  %v1044 = vpop.f32.mrf.mxu0
  %v1045 = vadd.f32 0.0, %v1044
  %1046 = vmatmul.bf16.gmra.mxu0 %v678
  %v1047 = vpop.f32.mrf.mxu0
  %v1048 = vadd.f32 0.0, %v1047
  %v1049 = vpop.f32.mrf.mxu0
  %v1050 = vadd.f32 0.0, %v1049
  %1051 = vmatmul.bf16.gmra.mxu0 %v681
  %v1052 = vpop.f32.mrf.mxu0
  %v1053 = vadd.f32 0.0, %v1052
  %v1054 = vpop.f32.mrf.mxu0
  %v1055 = vadd.f32 0.0, %v1054
  %1056 = vmatmul.bf16.gmra.mxu0 %v684
  %v1057 = vpop.f32.mrf.mxu0
  %v1058 = vadd.f32 0.0, %v1057
  %v1059 = vpop.f32.mrf.mxu0
  %v1060 = vadd.f32 0.0, %v1059
  %1061 = vmatmul.bf16.gmra.mxu0 %v687
  %v1062 = vpop.f32.mrf.mxu0
  %v1063 = vadd.f32 0.0, %v1062
  %v1064 = vpop.f32.mrf.mxu0
  %v1065 = vadd.f32 0.0, %v1064
  %1066 = vmatmul.bf16.gmra.mxu0 %v690
  %v1067 = vpop.f32.mrf.mxu0
  %v1068 = vadd.f32 0.0, %v1067
  %v1069 = vpop.f32.mrf.mxu0
  %v1070 = vadd.f32 0.0, %v1069
  %1071 = vmatmul.bf16.gmra.mxu0 %v693
  %v1072 = vpop.f32.mrf.mxu0
  %v1073 = vadd.f32 0.0, %v1072
  %v1074 = vpop.f32.mrf.mxu0
  %v1075 = vadd.f32 0.0, %v1074
  %1076 = vmatmul.bf16.gmra.mxu0 %v696
  %v1077 = vpop.f32.mrf.mxu0
  %v1078 = vadd.f32 0.0, %v1077
  %v1079 = vpop.f32.mrf.mxu0
  %v1080 = vadd.f32 0.0, %v1079
  %1081 = vmatmul.bf16.gmra.mxu0 %v699
  %v1082 = vpop.f32.mrf.mxu0
  %v1083 = vadd.f32 0.0, %v1082
  %v1084 = vpop.f32.mrf.mxu0
  %v1085 = vadd.f32 0.0, %v1084
  %1086 = vmatmul.bf16.gmra.mxu0 %v702
  %v1087 = vpop.f32.mrf.mxu0
  %v1088 = vadd.f32 0.0, %v1087
  %v1089 = vpop.f32.mrf.mxu0
  %v1090 = vadd.f32 0.0, %v1089
  %1091 = vmatmul.bf16.gmra.mxu0 %v705
  %v1092 = vpop.f32.mrf.mxu0
  %v1093 = vadd.f32 0.0, %v1092
  %v1094 = vpop.f32.mrf.mxu0
  %v1095 = vadd.f32 0.0, %v1094
  %1096 = vmatmul.bf16.gmra.mxu0 %v708
  %v1097 = vpop.f32.mrf.mxu0
  %v1098 = vadd.f32 0.0, %v1097
  %v1099 = vpop.f32.mrf.mxu0
  %v1100 = vadd.f32 0.0, %v1099
  %1101 = vmatmul.bf16.gmra.mxu0 %v711
  %v1102 = vpop.f32.mrf.mxu0
  %v1103 = vadd.f32 0.0, %v1102
  %v1104 = vpop.f32.mrf.mxu0
  %v1105 = vadd.f32 0.0, %v1104
  %1106 = vmatmul.bf16.gmra.mxu0 %v714
  %v1107 = vpop.f32.mrf.mxu0
  %v1108 = vadd.f32 0.0, %v1107
  %v1109 = vpop.f32.mrf.mxu0
  %v1110 = vadd.f32 0.0, %v1109
  %1111 = vmatmul.bf16.gmra.mxu0 %v717
  %v1112 = vpop.f32.mrf.mxu0
  %v1113 = vadd.f32 0.0, %v1112
  %v1114 = vpop.f32.mrf.mxu0
  %v1115 = vadd.f32 0.0, %v1114
  %1116 = vmatmul.bf16.gmra.mxu0 %v720
  %v1117 = vpop.f32.mrf.mxu0
  %v1118 = vadd.f32 0.0, %v1117
  %v1119 = vpop.f32.mrf.mxu0
  %v1120 = vadd.f32 0.0, %v1119
  %1121 = vmatmul.bf16.gmra.mxu0 %v723
  %v1122 = vpop.f32.mrf.mxu0
  %v1123 = vadd.f32 0.0, %v1122
  %v1124 = vpop.f32.mrf.mxu0
  %v1125 = vadd.f32 0.0, %v1124
  %1126 = vmatmul.bf16.gmra.mxu0 %v726
  %v1127 = vpop.f32.mrf.mxu0
  %v1128 = vadd.f32 0.0, %v1127
  %v1129 = vpop.f32.mrf.mxu0
  %v1130 = vadd.f32 0.0, %v1129
  %1131 = vmatmul.bf16.gmra.mxu0 %v729
  %v1132 = vpop.f32.mrf.mxu0
  %v1133 = vadd.f32 0.0, %v1132
  %v1134 = vpop.f32.mrf.mxu0
  %v1135 = vadd.f32 0.0, %v1134
  %1136 = vmatmul.bf16.gmra.mxu0 %v732
  %v1137 = vpop.f32.mrf.mxu0
  %v1138 = vadd.f32 0.0, %v1137
  %v1139 = vpop.f32.mrf.mxu0
  %v1140 = vadd.f32 0.0, %v1139
  %1141 = vmatmul.bf16.gmra.mxu0 %v735
  %v1142 = vpop.f32.mrf.mxu0
  %v1143 = vadd.f32 0.0, %v1142
  %v1144 = vpop.f32.mrf.mxu0
  %v1145 = vadd.f32 0.0, %v1144
  %1146 = vdwg.mxu0
  %1147 = vmatpush.bf16.msra.mxu0 %v945
  %1148 = vmatpush.bf16.msra.mxu0 %v944
  %1149 = vmatpush.bf16.msra.mxu0 %v943
  %1150 = vmatpush.bf16.msra.mxu0 %v942
  %1151 = vmatpush.bf16.msra.mxu0 %v941
  %1152 = vmatpush.bf16.msra.mxu0 %v940
  %1153 = vmatpush.bf16.msra.mxu0 %v939
  %1154 = vmatpush.bf16.msra.mxu0 %v938
  %1155 = vmatmul.bf16.gmra.mxu0 %v643
  %v1156 = vpop.f32.mrf.mxu0
  %v1157 = vadd.f32 %v988, %v1156
  %v1158 = vpop.f32.mrf.mxu0
  %v1159 = vadd.f32 %v990, %v1158
  %1160 = vmatmul.bf16.gmra.mxu0 %v646
  %v1161 = vpop.f32.mrf.mxu0
  %v1162 = vadd.f32 %v993, %v1161
  %v1163 = vpop.f32.mrf.mxu0
  %v1164 = vadd.f32 %v995, %v1163
  %1165 = vmatmul.bf16.gmra.mxu0 %v649
  %v1166 = vpop.f32.mrf.mxu0
  %v1167 = vadd.f32 %v998, %v1166
  %v1168 = vpop.f32.mrf.mxu0
  %v1169 = vadd.f32 %v1000, %v1168
  %1170 = vmatmul.bf16.gmra.mxu0 %v652
  %v1171 = vpop.f32.mrf.mxu0
  %v1172 = vadd.f32 %v1003, %v1171
  %v1173 = vpop.f32.mrf.mxu0
  %v1174 = vadd.f32 %v1005, %v1173
  %1175 = vmatmul.bf16.gmra.mxu0 %v655
  %v1176 = vpop.f32.mrf.mxu0
  %v1177 = vadd.f32 %v1008, %v1176
  %v1178 = vpop.f32.mrf.mxu0
  %v1179 = vadd.f32 %v1010, %v1178
  %1180 = vmatmul.bf16.gmra.mxu0 %v658
  %v1181 = vpop.f32.mrf.mxu0
  %v1182 = vadd.f32 %v1013, %v1181
  %v1183 = vpop.f32.mrf.mxu0
  %v1184 = vadd.f32 %v1015, %v1183
  %1185 = vmatmul.bf16.gmra.mxu0 %v661
  %v1186 = vpop.f32.mrf.mxu0
  %v1187 = vadd.f32 %v1018, %v1186
  %v1188 = vpop.f32.mrf.mxu0
  %v1189 = vadd.f32 %v1020, %v1188
  %1190 = vmatmul.bf16.gmra.mxu0 %v664
  %v1191 = vpop.f32.mrf.mxu0
  %v1192 = vadd.f32 %v1023, %v1191
  %v1193 = vpop.f32.mrf.mxu0
  %v1194 = vadd.f32 %v1025, %v1193
  %1195 = vmatmul.bf16.gmra.mxu0 %v667
  %v1196 = vpop.f32.mrf.mxu0
  %v1197 = vadd.f32 %v1028, %v1196
  %v1198 = vpop.f32.mrf.mxu0
  %v1199 = vadd.f32 %v1030, %v1198
  %1200 = vmatmul.bf16.gmra.mxu0 %v670
  %v1201 = vpop.f32.mrf.mxu0
  %v1202 = vadd.f32 %v1033, %v1201
  %v1203 = vpop.f32.mrf.mxu0
  %v1204 = vadd.f32 %v1035, %v1203
  %1205 = vmatmul.bf16.gmra.mxu0 %v673
  %v1206 = vpop.f32.mrf.mxu0
  %v1207 = vadd.f32 %v1038, %v1206
  %v1208 = vpop.f32.mrf.mxu0
  %v1209 = vadd.f32 %v1040, %v1208
  %1210 = vmatmul.bf16.gmra.mxu0 %v676
  %v1211 = vpop.f32.mrf.mxu0
  %v1212 = vadd.f32 %v1043, %v1211
  %v1213 = vpop.f32.mrf.mxu0
  %v1214 = vadd.f32 %v1045, %v1213
  %1215 = vmatmul.bf16.gmra.mxu0 %v679
  %v1216 = vpop.f32.mrf.mxu0
  %v1217 = vadd.f32 %v1048, %v1216
  %v1218 = vpop.f32.mrf.mxu0
  %v1219 = vadd.f32 %v1050, %v1218
  %1220 = vmatmul.bf16.gmra.mxu0 %v682
  %v1221 = vpop.f32.mrf.mxu0
  %v1222 = vadd.f32 %v1053, %v1221
  %v1223 = vpop.f32.mrf.mxu0
  %v1224 = vadd.f32 %v1055, %v1223
  %1225 = vmatmul.bf16.gmra.mxu0 %v685
  %v1226 = vpop.f32.mrf.mxu0
  %v1227 = vadd.f32 %v1058, %v1226
  %v1228 = vpop.f32.mrf.mxu0
  %v1229 = vadd.f32 %v1060, %v1228
  %1230 = vmatmul.bf16.gmra.mxu0 %v688
  %v1231 = vpop.f32.mrf.mxu0
  %v1232 = vadd.f32 %v1063, %v1231
  %v1233 = vpop.f32.mrf.mxu0
  %v1234 = vadd.f32 %v1065, %v1233
  %1235 = vmatmul.bf16.gmra.mxu0 %v691
  %v1236 = vpop.f32.mrf.mxu0
  %v1237 = vadd.f32 %v1068, %v1236
  %v1238 = vpop.f32.mrf.mxu0
  %v1239 = vadd.f32 %v1070, %v1238
  %1240 = vmatmul.bf16.gmra.mxu0 %v694
  %v1241 = vpop.f32.mrf.mxu0
  %v1242 = vadd.f32 %v1073, %v1241
  %v1243 = vpop.f32.mrf.mxu0
  %v1244 = vadd.f32 %v1075, %v1243
  %1245 = vmatmul.bf16.gmra.mxu0 %v697
  %v1246 = vpop.f32.mrf.mxu0
  %v1247 = vadd.f32 %v1078, %v1246
  %v1248 = vpop.f32.mrf.mxu0
  %v1249 = vadd.f32 %v1080, %v1248
  %1250 = vmatmul.bf16.gmra.mxu0 %v700
  %v1251 = vpop.f32.mrf.mxu0
  %v1252 = vadd.f32 %v1083, %v1251
  %v1253 = vpop.f32.mrf.mxu0
  %v1254 = vadd.f32 %v1085, %v1253
  %1255 = vmatmul.bf16.gmra.mxu0 %v703
  %v1256 = vpop.f32.mrf.mxu0
  %v1257 = vadd.f32 %v1088, %v1256
  %v1258 = vpop.f32.mrf.mxu0
  %v1259 = vadd.f32 %v1090, %v1258
  %1260 = vmatmul.bf16.gmra.mxu0 %v706
  %v1261 = vpop.f32.mrf.mxu0
  %v1262 = vadd.f32 %v1093, %v1261
  %v1263 = vpop.f32.mrf.mxu0
  %v1264 = vadd.f32 %v1095, %v1263
  %1265 = vmatmul.bf16.gmra.mxu0 %v709
  %v1266 = vpop.f32.mrf.mxu0
  %v1267 = vadd.f32 %v1098, %v1266
  %v1268 = vpop.f32.mrf.mxu0
  %v1269 = vadd.f32 %v1100, %v1268
  %1270 = vmatmul.bf16.gmra.mxu0 %v712
  %v1271 = vpop.f32.mrf.mxu0
  %v1272 = vadd.f32 %v1103, %v1271
  %v1273 = vpop.f32.mrf.mxu0
  %v1274 = vadd.f32 %v1105, %v1273
  %1275 = vmatmul.bf16.gmra.mxu0 %v715
  %v1276 = vpop.f32.mrf.mxu0
  %v1277 = vadd.f32 %v1108, %v1276
  %v1278 = vpop.f32.mrf.mxu0
  %v1279 = vadd.f32 %v1110, %v1278
  %1280 = vmatmul.bf16.gmra.mxu0 %v718
  %v1281 = vpop.f32.mrf.mxu0
  %v1282 = vadd.f32 %v1113, %v1281
  %v1283 = vpop.f32.mrf.mxu0
  %v1284 = vadd.f32 %v1115, %v1283
  %1285 = vmatmul.bf16.gmra.mxu0 %v721
  %v1286 = vpop.f32.mrf.mxu0
  %v1287 = vadd.f32 %v1118, %v1286
  %v1288 = vpop.f32.mrf.mxu0
  %v1289 = vadd.f32 %v1120, %v1288
  %1290 = vmatmul.bf16.gmra.mxu0 %v724
  %v1291 = vpop.f32.mrf.mxu0
  %v1292 = vadd.f32 %v1123, %v1291
  %v1293 = vpop.f32.mrf.mxu0
  %v1294 = vadd.f32 %v1125, %v1293
  %1295 = vmatmul.bf16.gmra.mxu0 %v727
  %v1296 = vpop.f32.mrf.mxu0
  %v1297 = vadd.f32 %v1128, %v1296
  %v1298 = vpop.f32.mrf.mxu0
  %v1299 = vadd.f32 %v1130, %v1298
  %1300 = vmatmul.bf16.gmra.mxu0 %v730
  %v1301 = vpop.f32.mrf.mxu0
  %v1302 = vadd.f32 %v1133, %v1301
  %v1303 = vpop.f32.mrf.mxu0
  %v1304 = vadd.f32 %v1135, %v1303
  %1305 = vmatmul.bf16.gmra.mxu0 %v733
  %v1306 = vpop.f32.mrf.mxu0
  %v1307 = vadd.f32 %v1138, %v1306
  %v1308 = vpop.f32.mrf.mxu0
  %v1309 = vadd.f32 %v1140, %v1308
  %1310 = vmatmul.bf16.gmra.mxu0 %v736
  %v1311 = vpop.f32.mrf.mxu0
  %v1312 = vadd.f32 %v1143, %v1311
  %v1313 = vpop.f32.mrf.mxu0
  %v1314 = vadd.f32 %v1145, %v1313
  %1315 = vdwg.mxu0
  %1316 = vmatpush.bf16.msra.mxu0 %v953
  %1317 = vmatpush.bf16.msra.mxu0 %v952
  %1318 = vmatpush.bf16.msra.mxu0 %v951
  %1319 = vmatpush.bf16.msra.mxu0 %v950
  %1320 = vmatpush.bf16.msra.mxu0 %v949
  %1321 = vmatpush.bf16.msra.mxu0 %v948
  %1322 = vmatpush.bf16.msra.mxu0 %v947
  %1323 = vmatpush.bf16.msra.mxu0 %v946
  %1324 = vmatmul.bf16.gmra.mxu0 %v644
  %v1325 = vpop.f32.mrf.mxu0
  %v1326 = vadd.f32 %v1157, %v1325
  %v1327 = vpop.f32.mrf.mxu0
  %v1328 = vadd.f32 %v1159, %v1327
  %1329 = vmatmul.bf16.gmra.mxu0 %v647
  %v1330 = vpop.f32.mrf.mxu0
  %v1331 = vadd.f32 %v1162, %v1330
  %v1332 = vpop.f32.mrf.mxu0
  %v1333 = vadd.f32 %v1164, %v1332
  %1334 = vmatmul.bf16.gmra.mxu0 %v650
  %v1335 = vpop.f32.mrf.mxu0
  %v1336 = vadd.f32 %v1167, %v1335
  %v1337 = vpop.f32.mrf.mxu0
  %v1338 = vadd.f32 %v1169, %v1337
  %1339 = vmatmul.bf16.gmra.mxu0 %v653
  %v1340 = vpop.f32.mrf.mxu0
  %v1341 = vadd.f32 %v1172, %v1340
  %v1342 = vpop.f32.mrf.mxu0
  %v1343 = vadd.f32 %v1174, %v1342
  %1344 = vmatmul.bf16.gmra.mxu0 %v656
  %v1345 = vpop.f32.mrf.mxu0
  %v1346 = vadd.f32 %v1177, %v1345
  %v1347 = vpop.f32.mrf.mxu0
  %v1348 = vadd.f32 %v1179, %v1347
  %1349 = vmatmul.bf16.gmra.mxu0 %v659
  %v1350 = vpop.f32.mrf.mxu0
  %v1351 = vadd.f32 %v1182, %v1350
  %v1352 = vpop.f32.mrf.mxu0
  %v1353 = vadd.f32 %v1184, %v1352
  %1354 = vmatmul.bf16.gmra.mxu0 %v662
  %v1355 = vpop.f32.mrf.mxu0
  %v1356 = vadd.f32 %v1187, %v1355
  %v1357 = vpop.f32.mrf.mxu0
  %v1358 = vadd.f32 %v1189, %v1357
  %1359 = vmatmul.bf16.gmra.mxu0 %v665
  %v1360 = vpop.f32.mrf.mxu0
  %v1361 = vadd.f32 %v1192, %v1360
  %v1362 = vpop.f32.mrf.mxu0
  %v1363 = vadd.f32 %v1194, %v1362
  %1364 = vmatmul.bf16.gmra.mxu0 %v668
  %v1365 = vpop.f32.mrf.mxu0
  %v1366 = vadd.f32 %v1197, %v1365
  %v1367 = vpop.f32.mrf.mxu0
  %v1368 = vadd.f32 %v1199, %v1367
  %1369 = vmatmul.bf16.gmra.mxu0 %v671
  %v1370 = vpop.f32.mrf.mxu0
  %v1371 = vadd.f32 %v1202, %v1370
  %v1372 = vpop.f32.mrf.mxu0
  %v1373 = vadd.f32 %v1204, %v1372
  %1374 = vmatmul.bf16.gmra.mxu0 %v674
  %v1375 = vpop.f32.mrf.mxu0
  %v1376 = vadd.f32 %v1207, %v1375
  %v1377 = vpop.f32.mrf.mxu0
  %v1378 = vadd.f32 %v1209, %v1377
  %1379 = vmatmul.bf16.gmra.mxu0 %v677
  %v1380 = vpop.f32.mrf.mxu0
  %v1381 = vadd.f32 %v1212, %v1380
  %v1382 = vpop.f32.mrf.mxu0
  %v1383 = vadd.f32 %v1214, %v1382
  %1384 = vmatmul.bf16.gmra.mxu0 %v680
  %v1385 = vpop.f32.mrf.mxu0
  %v1386 = vadd.f32 %v1217, %v1385
  %v1387 = vpop.f32.mrf.mxu0
  %v1388 = vadd.f32 %v1219, %v1387
  %1389 = vmatmul.bf16.gmra.mxu0 %v683
  %v1390 = vpop.f32.mrf.mxu0
  %v1391 = vadd.f32 %v1222, %v1390
  %v1392 = vpop.f32.mrf.mxu0
  %v1393 = vadd.f32 %v1224, %v1392
  %1394 = vmatmul.bf16.gmra.mxu0 %v686
  %v1395 = vpop.f32.mrf.mxu0
  %v1396 = vadd.f32 %v1227, %v1395
  %v1397 = vpop.f32.mrf.mxu0
  %v1398 = vadd.f32 %v1229, %v1397
  %1399 = vmatmul.bf16.gmra.mxu0 %v689
  %v1400 = vpop.f32.mrf.mxu0
  %v1401 = vadd.f32 %v1232, %v1400
  %v1402 = vpop.f32.mrf.mxu0
  %v1403 = vadd.f32 %v1234, %v1402
  %1404 = vmatmul.bf16.gmra.mxu0 %v692
  %v1405 = vpop.f32.mrf.mxu0
  %v1406 = vadd.f32 %v1237, %v1405
  %v1407 = vpop.f32.mrf.mxu0
  %v1408 = vadd.f32 %v1239, %v1407
  %1409 = vmatmul.bf16.gmra.mxu0 %v695
  %v1410 = vpop.f32.mrf.mxu0
  %v1411 = vadd.f32 %v1242, %v1410
  %v1412 = vpop.f32.mrf.mxu0
  %v1413 = vadd.f32 %v1244, %v1412
  %1414 = vmatmul.bf16.gmra.mxu0 %v698
  %v1415 = vpop.f32.mrf.mxu0
  %v1416 = vadd.f32 %v1247, %v1415
  %v1417 = vpop.f32.mrf.mxu0
  %v1418 = vadd.f32 %v1249, %v1417
  %1419 = vmatmul.bf16.gmra.mxu0 %v701
  %v1420 = vpop.f32.mrf.mxu0
  %v1421 = vadd.f32 %v1252, %v1420
  %v1422 = vpop.f32.mrf.mxu0
  %v1423 = vadd.f32 %v1254, %v1422
  %1424 = vmatmul.bf16.gmra.mxu0 %v704
  %v1425 = vpop.f32.mrf.mxu0
  %v1426 = vadd.f32 %v1257, %v1425
  %v1427 = vpop.f32.mrf.mxu0
  %v1428 = vadd.f32 %v1259, %v1427
  %1429 = vmatmul.bf16.gmra.mxu0 %v707
  %v1430 = vpop.f32.mrf.mxu0
  %v1431 = vadd.f32 %v1262, %v1430
  %v1432 = vpop.f32.mrf.mxu0
  %v1433 = vadd.f32 %v1264, %v1432
  %1434 = vmatmul.bf16.gmra.mxu0 %v710
  %v1435 = vpop.f32.mrf.mxu0
  %v1436 = vadd.f32 %v1267, %v1435
  %v1437 = vpop.f32.mrf.mxu0
  %v1438 = vadd.f32 %v1269, %v1437
  %1439 = vmatmul.bf16.gmra.mxu0 %v713
  %v1440 = vpop.f32.mrf.mxu0
  %v1441 = vadd.f32 %v1272, %v1440
  %v1442 = vpop.f32.mrf.mxu0
  %v1443 = vadd.f32 %v1274, %v1442
  %1444 = vmatmul.bf16.gmra.mxu0 %v716
  %v1445 = vpop.f32.mrf.mxu0
  %v1446 = vadd.f32 %v1277, %v1445
  %v1447 = vpop.f32.mrf.mxu0
  %v1448 = vadd.f32 %v1279, %v1447
  %1449 = vmatmul.bf16.gmra.mxu0 %v719
  %v1450 = vpop.f32.mrf.mxu0
  %v1451 = vadd.f32 %v1282, %v1450
  %v1452 = vpop.f32.mrf.mxu0
  %v1453 = vadd.f32 %v1284, %v1452
  %1454 = vmatmul.bf16.gmra.mxu0 %v722
  %v1455 = vpop.f32.mrf.mxu0
  %v1456 = vadd.f32 %v1287, %v1455
  %v1457 = vpop.f32.mrf.mxu0
  %v1458 = vadd.f32 %v1289, %v1457
  %1459 = vmatmul.bf16.gmra.mxu0 %v725
  %v1460 = vpop.f32.mrf.mxu0
  %v1461 = vadd.f32 %v1292, %v1460
  %v1462 = vpop.f32.mrf.mxu0
  %v1463 = vadd.f32 %v1294, %v1462
  %1464 = vmatmul.bf16.gmra.mxu0 %v728
  %v1465 = vpop.f32.mrf.mxu0
  %v1466 = vadd.f32 %v1297, %v1465
  %v1467 = vpop.f32.mrf.mxu0
  %v1468 = vadd.f32 %v1299, %v1467
  %1469 = vmatmul.bf16.gmra.mxu0 %v731
  %v1470 = vpop.f32.mrf.mxu0
  %v1471 = vadd.f32 %v1302, %v1470
  %v1472 = vpop.f32.mrf.mxu0
  %v1473 = vadd.f32 %v1304, %v1472
  %1474 = vmatmul.bf16.gmra.mxu0 %v734
  %v1475 = vpop.f32.mrf.mxu0
  %v1476 = vadd.f32 %v1307, %v1475
  %v1477 = vpop.f32.mrf.mxu0
  %v1478 = vadd.f32 %v1309, %v1477
  %1479 = vmatmul.bf16.gmra.mxu0 %v737
  %v1480 = vpop.f32.mrf.mxu0
  %v1481 = vadd.f32 %v1312, %v1480
  %v1482 = vpop.f32.mrf.mxu0
  %v1483 = vadd.f32 %v1314, %v1482
  %1484 = vdwg.mxu0
  %v1485 = vadd.f32 %v82, %v1326
  %v1486 = vadd.f32 %v83, %v1328
  %v1487 = vadd.f32 %v84, %v1331
  %v1488 = vadd.f32 %v85, %v1333
  %v1489 = vadd.f32 %v86, %v1336
  %v1490 = vadd.f32 %v87, %v1338
  %v1491 = vadd.f32 %v88, %v1341
  %v1492 = vadd.f32 %v89, %v1343
  %v1493 = vadd.f32 %v90, %v1346
  %v1494 = vadd.f32 %v91, %v1348
  %v1495 = vadd.f32 %v92, %v1351
  %v1496 = vadd.f32 %v93, %v1353
  %v1497 = vadd.f32 %v94, %v1356
  %v1498 = vadd.f32 %v95, %v1358
  %v1499 = vadd.f32 %v96, %v1361
  %v1500 = vadd.f32 %v97, %v1363
  %v1501 = vadd.f32 %v98, %v1366
  %v1502 = vadd.f32 %v99, %v1368
  %v1503 = vadd.f32 %v100, %v1371
  %v1504 = vadd.f32 %v101, %v1373
  %v1505 = vadd.f32 %v102, %v1376
  %v1506 = vadd.f32 %v103, %v1378
  %v1507 = vadd.f32 %v104, %v1381
  %v1508 = vadd.f32 %v105, %v1383
  %v1509 = vadd.f32 %v106, %v1386
  %v1510 = vadd.f32 %v107, %v1388
  %v1511 = vadd.f32 %v108, %v1391
  %v1512 = vadd.f32 %v109, %v1393
  %v1513 = vadd.f32 %v110, %v1396
  %v1514 = vadd.f32 %v111, %v1398
  %v1515 = vadd.f32 %v112, %v1401
  %v1516 = vadd.f32 %v113, %v1403
  %v1517 = vadd.f32 %v114, %v1406
  %v1518 = vadd.f32 %v115, %v1408
  %v1519 = vadd.f32 %v116, %v1411
  %v1520 = vadd.f32 %v117, %v1413
  %v1521 = vadd.f32 %v118, %v1416
  %v1522 = vadd.f32 %v119, %v1418
  %v1523 = vadd.f32 %v120, %v1421
  %v1524 = vadd.f32 %v121, %v1423
  %v1525 = vadd.f32 %v122, %v1426
  %v1526 = vadd.f32 %v123, %v1428
  %v1527 = vadd.f32 %v124, %v1431
  %v1528 = vadd.f32 %v125, %v1433
  %v1529 = vadd.f32 %v126, %v1436
  %v1530 = vadd.f32 %v127, %v1438
  %v1531 = vadd.f32 %v128, %v1441
  %v1532 = vadd.f32 %v129, %v1443
  %v1533 = vadd.f32 %v130, %v1446
  %v1534 = vadd.f32 %v131, %v1448
  %v1535 = vadd.f32 %v132, %v1451
  %v1536 = vadd.f32 %v133, %v1453
  %v1537 = vadd.f32 %v134, %v1456
  %v1538 = vadd.f32 %v135, %v1458
  %v1539 = vadd.f32 %v136, %v1461
  %v1540 = vadd.f32 %v137, %v1463
  %v1541 = vadd.f32 %v138, %v1466
  %v1542 = vadd.f32 %v139, %v1468
  %v1543 = vadd.f32 %v140, %v1471
  %v1544 = vadd.f32 %v141, %v1473
  %v1545 = vadd.f32 %v142, %v1476
  %v1546 = vadd.f32 %v143, %v1478
  %v1547 = vadd.f32 %v144, %v1481
  %v1548 = vadd.f32 %v145, %v1483
  %1549 = vst [vmem:[#allocation2] sm:$0xff] %v1485
  %1550 = vst [vmem:[#allocation2 + $0x8] sm:$0xff] %v1486
  %1551 = vst [vmem:[#allocation2 + $0x10] sm:$0xff] %v1487
  %1552 = vst [vmem:[#allocation2 + $0x18] sm:$0xff] %v1488
  %1553 = vst [vmem:[#allocation2 + $0x20] sm:$0xff] %v1489
  %1554 = vst [vmem:[#allocation2 + $0x28] sm:$0xff] %v1490
  %1555 = vst [vmem:[#allocation2 + $0x30] sm:$0xff] %v1491
  %1556 = vst [vmem:[#allocation2 + $0x38] sm:$0xff] %v1492
  %1557 = vst [vmem:[#allocation2 + $0x40] sm:$0xff] %v1493
  %1558 = vst [vmem:[#allocation2 + $0x48] sm:$0xff] %v1494
  %1559 = vst [vmem:[#allocation2 + $0x50] sm:$0xff] %v1495
  %1560 = vst [vmem:[#allocation2 + $0x58] sm:$0xff] %v1496
  %1561 = vst [vmem:[#allocation2 + $0x60] sm:$0xff] %v1497
  %1562 = vst [vmem:[#allocation2 + $0x68] sm:$0xff] %v1498
  %1563 = vst [vmem:[#allocation2 + $0x70] sm:$0xff] %v1499
  %1564 = vst [vmem:[#allocation2 + $0x78] sm:$0xff] %v1500
  %1565 = vst [vmem:[#allocation2 + $0x80] sm:$0xff] %v1501
  %1566 = vst [vmem:[#allocation2 + $0x88] sm:$0xff] %v1502
  %1567 = vst [vmem:[#allocation2 + $0x90] sm:$0xff] %v1503
  %1568 = vst [vmem:[#allocation2 + $0x98] sm:$0xff] %v1504
  %1569 = vst [vmem:[#allocation2 + $0xa0] sm:$0xff] %v1505
  %1570 = vst [vmem:[#allocation2 + $0xa8] sm:$0xff] %v1506
  %1571 = vst [vmem:[#allocation2 + $0xb0] sm:$0xff] %v1507
  %1572 = vst [vmem:[#allocation2 + $0xb8] sm:$0xff] %v1508
  %1573 = vst [vmem:[#allocation2 + $0xc0] sm:$0xff] %v1509
  %1574 = vst [vmem:[#allocation2 + $0xc8] sm:$0xff] %v1510
  %1575 = vst [vmem:[#allocation2 + $0xd0] sm:$0xff] %v1511
  %1576 = vst [vmem:[#allocation2 + $0xd8] sm:$0xff] %v1512
  %1577 = vst [vmem:[#allocation2 + $0xe0] sm:$0xff] %v1513
  %1578 = vst [vmem:[#allocation2 + $0xe8] sm:$0xff] %v1514
  %1579 = vst [vmem:[#allocation2 + $0xf0] sm:$0xff] %v1515
  %1580 = vst [vmem:[#allocation2 + $0xf8] sm:$0xff] %v1516
  %1581 = vst [vmem:[#allocation2 + $0x100] sm:$0xff] %v1517
  %1582 = vst [vmem:[#allocation2 + $0x108] sm:$0xff] %v1518
  %1583 = vst [vmem:[#allocation2 + $0x110] sm:$0xff] %v1519
  %1584 = vst [vmem:[#allocation2 + $0x118] sm:$0xff] %v1520
  %1585 = vst [vmem:[#allocation2 + $0x120] sm:$0xff] %v1521
  %1586 = vst [vmem:[#allocation2 + $0x128] sm:$0xff] %v1522
  %1587 = vst [vmem:[#allocation2 + $0x130] sm:$0xff] %v1523
  %1588 = vst [vmem:[#allocation2 + $0x138] sm:$0xff] %v1524
  %1589 = vst [vmem:[#allocation2 + $0x140] sm:$0xff] %v1525
  %1590 = vst [vmem:[#allocation2 + $0x148] sm:$0xff] %v1526
  %1591 = vst [vmem:[#allocation2 + $0x150] sm:$0xff] %v1527
  %1592 = vst [vmem:[#allocation2 + $0x158] sm:$0xff] %v1528
  %1593 = vst [vmem:[#allocation2 + $0x160] sm:$0xff] %v1529
  %1594 = vst [vmem:[#allocation2 + $0x168] sm:$0xff] %v1530
  %1595 = vst [vmem:[#allocation2 + $0x170] sm:$0xff] %v1531
  %1596 = vst [vmem:[#allocation2 + $0x178] sm:$0xff] %v1532
  %1597 = vst [vmem:[#allocation2 + $0x180] sm:$0xff] %v1533
  %1598 = vst [vmem:[#allocation2 + $0x188] sm:$0xff] %v1534
  %1599 = vst [vmem:[#allocation2 + $0x190] sm:$0xff] %v1535
  %1600 = vst [vmem:[#allocation2 + $0x198] sm:$0xff] %v1536
  %1601 = vst [vmem:[#allocation2 + $0x1a0] sm:$0xff] %v1537
  %1602 = vst [vmem:[#allocation2 + $0x1a8] sm:$0xff] %v1538
  %1603 = vst [vmem:[#allocation2 + $0x1b0] sm:$0xff] %v1539
  %1604 = vst [vmem:[#allocation2 + $0x1b8] sm:$0xff] %v1540
  %1605 = vst [vmem:[#allocation2 + $0x1c0] sm:$0xff] %v1541
  %1606 = vst [vmem:[#allocation2 + $0x1c8] sm:$0xff] %v1542
  %1607 = vst [vmem:[#allocation2 + $0x1d0] sm:$0xff] %v1543
  %1608 = vst [vmem:[#allocation2 + $0x1d8] sm:$0xff] %v1544
  %1609 = vst [vmem:[#allocation2 + $0x1e0] sm:$0xff] %v1545
  %1610 = vst [vmem:[#allocation2 + $0x1e8] sm:$0xff] %v1546
  %1611 = vst [vmem:[#allocation2 + $0x1f0] sm:$0xff] %v1547
  %1612 = vst [vmem:[#allocation2 + $0x1f8] sm:$0xff] %v1548
  // Predicated region
  $region18: #{aspp_head_forward.12} parent=0 // pred_check
    %p1613 = pneg %p14
  $region19: #{aspp_head_forward.12} parent=0 // pred_check_branch
    %1615 = sbr.rel (%p1613) target = $region21
  $region20: #{aspp_head_forward.12} parent=0 // pred_region
    %v1616 = vld [vmem:[#allocation2] sm:$0xff]
    %v1617 = vld [vmem:[#allocation2 + $0x8] sm:$0xff]
    %v1618 = vld [vmem:[#allocation2 + $0x10] sm:$0xff]
    %v1619 = vld [vmem:[#allocation2 + $0x18] sm:$0xff]
    %v1620 = vld [vmem:[#allocation2 + $0x20] sm:$0xff]
    %v1621 = vld [vmem:[#allocation2 + $0x28] sm:$0xff]
    %v1622 = vld [vmem:[#allocation2 + $0x30] sm:$0xff]
    %v1623 = vld [vmem:[#allocation2 + $0x38] sm:$0xff]
    %v1624 = vld [vmem:[#allocation2 + $0x40] sm:$0xff]
    %v1625 = vld [vmem:[#allocation2 + $0x48] sm:$0xff]
    %v1626 = vld [vmem:[#allocation2 + $0x50] sm:$0xff]
    %v1627 = vld [vmem:[#allocation2 + $0x58] sm:$0xff]
    %v1628 = vld [vmem:[#allocation2 + $0x60] sm:$0xff]
    %v1629 = vld [vmem:[#allocation2 + $0x68] sm:$0xff]
    %v1630 = vld [vmem:[#allocation2 + $0x70] sm:$0xff]
    %v1631 = vld [vmem:[#allocation2 + $0x78] sm:$0xff]
    %v1632 = vld [vmem:[#allocation2 + $0x80] sm:$0xff]
    %v1633 = vld [vmem:[#allocation2 + $0x88] sm:$0xff]
    %v1634 = vld [vmem:[#allocation2 + $0x90] sm:$0xff]
    %v1635 = vld [vmem:[#allocation2 + $0x98] sm:$0xff]
    %v1636 = vld [vmem:[#allocation2 + $0xa0] sm:$0xff]
    %v1637 = vld [vmem:[#allocation2 + $0xa8] sm:$0xff]
    %v1638 = vld [vmem:[#allocation2 + $0xb0] sm:$0xff]
    %v1639 = vld [vmem:[#allocation2 + $0xb8] sm:$0xff]
    %v1640 = vld [vmem:[#allocation2 + $0xc0] sm:$0xff]
    %v1641 = vld [vmem:[#allocation2 + $0xc8] sm:$0xff]
    %v1642 = vld [vmem:[#allocation2 + $0xd0] sm:$0xff]
    %v1643 = vld [vmem:[#allocation2 + $0xd8] sm:$0xff]
    %v1644 = vld [vmem:[#allocation2 + $0xe0] sm:$0xff]
    %v1645 = vld [vmem:[#allocation2 + $0xe8] sm:$0xff]
    %v1646 = vld [vmem:[#allocation2 + $0xf0] sm:$0xff]
    %v1647 = vld [vmem:[#allocation2 + $0xf8] sm:$0xff]
    %v1648 = vld [vmem:[#allocation2 + $0x100] sm:$0xff]
    %v1649 = vld [vmem:[#allocation2 + $0x108] sm:$0xff]
    %v1650 = vld [vmem:[#allocation2 + $0x110] sm:$0xff]
    %v1651 = vld [vmem:[#allocation2 + $0x118] sm:$0xff]
    %v1652 = vld [vmem:[#allocation2 + $0x120] sm:$0xff]
    %v1653 = vld [vmem:[#allocation2 + $0x128] sm:$0xff]
    %v1654 = vld [vmem:[#allocation2 + $0x130] sm:$0xff]
    %v1655 = vld [vmem:[#allocation2 + $0x138] sm:$0xff]
    %v1656 = vld [vmem:[#allocation2 + $0x140] sm:$0xff]
    %v1657 = vld [vmem:[#allocation2 + $0x148] sm:$0xff]
    %v1658 = vld [vmem:[#allocation2 + $0x150] sm:$0xff]
    %v1659 = vld [vmem:[#allocation2 + $0x158] sm:$0xff]
    %v1660 = vld [vmem:[#allocation2 + $0x160] sm:$0xff]
    %v1661 = vld [vmem:[#allocation2 + $0x168] sm:$0xff]
    %v1662 = vld [vmem:[#allocation2 + $0x170] sm:$0xff]
    %v1663 = vld [vmem:[#allocation2 + $0x178] sm:$0xff]
    %v1664 = vld [vmem:[#allocation2 + $0x180] sm:$0xff]
    %v1665 = vld [vmem:[#allocation2 + $0x188] sm:$0xff]
    %v1666 = vld [vmem:[#allocation2 + $0x190] sm:$0xff]
    %v1667 = vld [vmem:[#allocation2 + $0x198] sm:$0xff]
    %v1668 = vld [vmem:[#allocation2 + $0x1a0] sm:$0xff]
    %v1669 = vld [vmem:[#allocation2 + $0x1a8] sm:$0xff]
    %v1670 = vld [vmem:[#allocation2 + $0x1b0] sm:$0xff]
    %v1671 = vld [vmem:[#allocation2 + $0x1b8] sm:$0xff]
    %v1672 = vld [vmem:[#allocation2 + $0x1c0] sm:$0xff]
    %v1673 = vld [vmem:[#allocation2 + $0x1c8] sm:$0xff]
    %v1674 = vld [vmem:[#allocation2 + $0x1d0] sm:$0xff]
    %v1675 = vld [vmem:[#allocation2 + $0x1d8] sm:$0xff]
    %v1676 = vld [vmem:[#allocation2 + $0x1e0] sm:$0xff]
    %v1677 = vld [vmem:[#allocation2 + $0x1e8] sm:$0xff]
    %v1678 = vld [vmem:[#allocation2 + $0x1f0] sm:$0xff]
    %v1679 = vld [vmem:[#allocation2 + $0x1f8] sm:$0xff]
    %v1680 = vld [vmem:[%s2] sm:$0x1]
    %v1682 = vperm.slane %v1680, 0
    %v1684 = vadd.f32 %v1616, %v1682
    %v1685 = vadd.f32 %v1617, %v1682
    %v1686 = vadd.f32 %v1618, %v1682
    %v1687 = vadd.f32 %v1619, %v1682
    %v1688 = vadd.f32 %v1620, %v1682
    %v1689 = vadd.f32 %v1621, %v1682
    %v1690 = vadd.f32 %v1622, %v1682
    %v1691 = vadd.f32 %v1623, %v1682
    %v1692 = vadd.f32 %v1624, %v1682
    %v1693 = vadd.f32 %v1625, %v1682
    %v1694 = vadd.f32 %v1626, %v1682
    %v1695 = vadd.f32 %v1627, %v1682
    %v1696 = vadd.f32 %v1628, %v1682
    %v1697 = vadd.f32 %v1629, %v1682
    %v1698 = vadd.f32 %v1630, %v1682
    %v1699 = vadd.f32 %v1631, %v1682
    %v1700 = vadd.f32 %v1632, %v1682
    %v1701 = vadd.f32 %v1633, %v1682
    %v1702 = vadd.f32 %v1634, %v1682
    %v1703 = vadd.f32 %v1635, %v1682
    %v1704 = vadd.f32 %v1636, %v1682
    %v1705 = vadd.f32 %v1637, %v1682
    %v1706 = vadd.f32 %v1638, %v1682
    %v1707 = vadd.f32 %v1639, %v1682
    %v1708 = vadd.f32 %v1640, %v1682
    %v1709 = vadd.f32 %v1641, %v1682
    %v1710 = vadd.f32 %v1642, %v1682
    %v1711 = vadd.f32 %v1643, %v1682
    %v1712 = vadd.f32 %v1644, %v1682
    %v1713 = vadd.f32 %v1645, %v1682
    %v1714 = vadd.f32 %v1646, %v1682
    %v1715 = vadd.f32 %v1647, %v1682
    %v1716 = vadd.f32 %v1648, %v1682
    %v1717 = vadd.f32 %v1649, %v1682
    %v1718 = vadd.f32 %v1650, %v1682
    %v1719 = vadd.f32 %v1651, %v1682
    %v1720 = vadd.f32 %v1652, %v1682
    %v1721 = vadd.f32 %v1653, %v1682
    %v1722 = vadd.f32 %v1654, %v1682
    %v1723 = vadd.f32 %v1655, %v1682
    %v1724 = vadd.f32 %v1656, %v1682
    %v1725 = vadd.f32 %v1657, %v1682
    %v1726 = vadd.f32 %v1658, %v1682
    %v1727 = vadd.f32 %v1659, %v1682
    %v1728 = vadd.f32 %v1660, %v1682
    %v1729 = vadd.f32 %v1661, %v1682
    %v1730 = vadd.f32 %v1662, %v1682
    %v1731 = vadd.f32 %v1663, %v1682
    %v1732 = vadd.f32 %v1664, %v1682
    %v1733 = vadd.f32 %v1665, %v1682
    %v1734 = vadd.f32 %v1666, %v1682
    %v1735 = vadd.f32 %v1667, %v1682
    %v1736 = vadd.f32 %v1668, %v1682
    %v1737 = vadd.f32 %v1669, %v1682
    %v1738 = vadd.f32 %v1670, %v1682
    %v1739 = vadd.f32 %v1671, %v1682
    %v1740 = vadd.f32 %v1672, %v1682
    %v1741 = vadd.f32 %v1673, %v1682
    %v1742 = vadd.f32 %v1674, %v1682
    %v1743 = vadd.f32 %v1675, %v1682
    %v1744 = vadd.f32 %v1676, %v1682
    %v1745 = vadd.f32 %v1677, %v1682
    %v1746 = vadd.f32 %v1678, %v1682
    %v1747 = vadd.f32 %v1679, %v1682
    %v1748 = vmax.f32 %v1684, 0.0
    %v1749 = vmax.f32 %v1685, 0.0
    %v1750 = vmax.f32 %v1686, 0.0
    %v1751 = vmax.f32 %v1687, 0.0
    %v1752 = vmax.f32 %v1688, 0.0
    %v1753 = vmax.f32 %v1689, 0.0
    %v1754 = vmax.f32 %v1690, 0.0
    %v1755 = vmax.f32 %v1691, 0.0
    %v1756 = vmax.f32 %v1692, 0.0
    %v1757 = vmax.f32 %v1693, 0.0
    %v1758 = vmax.f32 %v1694, 0.0
    %v1759 = vmax.f32 %v1695, 0.0
    %v1760 = vmax.f32 %v1696, 0.0
    %v1761 = vmax.f32 %v1697, 0.0
    %v1762 = vmax.f32 %v1698, 0.0
    %v1763 = vmax.f32 %v1699, 0.0
    %v1764 = vmax.f32 %v1700, 0.0
    %v1765 = vmax.f32 %v1701, 0.0
    %v1766 = vmax.f32 %v1702, 0.0
    %v1767 = vmax.f32 %v1703, 0.0
    %v1768 = vmax.f32 %v1704, 0.0
    %v1769 = vmax.f32 %v1705, 0.0
    %v1770 = vmax.f32 %v1706, 0.0
    %v1771 = vmax.f32 %v1707, 0.0
    %v1772 = vmax.f32 %v1708, 0.0
    %v1773 = vmax.f32 %v1709, 0.0
    %v1774 = vmax.f32 %v1710, 0.0
    %v1775 = vmax.f32 %v1711, 0.0
    %v1776 = vmax.f32 %v1712, 0.0
    %v1777 = vmax.f32 %v1713, 0.0
    %v1778 = vmax.f32 %v1714, 0.0
    %v1779 = vmax.f32 %v1715, 0.0
    %v1780 = vmax.f32 %v1716, 0.0
    %v1781 = vmax.f32 %v1717, 0.0
    %v1782 = vmax.f32 %v1718, 0.0
    %v1783 = vmax.f32 %v1719, 0.0
    %v1784 = vmax.f32 %v1720, 0.0
    %v1785 = vmax.f32 %v1721, 0.0
    %v1786 = vmax.f32 %v1722, 0.0
    %v1787 = vmax.f32 %v1723, 0.0
    %v1788 = vmax.f32 %v1724, 0.0
    %v1789 = vmax.f32 %v1725, 0.0
    %v1790 = vmax.f32 %v1726, 0.0
    %v1791 = vmax.f32 %v1727, 0.0
    %v1792 = vmax.f32 %v1728, 0.0
    %v1793 = vmax.f32 %v1729, 0.0
    %v1794 = vmax.f32 %v1730, 0.0
    %v1795 = vmax.f32 %v1731, 0.0
    %v1796 = vmax.f32 %v1732, 0.0
    %v1797 = vmax.f32 %v1733, 0.0
    %v1798 = vmax.f32 %v1734, 0.0
    %v1799 = vmax.f32 %v1735, 0.0
    %v1800 = vmax.f32 %v1736, 0.0
    %v1801 = vmax.f32 %v1737, 0.0
    %v1802 = vmax.f32 %v1738, 0.0
    %v1803 = vmax.f32 %v1739, 0.0
    %v1804 = vmax.f32 %v1740, 0.0
    %v1805 = vmax.f32 %v1741, 0.0
    %v1806 = vmax.f32 %v1742, 0.0
    %v1807 = vmax.f32 %v1743, 0.0
    %v1808 = vmax.f32 %v1744, 0.0
    %v1809 = vmax.f32 %v1745, 0.0
    %v1810 = vmax.f32 %v1746, 0.0
    %v1811 = vmax.f32 %v1747, 0.0
    %1812 = vst [vmem:[%s3] sm:$0xff] %v1748
    %1813 = vst [vmem:[%s3 + $0x8] sm:$0xff] %v1749
    %1814 = vst [vmem:[%s3 + $0x10] sm:$0xff] %v1750
    %1815 = vst [vmem:[%s3 + $0x18] sm:$0xff] %v1751
    %1816 = vst [vmem:[%s3 + $0x20] sm:$0xff] %v1752
    %1817 = vst [vmem:[%s3 + $0x28] sm:$0xff] %v1753
    %1818 = vst [vmem:[%s3 + $0x30] sm:$0xff] %v1754
    %1819 = vst [vmem:[%s3 + $0x38] sm:$0xff] %v1755
    %1820 = vst [vmem:[%s3 + $0x40] sm:$0xff] %v1756
    %1821 = vst [vmem:[%s3 + $0x48] sm:$0xff] %v1757
    %1822 = vst [vmem:[%s3 + $0x50] sm:$0xff] %v1758
    %1823 = vst [vmem:[%s3 + $0x58] sm:$0xff] %v1759
    %1824 = vst [vmem:[%s3 + $0x60] sm:$0xff] %v1760
    %1825 = vst [vmem:[%s3 + $0x68] sm:$0xff] %v1761
    %1826 = vst [vmem:[%s3 + $0x70] sm:$0xff] %v1762
    %1827 = vst [vmem:[%s3 + $0x78] sm:$0xff] %v1763
    %1828 = vst [vmem:[%s3 + $0x80] sm:$0xff] %v1764
    %1829 = vst [vmem:[%s3 + $0x88] sm:$0xff] %v1765
    %1830 = vst [vmem:[%s3 + $0x90] sm:$0xff] %v1766
    %1831 = vst [vmem:[%s3 + $0x98] sm:$0xff] %v1767
    %1832 = vst [vmem:[%s3 + $0xa0] sm:$0xff] %v1768
    %1833 = vst [vmem:[%s3 + $0xa8] sm:$0xff] %v1769
    %1834 = vst [vmem:[%s3 + $0xb0] sm:$0xff] %v1770
    %1835 = vst [vmem:[%s3 + $0xb8] sm:$0xff] %v1771
    %1836 = vst [vmem:[%s3 + $0xc0] sm:$0xff] %v1772
    %1837 = vst [vmem:[%s3 + $0xc8] sm:$0xff] %v1773
    %1838 = vst [vmem:[%s3 + $0xd0] sm:$0xff] %v1774
    %1839 = vst [vmem:[%s3 + $0xd8] sm:$0xff] %v1775
    %1840 = vst [vmem:[%s3 + $0xe0] sm:$0xff] %v1776
    %1841 = vst [vmem:[%s3 + $0xe8] sm:$0xff] %v1777
    %1842 = vst [vmem:[%s3 + $0xf0] sm:$0xff] %v1778
    %1843 = vst [vmem:[%s3 + $0xf8] sm:$0xff] %v1779
    %1844 = vst [vmem:[%s3 + $0x100] sm:$0xff] %v1780
    %1845 = vst [vmem:[%s3 + $0x108] sm:$0xff] %v1781
    %1846 = vst [vmem:[%s3 + $0x110] sm:$0xff] %v1782
    %1847 = vst [vmem:[%s3 + $0x118] sm:$0xff] %v1783
    %1848 = vst [vmem:[%s3 + $0x120] sm:$0xff] %v1784
    %1849 = vst [vmem:[%s3 + $0x128] sm:$0xff] %v1785
    %1850 = vst [vmem:[%s3 + $0x130] sm:$0xff] %v1786
    %1851 = vst [vmem:[%s3 + $0x138] sm:$0xff] %v1787
    %1852 = vst [vmem:[%s3 + $0x140] sm:$0xff] %v1788
    %1853 = vst [vmem:[%s3 + $0x148] sm:$0xff] %v1789
    %1854 = vst [vmem:[%s3 + $0x150] sm:$0xff] %v1790
    %1855 = vst [vmem:[%s3 + $0x158] sm:$0xff] %v1791
    %1856 = vst [vmem:[%s3 + $0x160] sm:$0xff] %v1792
    %1857 = vst [vmem:[%s3 + $0x168] sm:$0xff] %v1793
    %1858 = vst [vmem:[%s3 + $0x170] sm:$0xff] %v1794
    %1859 = vst [vmem:[%s3 + $0x178] sm:$0xff] %v1795
    %1860 = vst [vmem:[%s3 + $0x180] sm:$0xff] %v1796
    %1861 = vst [vmem:[%s3 + $0x188] sm:$0xff] %v1797
    %1862 = vst [vmem:[%s3 + $0x190] sm:$0xff] %v1798
    %1863 = vst [vmem:[%s3 + $0x198] sm:$0xff] %v1799
    %1864 = vst [vmem:[%s3 + $0x1a0] sm:$0xff] %v1800
    %1865 = vst [vmem:[%s3 + $0x1a8] sm:$0xff] %v1801
    %1866 = vst [vmem:[%s3 + $0x1b0] sm:$0xff] %v1802
    %1867 = vst [vmem:[%s3 + $0x1b8] sm:$0xff] %v1803
    %1868 = vst [vmem:[%s3 + $0x1c0] sm:$0xff] %v1804
    %1869 = vst [vmem:[%s3 + $0x1c8] sm:$0xff] %v1805
    %1870 = vst [vmem:[%s3 + $0x1d0] sm:$0xff] %v1806
    %1871 = vst [vmem:[%s3 + $0x1d8] sm:$0xff] %v1807
    %1872 = vst [vmem:[%s3 + $0x1e0] sm:$0xff] %v1808
    %1873 = vst [vmem:[%s3 + $0x1e8] sm:$0xff] %v1809
    %1874 = vst [vmem:[%s3 + $0x1f0] sm:$0xff] %v1810
    %1875 = vst [vmem:[%s3 + $0x1f8] sm:$0xff] %v1811
  $region21: #{aspp_head_forward.12} parent=0 // pred_fallthru
    _
  // Predicated region
  $region22: #{aspp_head_forward.12} parent=0 // pred_check
    _
  $region23: #{aspp_head_forward.12} parent=0 // pred_check_branch
    %1877 = sbr.rel (0) target = $region25
  $region24: #{aspp_head_forward.12} parent=0 // pred_region
    _
  $region25: #{aspp_head_forward.12} parent=0 // pred_fallthru
    _
  // Predicated region
  $region26: #{aspp_head_forward.12} parent=0 // pred_check
    _
  $region27: #{aspp_head_forward.12} parent=0 // pred_check_branch
    %1879 = sbr.rel (0) target = $region29
  $region28: #{aspp_head_forward.12} parent=0 // pred_region
    _
  $region29: #{aspp_head_forward.12} parent=0 // pred_fallthru
    _

// kernel: aspp_head_forward.13
$region0: #{aspp_head_forward.13}
  #allocation0 [shape = 'u32[]', space=smem, size = 0x4, offset = 0x4, fixed_abs, tag = 'smem constant byte address 0x4 - core index']
  #allocation1 [shape = 'u32[72,128]{1,0:T(1,128)}', space=vmem, size = 0x9000, scoped, tag = 'internal scratch']
  #allocation2 [shape = 'f32[512,128]{1,0:T(8,128)}', space=vmem, size = 0x40000, scoped, tag = 'scratch operand']
  %s0 = inlined_call_operand.vmem [shape: bf16[512,128], index: 0, kind: input, shape index: {}]
  %s1 = inlined_call_operand.vmem [shape: bf16[128,128], index: 1, kind: input, shape index: {}]
  %s2 = inlined_call_operand.vmem [shape: f32[1,128], index: 2, kind: input, shape index: {}]
  %s3 = inlined_call_operand.vmem [shape: f32[512,128], index: 3, kind: output, shape index: {}]
  %s4 = sld [smem:[#allocation0]]
  $region30: #{aspp_head_forward.13} parent=0
    _
  %s6 = ssub.s32 1, %s4
  %s7 = scalar_select 0, %s6, %s4
  // Predicated region
  $region2: #{aspp_head_forward.13} parent=0 // pred_check
    _
  $region3: #{aspp_head_forward.13} parent=0 // pred_check_branch
    %9 = sbr.rel (0) target = $region5
  $region4: #{aspp_head_forward.13} parent=0 // pred_region
    _
  $region5: #{aspp_head_forward.13} parent=0 // pred_fallthru
    _
  // Predicated region
  $region6: #{aspp_head_forward.13} parent=0 // pred_check
    _
  $region7: #{aspp_head_forward.13} parent=0 // pred_check_branch
    %11 = sbr.rel (0) target = $region9
  $region8: #{aspp_head_forward.13} parent=0 // pred_region
    _
  $region9: #{aspp_head_forward.13} parent=0 // pred_fallthru
    _
  // Predicated region
  $region10: #{aspp_head_forward.13} parent=0 // pred_check
    _
  $region11: #{aspp_head_forward.13} parent=0 // pred_check_branch
    %13 = sbr.rel (0) target = $region13
  $region12: #{aspp_head_forward.13} parent=0 // pred_region
    _
  $region13: #{aspp_head_forward.13} parent=0 // pred_fallthru
    _
  %p14 = scmp.eq.s32.totalorder 0, 0
  // Predicated region
  $region14: #{aspp_head_forward.13} parent=0 // pred_check
    %p15 = pneg %p14
  $region15: #{aspp_head_forward.13} parent=0 // pred_check_branch
    %17 = sbr.rel (%p15) target = $region17
  $region16: #{aspp_head_forward.13} parent=0 // pred_region
    %18 = vst [vmem:[#allocation2] sm:$0xff] 0.0
    %19 = vst [vmem:[#allocation2 + $0x8] sm:$0xff] 0.0
    %20 = vst [vmem:[#allocation2 + $0x10] sm:$0xff] 0.0
    %21 = vst [vmem:[#allocation2 + $0x18] sm:$0xff] 0.0
    %22 = vst [vmem:[#allocation2 + $0x20] sm:$0xff] 0.0
    %23 = vst [vmem:[#allocation2 + $0x28] sm:$0xff] 0.0
    %24 = vst [vmem:[#allocation2 + $0x30] sm:$0xff] 0.0
    %25 = vst [vmem:[#allocation2 + $0x38] sm:$0xff] 0.0
    %26 = vst [vmem:[#allocation2 + $0x40] sm:$0xff] 0.0
    %27 = vst [vmem:[#allocation2 + $0x48] sm:$0xff] 0.0
    %28 = vst [vmem:[#allocation2 + $0x50] sm:$0xff] 0.0
    %29 = vst [vmem:[#allocation2 + $0x58] sm:$0xff] 0.0
    %30 = vst [vmem:[#allocation2 + $0x60] sm:$0xff] 0.0
    %31 = vst [vmem:[#allocation2 + $0x68] sm:$0xff] 0.0
    %32 = vst [vmem:[#allocation2 + $0x70] sm:$0xff] 0.0
    %33 = vst [vmem:[#allocation2 + $0x78] sm:$0xff] 0.0
    %34 = vst [vmem:[#allocation2 + $0x80] sm:$0xff] 0.0
    %35 = vst [vmem:[#allocation2 + $0x88] sm:$0xff] 0.0
    %36 = vst [vmem:[#allocation2 + $0x90] sm:$0xff] 0.0
    %37 = vst [vmem:[#allocation2 + $0x98] sm:$0xff] 0.0
    %38 = vst [vmem:[#allocation2 + $0xa0] sm:$0xff] 0.0
    %39 = vst [vmem:[#allocation2 + $0xa8] sm:$0xff] 0.0
    %40 = vst [vmem:[#allocation2 + $0xb0] sm:$0xff] 0.0
    %41 = vst [vmem:[#allocation2 + $0xb8] sm:$0xff] 0.0
    %42 = vst [vmem:[#allocation2 + $0xc0] sm:$0xff] 0.0
    %43 = vst [vmem:[#allocation2 + $0xc8] sm:$0xff] 0.0
    %44 = vst [vmem:[#allocation2 + $0xd0] sm:$0xff] 0.0
    %45 = vst [vmem:[#allocation2 + $0xd8] sm:$0xff] 0.0
    %46 = vst [vmem:[#allocation2 + $0xe0] sm:$0xff] 0.0
    %47 = vst [vmem:[#allocation2 + $0xe8] sm:$0xff] 0.0
    %48 = vst [vmem:[#allocation2 + $0xf0] sm:$0xff] 0.0
    %49 = vst [vmem:[#allocation2 + $0xf8] sm:$0xff] 0.0
    %50 = vst [vmem:[#allocation2 + $0x100] sm:$0xff] 0.0
    %51 = vst [vmem:[#allocation2 + $0x108] sm:$0xff] 0.0
    %52 = vst [vmem:[#allocation2 + $0x110] sm:$0xff] 0.0
    %53 = vst [vmem:[#allocation2 + $0x118] sm:$0xff] 0.0
    %54 = vst [vmem:[#allocation2 + $0x120] sm:$0xff] 0.0
    %55 = vst [vmem:[#allocation2 + $0x128] sm:$0xff] 0.0
    %56 = vst [vmem:[#allocation2 + $0x130] sm:$0xff] 0.0
    %57 = vst [vmem:[#allocation2 + $0x138] sm:$0xff] 0.0
    %58 = vst [vmem:[#allocation2 + $0x140] sm:$0xff] 0.0
    %59 = vst [vmem:[#allocation2 + $0x148] sm:$0xff] 0.0
    %60 = vst [vmem:[#allocation2 + $0x150] sm:$0xff] 0.0
    %61 = vst [vmem:[#allocation2 + $0x158] sm:$0xff] 0.0
    %62 = vst [vmem:[#allocation2 + $0x160] sm:$0xff] 0.0
    %63 = vst [vmem:[#allocation2 + $0x168] sm:$0xff] 0.0
    %64 = vst [vmem:[#allocation2 + $0x170] sm:$0xff] 0.0
    %65 = vst [vmem:[#allocation2 + $0x178] sm:$0xff] 0.0
    %66 = vst [vmem:[#allocation2 + $0x180] sm:$0xff] 0.0
    %67 = vst [vmem:[#allocation2 + $0x188] sm:$0xff] 0.0
    %68 = vst [vmem:[#allocation2 + $0x190] sm:$0xff] 0.0
    %69 = vst [vmem:[#allocation2 + $0x198] sm:$0xff] 0.0
    %70 = vst [vmem:[#allocation2 + $0x1a0] sm:$0xff] 0.0
    %71 = vst [vmem:[#allocation2 + $0x1a8] sm:$0xff] 0.0
    %72 = vst [vmem:[#allocation2 + $0x1b0] sm:$0xff] 0.0
    %73 = vst [vmem:[#allocation2 + $0x1b8] sm:$0xff] 0.0
    %74 = vst [vmem:[#allocation2 + $0x1c0] sm:$0xff] 0.0
    %75 = vst [vmem:[#allocation2 + $0x1c8] sm:$0xff] 0.0
    %76 = vst [vmem:[#allocation2 + $0x1d0] sm:$0xff] 0.0
    %77 = vst [vmem:[#allocation2 + $0x1d8] sm:$0xff] 0.0
    %78 = vst [vmem:[#allocation2 + $0x1e0] sm:$0xff] 0.0
    %79 = vst [vmem:[#allocation2 + $0x1e8] sm:$0xff] 0.0
    %80 = vst [vmem:[#allocation2 + $0x1f0] sm:$0xff] 0.0
    %81 = vst [vmem:[#allocation2 + $0x1f8] sm:$0xff] 0.0
  $region17: #{aspp_head_forward.13} parent=0 // pred_fallthru
    _
  %v82 = vld [vmem:[#allocation2] sm:$0xff]
  %v83 = vld [vmem:[#allocation2 + $0x8] sm:$0xff]
  %v84 = vld [vmem:[#allocation2 + $0x10] sm:$0xff]
  %v85 = vld [vmem:[#allocation2 + $0x18] sm:$0xff]
  %v86 = vld [vmem:[#allocation2 + $0x20] sm:$0xff]
  %v87 = vld [vmem:[#allocation2 + $0x28] sm:$0xff]
  %v88 = vld [vmem:[#allocation2 + $0x30] sm:$0xff]
  %v89 = vld [vmem:[#allocation2 + $0x38] sm:$0xff]
  %v90 = vld [vmem:[#allocation2 + $0x40] sm:$0xff]
  %v91 = vld [vmem:[#allocation2 + $0x48] sm:$0xff]
  %v92 = vld [vmem:[#allocation2 + $0x50] sm:$0xff]
  %v93 = vld [vmem:[#allocation2 + $0x58] sm:$0xff]
  %v94 = vld [vmem:[#allocation2 + $0x60] sm:$0xff]
  %v95 = vld [vmem:[#allocation2 + $0x68] sm:$0xff]
  %v96 = vld [vmem:[#allocation2 + $0x70] sm:$0xff]
  %v97 = vld [vmem:[#allocation2 + $0x78] sm:$0xff]
  %v98 = vld [vmem:[#allocation2 + $0x80] sm:$0xff]
  %v99 = vld [vmem:[#allocation2 + $0x88] sm:$0xff]
  %v100 = vld [vmem:[#allocation2 + $0x90] sm:$0xff]
  %v101 = vld [vmem:[#allocation2 + $0x98] sm:$0xff]
  %v102 = vld [vmem:[#allocation2 + $0xa0] sm:$0xff]
  %v103 = vld [vmem:[#allocation2 + $0xa8] sm:$0xff]
  %v104 = vld [vmem:[#allocation2 + $0xb0] sm:$0xff]
  %v105 = vld [vmem:[#allocation2 + $0xb8] sm:$0xff]
  %v106 = vld [vmem:[#allocation2 + $0xc0] sm:$0xff]
  %v107 = vld [vmem:[#allocation2 + $0xc8] sm:$0xff]
  %v108 = vld [vmem:[#allocation2 + $0xd0] sm:$0xff]
  %v109 = vld [vmem:[#allocation2 + $0xd8] sm:$0xff]
  %v110 = vld [vmem:[#allocation2 + $0xe0] sm:$0xff]
  %v111 = vld [vmem:[#allocation2 + $0xe8] sm:$0xff]
  %v112 = vld [vmem:[#allocation2 + $0xf0] sm:$0xff]
  %v113 = vld [vmem:[#allocation2 + $0xf8] sm:$0xff]
  %v114 = vld [vmem:[#allocation2 + $0x100] sm:$0xff]
  %v115 = vld [vmem:[#allocation2 + $0x108] sm:$0xff]
  %v116 = vld [vmem:[#allocation2 + $0x110] sm:$0xff]
  %v117 = vld [vmem:[#allocation2 + $0x118] sm:$0xff]
  %v118 = vld [vmem:[#allocation2 + $0x120] sm:$0xff]
  %v119 = vld [vmem:[#allocation2 + $0x128] sm:$0xff]
  %v120 = vld [vmem:[#allocation2 + $0x130] sm:$0xff]
  %v121 = vld [vmem:[#allocation2 + $0x138] sm:$0xff]
  %v122 = vld [vmem:[#allocation2 + $0x140] sm:$0xff]
  %v123 = vld [vmem:[#allocation2 + $0x148] sm:$0xff]
  %v124 = vld [vmem:[#allocation2 + $0x150] sm:$0xff]
  %v125 = vld [vmem:[#allocation2 + $0x158] sm:$0xff]
  %v126 = vld [vmem:[#allocation2 + $0x160] sm:$0xff]
  %v127 = vld [vmem:[#allocation2 + $0x168] sm:$0xff]
  %v128 = vld [vmem:[#allocation2 + $0x170] sm:$0xff]
  %v129 = vld [vmem:[#allocation2 + $0x178] sm:$0xff]
  %v130 = vld [vmem:[#allocation2 + $0x180] sm:$0xff]
  %v131 = vld [vmem:[#allocation2 + $0x188] sm:$0xff]
  %v132 = vld [vmem:[#allocation2 + $0x190] sm:$0xff]
  %v133 = vld [vmem:[#allocation2 + $0x198] sm:$0xff]
  %v134 = vld [vmem:[#allocation2 + $0x1a0] sm:$0xff]
  %v135 = vld [vmem:[#allocation2 + $0x1a8] sm:$0xff]
  %v136 = vld [vmem:[#allocation2 + $0x1b0] sm:$0xff]
  %v137 = vld [vmem:[#allocation2 + $0x1b8] sm:$0xff]
  %v138 = vld [vmem:[#allocation2 + $0x1c0] sm:$0xff]
  %v139 = vld [vmem:[#allocation2 + $0x1c8] sm:$0xff]
  %v140 = vld [vmem:[#allocation2 + $0x1d0] sm:$0xff]
  %v141 = vld [vmem:[#allocation2 + $0x1d8] sm:$0xff]
  %v142 = vld [vmem:[#allocation2 + $0x1e0] sm:$0xff]
  %v143 = vld [vmem:[#allocation2 + $0x1e8] sm:$0xff]
  %v144 = vld [vmem:[#allocation2 + $0x1f0] sm:$0xff]
  %v145 = vld [vmem:[#allocation2 + $0x1f8] sm:$0xff]
  %v146 = vld [vmem:[%s0] sm:$0xf]
  %v147 = vld [vmem:[%s0 + $0x4] sm:$0xf]
  %v148 = vld [vmem:[%s0 + $0x8] sm:$0xf]
  %v149 = vld [vmem:[%s0 + $0xc] sm:$0xf]
  %v150 = vld [vmem:[%s0 + $0x10] sm:$0xf]
  %v151 = vld [vmem:[%s0 + $0x14] sm:$0xf]
  %v152 = vld [vmem:[%s0 + $0x18] sm:$0xf]
  %v153 = vld [vmem:[%s0 + $0x1c] sm:$0xf]
  %v154 = vld [vmem:[%s0 + $0x20] sm:$0xf]
  %v155 = vld [vmem:[%s0 + $0x24] sm:$0xf]
  %v156 = vld [vmem:[%s0 + $0x28] sm:$0xf]
  %v157 = vld [vmem:[%s0 + $0x2c] sm:$0xf]
  %v158 = vld [vmem:[%s0 + $0x30] sm:$0xf]
  %v159 = vld [vmem:[%s0 + $0x34] sm:$0xf]
  %v160 = vld [vmem:[%s0 + $0x38] sm:$0xf]
  %v161 = vld [vmem:[%s0 + $0x3c] sm:$0xf]
  %v162 = vld [vmem:[%s0 + $0x40] sm:$0xf]
  %v163 = vld [vmem:[%s0 + $0x44] sm:$0xf]
  %v164 = vld [vmem:[%s0 + $0x48] sm:$0xf]
  %v165 = vld [vmem:[%s0 + $0x4c] sm:$0xf]
  %v166 = vld [vmem:[%s0 + $0x50] sm:$0xf]
  %v167 = vld [vmem:[%s0 + $0x54] sm:$0xf]
  %v168 = vld [vmem:[%s0 + $0x58] sm:$0xf]
  %v169 = vld [vmem:[%s0 + $0x5c] sm:$0xf]
  %v170 = vld [vmem:[%s0 + $0x60] sm:$0xf]
  %v171 = vld [vmem:[%s0 + $0x64] sm:$0xf]
  %v172 = vld [vmem:[%s0 + $0x68] sm:$0xf]
  %v173 = vld [vmem:[%s0 + $0x6c] sm:$0xf]
  %v174 = vld [vmem:[%s0 + $0x70] sm:$0xf]
  %v175 = vld [vmem:[%s0 + $0x74] sm:$0xf]
  %v176 = vld [vmem:[%s0 + $0x78] sm:$0xf]
  %v177 = vld [vmem:[%s0 + $0x7c] sm:$0xf]
  %v178 = vld [vmem:[%s0 + $0x80] sm:$0xf]
  %v179 = vld [vmem:[%s0 + $0x84] sm:$0xf]
  %v180 = vld [vmem:[%s0 + $0x88] sm:$0xf]
  %v181 = vld [vmem:[%s0 + $0x8c] sm:$0xf]
  %v182 = vld [vmem:[%s0 + $0x90] sm:$0xf]
  %v183 = vld [vmem:[%s0 + $0x94] sm:$0xf]
  %v184 = vld [vmem:[%s0 + $0x98] sm:$0xf]
  %v185 = vld [vmem:[%s0 + $0x9c] sm:$0xf]
  %v186 = vld [vmem:[%s0 + $0xa0] sm:$0xf]
  %v187 = vld [vmem:[%s0 + $0xa4] sm:$0xf]
  %v188 = vld [vmem:[%s0 + $0xa8] sm:$0xf]
  %v189 = vld [vmem:[%s0 + $0xac] sm:$0xf]
  %v190 = vld [vmem:[%s0 + $0xb0] sm:$0xf]
  %v191 = vld [vmem:[%s0 + $0xb4] sm:$0xf]
  %v192 = vld [vmem:[%s0 + $0xb8] sm:$0xf]
  %v193 = vld [vmem:[%s0 + $0xbc] sm:$0xf]
  %v194 = vld [vmem:[%s0 + $0xc0] sm:$0xf]
  %v195 = vld [vmem:[%s0 + $0xc4] sm:$0xf]
  %v196 = vld [vmem:[%s0 + $0xc8] sm:$0xf]
  %v197 = vld [vmem:[%s0 + $0xcc] sm:$0xf]
  %v198 = vld [vmem:[%s0 + $0xd0] sm:$0xf]
  %v199 = vld [vmem:[%s0 + $0xd4] sm:$0xf]
  %v200 = vld [vmem:[%s0 + $0xd8] sm:$0xf]
  %v201 = vld [vmem:[%s0 + $0xdc] sm:$0xf]
  %v202 = vld [vmem:[%s0 + $0xe0] sm:$0xf]
  %v203 = vld [vmem:[%s0 + $0xe4] sm:$0xf]
  %v204 = vld [vmem:[%s0 + $0xe8] sm:$0xf]
  %v205 = vld [vmem:[%s0 + $0xec] sm:$0xf]
  %v206 = vld [vmem:[%s0 + $0xf0] sm:$0xf]
  %v207 = vld [vmem:[%s0 + $0xf4] sm:$0xf]
  %v208 = vld [vmem:[%s0 + $0xf8] sm:$0xf]
  %v209 = vld [vmem:[%s0 + $0xfc] sm:$0xf]
  %v210 = vld [vmem:[%s1] sm:$0xf]
  %v211 = vld [vmem:[%s1 + $0x4] sm:$0xf]
  %v212 = vld [vmem:[%s1 + $0x8] sm:$0xf]
  %v213 = vld [vmem:[%s1 + $0xc] sm:$0xf]
  %v214 = vld [vmem:[%s1 + $0x10] sm:$0xf]
  %v215 = vld [vmem:[%s1 + $0x14] sm:$0xf]
  %v216 = vld [vmem:[%s1 + $0x18] sm:$0xf]
  %v217 = vld [vmem:[%s1 + $0x1c] sm:$0xf]
  %v218 = vld [vmem:[%s1 + $0x20] sm:$0xf]
  %v219 = vld [vmem:[%s1 + $0x24] sm:$0xf]
  %v220 = vld [vmem:[%s1 + $0x28] sm:$0xf]
  %v221 = vld [vmem:[%s1 + $0x2c] sm:$0xf]
  %v222 = vld [vmem:[%s1 + $0x30] sm:$0xf]
  %v223 = vld [vmem:[%s1 + $0x34] sm:$0xf]
  %v224 = vld [vmem:[%s1 + $0x38] sm:$0xf]
  %v225 = vld [vmem:[%s1 + $0x3c] sm:$0xf]
  %v290 = vunpack.c.l.b16 %v146
  %v291 = vunpack.c.l.b16 %v147
  %v292 = vunpack.c.l.b16 %v148
  %v293 = vunpack.c.l.b16 %v149
  %v294 = vunpack.c.l.b16 %v150
  %v295 = vunpack.c.l.b16 %v151
  %v296 = vunpack.c.l.b16 %v152
  %v297 = vunpack.c.l.b16 %v153
  %v298 = vunpack.c.l.b16 %v154
  %v299 = vunpack.c.l.b16 %v155
  %v300 = vunpack.c.l.b16 %v156
  %v301 = vunpack.c.l.b16 %v157
  %v302 = vunpack.c.l.b16 %v158
  %v303 = vunpack.c.l.b16 %v159
  %v304 = vunpack.c.l.b16 %v160
  %v305 = vunpack.c.l.b16 %v161
  %v306 = vunpack.c.l.b16 %v162
  %v307 = vunpack.c.l.b16 %v163
  %v308 = vunpack.c.l.b16 %v164
  %v309 = vunpack.c.l.b16 %v165
  %v310 = vunpack.c.l.b16 %v166
  %v311 = vunpack.c.l.b16 %v167
  %v312 = vunpack.c.l.b16 %v168
  %v313 = vunpack.c.l.b16 %v169
  %v314 = vunpack.c.l.b16 %v170
  %v315 = vunpack.c.l.b16 %v171
  %v316 = vunpack.c.l.b16 %v172
  %v317 = vunpack.c.l.b16 %v173
  %v318 = vunpack.c.l.b16 %v174
  %v319 = vunpack.c.l.b16 %v175
  %v320 = vunpack.c.l.b16 %v176
  %v321 = vunpack.c.l.b16 %v177
  %v322 = vunpack.c.l.b16 %v178
  %v323 = vunpack.c.l.b16 %v179
  %v324 = vunpack.c.l.b16 %v180
  %v325 = vunpack.c.l.b16 %v181
  %v326 = vunpack.c.l.b16 %v182
  %v327 = vunpack.c.l.b16 %v183
  %v328 = vunpack.c.l.b16 %v184
  %v329 = vunpack.c.l.b16 %v185
  %v330 = vunpack.c.l.b16 %v186
  %v331 = vunpack.c.l.b16 %v187
  %v332 = vunpack.c.l.b16 %v188
  %v333 = vunpack.c.l.b16 %v189
  %v334 = vunpack.c.l.b16 %v190
  %v335 = vunpack.c.l.b16 %v191
  %v336 = vunpack.c.l.b16 %v192
  %v337 = vunpack.c.l.b16 %v193
  %v338 = vunpack.c.l.b16 %v194
  %v339 = vunpack.c.l.b16 %v195
  %v340 = vunpack.c.l.b16 %v196
  %v341 = vunpack.c.l.b16 %v197
  %v342 = vunpack.c.l.b16 %v198
  %v343 = vunpack.c.l.b16 %v199
  %v344 = vunpack.c.l.b16 %v200
  %v345 = vunpack.c.l.b16 %v201
  %v346 = vunpack.c.l.b16 %v202
  %v347 = vunpack.c.l.b16 %v203
  %v348 = vunpack.c.l.b16 %v204
  %v349 = vunpack.c.l.b16 %v205
  %v350 = vunpack.c.l.b16 %v206
  %v351 = vunpack.c.l.b16 %v207
  %v352 = vunpack.c.l.b16 %v208
  %v353 = vunpack.c.l.b16 %v209
  %v354 = vpack.c.b16 %v291, %v290
  %v355 = vpack.c.b16 %v293, %v292
  %v356 = vpack.c.b16 %v295, %v294
  %v357 = vpack.c.b16 %v297, %v296
  %v358 = vpack.c.b16 %v299, %v298
  %v359 = vpack.c.b16 %v301, %v300
  %v360 = vpack.c.b16 %v303, %v302
  %v361 = vpack.c.b16 %v305, %v304
  %v362 = vpack.c.b16 %v307, %v306
  %v363 = vpack.c.b16 %v309, %v308
  %v364 = vpack.c.b16 %v311, %v310
  %v365 = vpack.c.b16 %v313, %v312
  %v366 = vpack.c.b16 %v315, %v314
  %v367 = vpack.c.b16 %v317, %v316
  %v368 = vpack.c.b16 %v319, %v318
  %v369 = vpack.c.b16 %v321, %v320
  %v370 = vpack.c.b16 %v323, %v322
  %v371 = vpack.c.b16 %v325, %v324
  %v372 = vpack.c.b16 %v327, %v326
  %v373 = vpack.c.b16 %v329, %v328
  %v374 = vpack.c.b16 %v331, %v330
  %v375 = vpack.c.b16 %v333, %v332
  %v376 = vpack.c.b16 %v335, %v334
  %v377 = vpack.c.b16 %v337, %v336
  %v378 = vpack.c.b16 %v339, %v338
  %v379 = vpack.c.b16 %v341, %v340
  %v380 = vpack.c.b16 %v343, %v342
  %v381 = vpack.c.b16 %v345, %v344
  %v382 = vpack.c.b16 %v347, %v346
  %v383 = vpack.c.b16 %v349, %v348
  %v384 = vpack.c.b16 %v351, %v350
  %v385 = vpack.c.b16 %v353, %v352
  %v434 = vunpack.c.l.b16 %v210
  %v435 = vunpack.c.l.b16 %v211
  %v436 = vunpack.c.l.b16 %v212
  %v437 = vunpack.c.l.b16 %v213
  %v438 = vunpack.c.l.b16 %v214
  %v439 = vunpack.c.l.b16 %v215
  %v440 = vunpack.c.l.b16 %v216
  %v441 = vunpack.c.l.b16 %v217
  %v442 = vunpack.c.l.b16 %v218
  %v443 = vunpack.c.l.b16 %v219
  %v444 = vunpack.c.l.b16 %v220
  %v445 = vunpack.c.l.b16 %v221
  %v446 = vunpack.c.l.b16 %v222
  %v447 = vunpack.c.l.b16 %v223
  %v448 = vunpack.c.l.b16 %v224
  %v449 = vunpack.c.l.b16 %v225
  %v450 = vpack.c.b16 %v435, %v434
  %v451 = vpack.c.b16 %v437, %v436
  %v452 = vpack.c.b16 %v439, %v438
  %v453 = vpack.c.b16 %v441, %v440
  %v454 = vpack.c.b16 %v443, %v442
  %v455 = vpack.c.b16 %v445, %v444
  %v456 = vpack.c.b16 %v447, %v446
  %v457 = vpack.c.b16 %v449, %v448
  %466 = vmatpush.bf16.msra.mxu0 %v457
  %467 = vmatpush.bf16.msra.mxu0 %v456
  %468 = vmatpush.bf16.msra.mxu0 %v455
  %469 = vmatpush.bf16.msra.mxu0 %v454
  %470 = vmatpush.bf16.msra.mxu0 %v453
  %471 = vmatpush.bf16.msra.mxu0 %v452
  %472 = vmatpush.bf16.msra.mxu0 %v451
  %473 = vmatpush.bf16.msra.mxu0 %v450
  %474 = vmatmul.bf16.gmra.mxu0 %v354
  %v475 = vpop.f32.mrf.mxu0
  %v476 = vadd.f32 0.0, %v475
  %v477 = vpop.f32.mrf.mxu0
  %v478 = vadd.f32 0.0, %v477
  %479 = vmatmul.bf16.gmra.mxu0 %v355
  %v480 = vpop.f32.mrf.mxu0
  %v481 = vadd.f32 0.0, %v480
  %v482 = vpop.f32.mrf.mxu0
  %v483 = vadd.f32 0.0, %v482
  %484 = vmatmul.bf16.gmra.mxu0 %v356
  %v485 = vpop.f32.mrf.mxu0
  %v486 = vadd.f32 0.0, %v485
  %v487 = vpop.f32.mrf.mxu0
  %v488 = vadd.f32 0.0, %v487
  %489 = vmatmul.bf16.gmra.mxu0 %v357
  %v490 = vpop.f32.mrf.mxu0
  %v491 = vadd.f32 0.0, %v490
  %v492 = vpop.f32.mrf.mxu0
  %v493 = vadd.f32 0.0, %v492
  %494 = vmatmul.bf16.gmra.mxu0 %v358
  %v495 = vpop.f32.mrf.mxu0
  %v496 = vadd.f32 0.0, %v495
  %v497 = vpop.f32.mrf.mxu0
  %v498 = vadd.f32 0.0, %v497
  %499 = vmatmul.bf16.gmra.mxu0 %v359
  %v500 = vpop.f32.mrf.mxu0
  %v501 = vadd.f32 0.0, %v500
  %v502 = vpop.f32.mrf.mxu0
  %v503 = vadd.f32 0.0, %v502
  %504 = vmatmul.bf16.gmra.mxu0 %v360
  %v505 = vpop.f32.mrf.mxu0
  %v506 = vadd.f32 0.0, %v505
  %v507 = vpop.f32.mrf.mxu0
  %v508 = vadd.f32 0.0, %v507
  %509 = vmatmul.bf16.gmra.mxu0 %v361
  %v510 = vpop.f32.mrf.mxu0
  %v511 = vadd.f32 0.0, %v510
  %v512 = vpop.f32.mrf.mxu0
  %v513 = vadd.f32 0.0, %v512
  %514 = vmatmul.bf16.gmra.mxu0 %v362
  %v515 = vpop.f32.mrf.mxu0
  %v516 = vadd.f32 0.0, %v515
  %v517 = vpop.f32.mrf.mxu0
  %v518 = vadd.f32 0.0, %v517
  %519 = vmatmul.bf16.gmra.mxu0 %v363
  %v520 = vpop.f32.mrf.mxu0
  %v521 = vadd.f32 0.0, %v520
  %v522 = vpop.f32.mrf.mxu0
  %v523 = vadd.f32 0.0, %v522
  %524 = vmatmul.bf16.gmra.mxu0 %v364
  %v525 = vpop.f32.mrf.mxu0
  %v526 = vadd.f32 0.0, %v525
  %v527 = vpop.f32.mrf.mxu0
  %v528 = vadd.f32 0.0, %v527
  %529 = vmatmul.bf16.gmra.mxu0 %v365
  %v530 = vpop.f32.mrf.mxu0
  %v531 = vadd.f32 0.0, %v530
  %v532 = vpop.f32.mrf.mxu0
  %v533 = vadd.f32 0.0, %v532
  %534 = vmatmul.bf16.gmra.mxu0 %v366
  %v535 = vpop.f32.mrf.mxu0
  %v536 = vadd.f32 0.0, %v535
  %v537 = vpop.f32.mrf.mxu0
  %v538 = vadd.f32 0.0, %v537
  %539 = vmatmul.bf16.gmra.mxu0 %v367
  %v540 = vpop.f32.mrf.mxu0
  %v541 = vadd.f32 0.0, %v540
  %v542 = vpop.f32.mrf.mxu0
  %v543 = vadd.f32 0.0, %v542
  %544 = vmatmul.bf16.gmra.mxu0 %v368
  %v545 = vpop.f32.mrf.mxu0
  %v546 = vadd.f32 0.0, %v545
  %v547 = vpop.f32.mrf.mxu0
  %v548 = vadd.f32 0.0, %v547
  %549 = vmatmul.bf16.gmra.mxu0 %v369
  %v550 = vpop.f32.mrf.mxu0
  %v551 = vadd.f32 0.0, %v550
  %v552 = vpop.f32.mrf.mxu0
  %v553 = vadd.f32 0.0, %v552
  %554 = vmatmul.bf16.gmra.mxu0 %v370
  %v555 = vpop.f32.mrf.mxu0
  %v556 = vadd.f32 0.0, %v555
  %v557 = vpop.f32.mrf.mxu0
  %v558 = vadd.f32 0.0, %v557
  %559 = vmatmul.bf16.gmra.mxu0 %v371
  %v560 = vpop.f32.mrf.mxu0
  %v561 = vadd.f32 0.0, %v560
  %v562 = vpop.f32.mrf.mxu0
  %v563 = vadd.f32 0.0, %v562
  %564 = vmatmul.bf16.gmra.mxu0 %v372
  %v565 = vpop.f32.mrf.mxu0
  %v566 = vadd.f32 0.0, %v565
  %v567 = vpop.f32.mrf.mxu0
  %v568 = vadd.f32 0.0, %v567
  %569 = vmatmul.bf16.gmra.mxu0 %v373
  %v570 = vpop.f32.mrf.mxu0
  %v571 = vadd.f32 0.0, %v570
  %v572 = vpop.f32.mrf.mxu0
  %v573 = vadd.f32 0.0, %v572
  %574 = vmatmul.bf16.gmra.mxu0 %v374
  %v575 = vpop.f32.mrf.mxu0
  %v576 = vadd.f32 0.0, %v575
  %v577 = vpop.f32.mrf.mxu0
  %v578 = vadd.f32 0.0, %v577
  %579 = vmatmul.bf16.gmra.mxu0 %v375
  %v580 = vpop.f32.mrf.mxu0
  %v581 = vadd.f32 0.0, %v580
  %v582 = vpop.f32.mrf.mxu0
  %v583 = vadd.f32 0.0, %v582
  %584 = vmatmul.bf16.gmra.mxu0 %v376
  %v585 = vpop.f32.mrf.mxu0
  %v586 = vadd.f32 0.0, %v585
  %v587 = vpop.f32.mrf.mxu0
  %v588 = vadd.f32 0.0, %v587
  %589 = vmatmul.bf16.gmra.mxu0 %v377
  %v590 = vpop.f32.mrf.mxu0
  %v591 = vadd.f32 0.0, %v590
  %v592 = vpop.f32.mrf.mxu0
  %v593 = vadd.f32 0.0, %v592
  %594 = vmatmul.bf16.gmra.mxu0 %v378
  %v595 = vpop.f32.mrf.mxu0
  %v596 = vadd.f32 0.0, %v595
  %v597 = vpop.f32.mrf.mxu0
  %v598 = vadd.f32 0.0, %v597
  %599 = vmatmul.bf16.gmra.mxu0 %v379
  %v600 = vpop.f32.mrf.mxu0
  %v601 = vadd.f32 0.0, %v600
  %v602 = vpop.f32.mrf.mxu0
  %v603 = vadd.f32 0.0, %v602
  %604 = vmatmul.bf16.gmra.mxu0 %v380
  %v605 = vpop.f32.mrf.mxu0
  %v606 = vadd.f32 0.0, %v605
  %v607 = vpop.f32.mrf.mxu0
  %v608 = vadd.f32 0.0, %v607
  %609 = vmatmul.bf16.gmra.mxu0 %v381
  %v610 = vpop.f32.mrf.mxu0
  %v611 = vadd.f32 0.0, %v610
  %v612 = vpop.f32.mrf.mxu0
  %v613 = vadd.f32 0.0, %v612
  %614 = vmatmul.bf16.gmra.mxu0 %v382
  %v615 = vpop.f32.mrf.mxu0
  %v616 = vadd.f32 0.0, %v615
  %v617 = vpop.f32.mrf.mxu0
  %v618 = vadd.f32 0.0, %v617
  %619 = vmatmul.bf16.gmra.mxu0 %v383
  %v620 = vpop.f32.mrf.mxu0
  %v621 = vadd.f32 0.0, %v620
  %v622 = vpop.f32.mrf.mxu0
  %v623 = vadd.f32 0.0, %v622
  %624 = vmatmul.bf16.gmra.mxu0 %v384
  %v625 = vpop.f32.mrf.mxu0
  %v626 = vadd.f32 0.0, %v625
  %v627 = vpop.f32.mrf.mxu0
  %v628 = vadd.f32 0.0, %v627
  %629 = vmatmul.bf16.gmra.mxu0 %v385
  %v630 = vpop.f32.mrf.mxu0
  %v631 = vadd.f32 0.0, %v630
  %v632 = vpop.f32.mrf.mxu0
  %v633 = vadd.f32 0.0, %v632
  %634 = vdwg.mxu0
  %v635 = vadd.f32 %v82, %v476
  %v636 = vadd.f32 %v83, %v478
  %v637 = vadd.f32 %v84, %v481
  %v638 = vadd.f32 %v85, %v483
  %v639 = vadd.f32 %v86, %v486
  %v640 = vadd.f32 %v87, %v488
  %v641 = vadd.f32 %v88, %v491
  %v642 = vadd.f32 %v89, %v493
  %v643 = vadd.f32 %v90, %v496
  %v644 = vadd.f32 %v91, %v498
  %v645 = vadd.f32 %v92, %v501
  %v646 = vadd.f32 %v93, %v503
  %v647 = vadd.f32 %v94, %v506
  %v648 = vadd.f32 %v95, %v508
  %v649 = vadd.f32 %v96, %v511
  %v650 = vadd.f32 %v97, %v513
  %v651 = vadd.f32 %v98, %v516
  %v652 = vadd.f32 %v99, %v518
  %v653 = vadd.f32 %v100, %v521
  %v654 = vadd.f32 %v101, %v523
  %v655 = vadd.f32 %v102, %v526
  %v656 = vadd.f32 %v103, %v528
  %v657 = vadd.f32 %v104, %v531
  %v658 = vadd.f32 %v105, %v533
  %v659 = vadd.f32 %v106, %v536
  %v660 = vadd.f32 %v107, %v538
  %v661 = vadd.f32 %v108, %v541
  %v662 = vadd.f32 %v109, %v543
  %v663 = vadd.f32 %v110, %v546
  %v664 = vadd.f32 %v111, %v548
  %v665 = vadd.f32 %v112, %v551
  %v666 = vadd.f32 %v113, %v553
  %v667 = vadd.f32 %v114, %v556
  %v668 = vadd.f32 %v115, %v558
  %v669 = vadd.f32 %v116, %v561
  %v670 = vadd.f32 %v117, %v563
  %v671 = vadd.f32 %v118, %v566
  %v672 = vadd.f32 %v119, %v568
  %v673 = vadd.f32 %v120, %v571
  %v674 = vadd.f32 %v121, %v573
  %v675 = vadd.f32 %v122, %v576
  %v676 = vadd.f32 %v123, %v578
  %v677 = vadd.f32 %v124, %v581
  %v678 = vadd.f32 %v125, %v583
  %v679 = vadd.f32 %v126, %v586
  %v680 = vadd.f32 %v127, %v588
  %v681 = vadd.f32 %v128, %v591
  %v682 = vadd.f32 %v129, %v593
  %v683 = vadd.f32 %v130, %v596
  %v684 = vadd.f32 %v131, %v598
  %v685 = vadd.f32 %v132, %v601
  %v686 = vadd.f32 %v133, %v603
  %v687 = vadd.f32 %v134, %v606
  %v688 = vadd.f32 %v135, %v608
  %v689 = vadd.f32 %v136, %v611
  %v690 = vadd.f32 %v137, %v613
  %v691 = vadd.f32 %v138, %v616
  %v692 = vadd.f32 %v139, %v618
  %v693 = vadd.f32 %v140, %v621
  %v694 = vadd.f32 %v141, %v623
  %v695 = vadd.f32 %v142, %v626
  %v696 = vadd.f32 %v143, %v628
  %v697 = vadd.f32 %v144, %v631
  %v698 = vadd.f32 %v145, %v633
  %699 = vst [vmem:[#allocation2] sm:$0xff] %v635
  %700 = vst [vmem:[#allocation2 + $0x8] sm:$0xff] %v636
  %701 = vst [vmem:[#allocation2 + $0x10] sm:$0xff] %v637
  %702 = vst [vmem:[#allocation2 + $0x18] sm:$0xff] %v638
  %703 = vst [vmem:[#allocation2 + $0x20] sm:$0xff] %v639
  %704 = vst [vmem:[#allocation2 + $0x28] sm:$0xff] %v640
  %705 = vst [vmem:[#allocation2 + $0x30] sm:$0xff] %v641
  %706 = vst [vmem:[#allocation2 + $0x38] sm:$0xff] %v642
  %707 = vst [vmem:[#allocation2 + $0x40] sm:$0xff] %v643
  %708 = vst [vmem:[#allocation2 + $0x48] sm:$0xff] %v644
  %709 = vst [vmem:[#allocation2 + $0x50] sm:$0xff] %v645
  %710 = vst [vmem:[#allocation2 + $0x58] sm:$0xff] %v646
  %711 = vst [vmem:[#allocation2 + $0x60] sm:$0xff] %v647
  %712 = vst [vmem:[#allocation2 + $0x68] sm:$0xff] %v648
  %713 = vst [vmem:[#allocation2 + $0x70] sm:$0xff] %v649
  %714 = vst [vmem:[#allocation2 + $0x78] sm:$0xff] %v650
  %715 = vst [vmem:[#allocation2 + $0x80] sm:$0xff] %v651
  %716 = vst [vmem:[#allocation2 + $0x88] sm:$0xff] %v652
  %717 = vst [vmem:[#allocation2 + $0x90] sm:$0xff] %v653
  %718 = vst [vmem:[#allocation2 + $0x98] sm:$0xff] %v654
  %719 = vst [vmem:[#allocation2 + $0xa0] sm:$0xff] %v655
  %720 = vst [vmem:[#allocation2 + $0xa8] sm:$0xff] %v656
  %721 = vst [vmem:[#allocation2 + $0xb0] sm:$0xff] %v657
  %722 = vst [vmem:[#allocation2 + $0xb8] sm:$0xff] %v658
  %723 = vst [vmem:[#allocation2 + $0xc0] sm:$0xff] %v659
  %724 = vst [vmem:[#allocation2 + $0xc8] sm:$0xff] %v660
  %725 = vst [vmem:[#allocation2 + $0xd0] sm:$0xff] %v661
  %726 = vst [vmem:[#allocation2 + $0xd8] sm:$0xff] %v662
  %727 = vst [vmem:[#allocation2 + $0xe0] sm:$0xff] %v663
  %728 = vst [vmem:[#allocation2 + $0xe8] sm:$0xff] %v664
  %729 = vst [vmem:[#allocation2 + $0xf0] sm:$0xff] %v665
  %730 = vst [vmem:[#allocation2 + $0xf8] sm:$0xff] %v666
  %731 = vst [vmem:[#allocation2 + $0x100] sm:$0xff] %v667
  %732 = vst [vmem:[#allocation2 + $0x108] sm:$0xff] %v668
  %733 = vst [vmem:[#allocation2 + $0x110] sm:$0xff] %v669
  %734 = vst [vmem:[#allocation2 + $0x118] sm:$0xff] %v670
  %735 = vst [vmem:[#allocation2 + $0x120] sm:$0xff] %v671
  %736 = vst [vmem:[#allocation2 + $0x128] sm:$0xff] %v672
  %737 = vst [vmem:[#allocation2 + $0x130] sm:$0xff] %v673
  %738 = vst [vmem:[#allocation2 + $0x138] sm:$0xff] %v674
  %739 = vst [vmem:[#allocation2 + $0x140] sm:$0xff] %v675
  %740 = vst [vmem:[#allocation2 + $0x148] sm:$0xff] %v676
  %741 = vst [vmem:[#allocation2 + $0x150] sm:$0xff] %v677
  %742 = vst [vmem:[#allocation2 + $0x158] sm:$0xff] %v678
  %743 = vst [vmem:[#allocation2 + $0x160] sm:$0xff] %v679
  %744 = vst [vmem:[#allocation2 + $0x168] sm:$0xff] %v680
  %745 = vst [vmem:[#allocation2 + $0x170] sm:$0xff] %v681
  %746 = vst [vmem:[#allocation2 + $0x178] sm:$0xff] %v682
  %747 = vst [vmem:[#allocation2 + $0x180] sm:$0xff] %v683
  %748 = vst [vmem:[#allocation2 + $0x188] sm:$0xff] %v684
  %749 = vst [vmem:[#allocation2 + $0x190] sm:$0xff] %v685
  %750 = vst [vmem:[#allocation2 + $0x198] sm:$0xff] %v686
  %751 = vst [vmem:[#allocation2 + $0x1a0] sm:$0xff] %v687
  %752 = vst [vmem:[#allocation2 + $0x1a8] sm:$0xff] %v688
  %753 = vst [vmem:[#allocation2 + $0x1b0] sm:$0xff] %v689
  %754 = vst [vmem:[#allocation2 + $0x1b8] sm:$0xff] %v690
  %755 = vst [vmem:[#allocation2 + $0x1c0] sm:$0xff] %v691
  %756 = vst [vmem:[#allocation2 + $0x1c8] sm:$0xff] %v692
  %757 = vst [vmem:[#allocation2 + $0x1d0] sm:$0xff] %v693
  %758 = vst [vmem:[#allocation2 + $0x1d8] sm:$0xff] %v694
  %759 = vst [vmem:[#allocation2 + $0x1e0] sm:$0xff] %v695
  %760 = vst [vmem:[#allocation2 + $0x1e8] sm:$0xff] %v696
  %761 = vst [vmem:[#allocation2 + $0x1f0] sm:$0xff] %v697
  %762 = vst [vmem:[#allocation2 + $0x1f8] sm:$0xff] %v698
  // Predicated region
  $region18: #{aspp_head_forward.13} parent=0 // pred_check
    %p763 = pneg %p14
  $region19: #{aspp_head_forward.13} parent=0 // pred_check_branch
    %765 = sbr.rel (%p763) target = $region21
  $region20: #{aspp_head_forward.13} parent=0 // pred_region
    %v766 = vld [vmem:[#allocation2] sm:$0xff]
    %v767 = vld [vmem:[#allocation2 + $0x8] sm:$0xff]
    %v768 = vld [vmem:[#allocation2 + $0x10] sm:$0xff]
    %v769 = vld [vmem:[#allocation2 + $0x18] sm:$0xff]
    %v770 = vld [vmem:[#allocation2 + $0x20] sm:$0xff]
    %v771 = vld [vmem:[#allocation2 + $0x28] sm:$0xff]
    %v772 = vld [vmem:[#allocation2 + $0x30] sm:$0xff]
    %v773 = vld [vmem:[#allocation2 + $0x38] sm:$0xff]
    %v774 = vld [vmem:[#allocation2 + $0x40] sm:$0xff]
    %v775 = vld [vmem:[#allocation2 + $0x48] sm:$0xff]
    %v776 = vld [vmem:[#allocation2 + $0x50] sm:$0xff]
    %v777 = vld [vmem:[#allocation2 + $0x58] sm:$0xff]
    %v778 = vld [vmem:[#allocation2 + $0x60] sm:$0xff]
    %v779 = vld [vmem:[#allocation2 + $0x68] sm:$0xff]
    %v780 = vld [vmem:[#allocation2 + $0x70] sm:$0xff]
    %v781 = vld [vmem:[#allocation2 + $0x78] sm:$0xff]
    %v782 = vld [vmem:[#allocation2 + $0x80] sm:$0xff]
    %v783 = vld [vmem:[#allocation2 + $0x88] sm:$0xff]
    %v784 = vld [vmem:[#allocation2 + $0x90] sm:$0xff]
    %v785 = vld [vmem:[#allocation2 + $0x98] sm:$0xff]
    %v786 = vld [vmem:[#allocation2 + $0xa0] sm:$0xff]
    %v787 = vld [vmem:[#allocation2 + $0xa8] sm:$0xff]
    %v788 = vld [vmem:[#allocation2 + $0xb0] sm:$0xff]
    %v789 = vld [vmem:[#allocation2 + $0xb8] sm:$0xff]
    %v790 = vld [vmem:[#allocation2 + $0xc0] sm:$0xff]
    %v791 = vld [vmem:[#allocation2 + $0xc8] sm:$0xff]
    %v792 = vld [vmem:[#allocation2 + $0xd0] sm:$0xff]
    %v793 = vld [vmem:[#allocation2 + $0xd8] sm:$0xff]
    %v794 = vld [vmem:[#allocation2 + $0xe0] sm:$0xff]
    %v795 = vld [vmem:[#allocation2 + $0xe8] sm:$0xff]
    %v796 = vld [vmem:[#allocation2 + $0xf0] sm:$0xff]
    %v797 = vld [vmem:[#allocation2 + $0xf8] sm:$0xff]
    %v798 = vld [vmem:[#allocation2 + $0x100] sm:$0xff]
    %v799 = vld [vmem:[#allocation2 + $0x108] sm:$0xff]
    %v800 = vld [vmem:[#allocation2 + $0x110] sm:$0xff]
    %v801 = vld [vmem:[#allocation2 + $0x118] sm:$0xff]
    %v802 = vld [vmem:[#allocation2 + $0x120] sm:$0xff]
    %v803 = vld [vmem:[#allocation2 + $0x128] sm:$0xff]
    %v804 = vld [vmem:[#allocation2 + $0x130] sm:$0xff]
    %v805 = vld [vmem:[#allocation2 + $0x138] sm:$0xff]
    %v806 = vld [vmem:[#allocation2 + $0x140] sm:$0xff]
    %v807 = vld [vmem:[#allocation2 + $0x148] sm:$0xff]
    %v808 = vld [vmem:[#allocation2 + $0x150] sm:$0xff]
    %v809 = vld [vmem:[#allocation2 + $0x158] sm:$0xff]
    %v810 = vld [vmem:[#allocation2 + $0x160] sm:$0xff]
    %v811 = vld [vmem:[#allocation2 + $0x168] sm:$0xff]
    %v812 = vld [vmem:[#allocation2 + $0x170] sm:$0xff]
    %v813 = vld [vmem:[#allocation2 + $0x178] sm:$0xff]
    %v814 = vld [vmem:[#allocation2 + $0x180] sm:$0xff]
    %v815 = vld [vmem:[#allocation2 + $0x188] sm:$0xff]
    %v816 = vld [vmem:[#allocation2 + $0x190] sm:$0xff]
    %v817 = vld [vmem:[#allocation2 + $0x198] sm:$0xff]
    %v818 = vld [vmem:[#allocation2 + $0x1a0] sm:$0xff]
    %v819 = vld [vmem:[#allocation2 + $0x1a8] sm:$0xff]
    %v820 = vld [vmem:[#allocation2 + $0x1b0] sm:$0xff]
    %v821 = vld [vmem:[#allocation2 + $0x1b8] sm:$0xff]
    %v822 = vld [vmem:[#allocation2 + $0x1c0] sm:$0xff]
    %v823 = vld [vmem:[#allocation2 + $0x1c8] sm:$0xff]
    %v824 = vld [vmem:[#allocation2 + $0x1d0] sm:$0xff]
    %v825 = vld [vmem:[#allocation2 + $0x1d8] sm:$0xff]
    %v826 = vld [vmem:[#allocation2 + $0x1e0] sm:$0xff]
    %v827 = vld [vmem:[#allocation2 + $0x1e8] sm:$0xff]
    %v828 = vld [vmem:[#allocation2 + $0x1f0] sm:$0xff]
    %v829 = vld [vmem:[#allocation2 + $0x1f8] sm:$0xff]
    %v830 = vld [vmem:[%s2] sm:$0x1]
    %v832 = vperm.slane %v830, 0
    %v834 = vadd.f32 %v766, %v832
    %v835 = vadd.f32 %v767, %v832
    %v836 = vadd.f32 %v768, %v832
    %v837 = vadd.f32 %v769, %v832
    %v838 = vadd.f32 %v770, %v832
    %v839 = vadd.f32 %v771, %v832
    %v840 = vadd.f32 %v772, %v832
    %v841 = vadd.f32 %v773, %v832
    %v842 = vadd.f32 %v774, %v832
    %v843 = vadd.f32 %v775, %v832
    %v844 = vadd.f32 %v776, %v832
    %v845 = vadd.f32 %v777, %v832
    %v846 = vadd.f32 %v778, %v832
    %v847 = vadd.f32 %v779, %v832
    %v848 = vadd.f32 %v780, %v832
    %v849 = vadd.f32 %v781, %v832
    %v850 = vadd.f32 %v782, %v832
    %v851 = vadd.f32 %v783, %v832
    %v852 = vadd.f32 %v784, %v832
    %v853 = vadd.f32 %v785, %v832
    %v854 = vadd.f32 %v786, %v832
    %v855 = vadd.f32 %v787, %v832
    %v856 = vadd.f32 %v788, %v832
    %v857 = vadd.f32 %v789, %v832
    %v858 = vadd.f32 %v790, %v832
    %v859 = vadd.f32 %v791, %v832
    %v860 = vadd.f32 %v792, %v832
    %v861 = vadd.f32 %v793, %v832
    %v862 = vadd.f32 %v794, %v832
    %v863 = vadd.f32 %v795, %v832
    %v864 = vadd.f32 %v796, %v832
    %v865 = vadd.f32 %v797, %v832
    %v866 = vadd.f32 %v798, %v832
    %v867 = vadd.f32 %v799, %v832
    %v868 = vadd.f32 %v800, %v832
    %v869 = vadd.f32 %v801, %v832
    %v870 = vadd.f32 %v802, %v832
    %v871 = vadd.f32 %v803, %v832
    %v872 = vadd.f32 %v804, %v832
    %v873 = vadd.f32 %v805, %v832
    %v874 = vadd.f32 %v806, %v832
    %v875 = vadd.f32 %v807, %v832
    %v876 = vadd.f32 %v808, %v832
    %v877 = vadd.f32 %v809, %v832
    %v878 = vadd.f32 %v810, %v832
    %v879 = vadd.f32 %v811, %v832
    %v880 = vadd.f32 %v812, %v832
    %v881 = vadd.f32 %v813, %v832
    %v882 = vadd.f32 %v814, %v832
    %v883 = vadd.f32 %v815, %v832
    %v884 = vadd.f32 %v816, %v832
    %v885 = vadd.f32 %v817, %v832
    %v886 = vadd.f32 %v818, %v832
    %v887 = vadd.f32 %v819, %v832
    %v888 = vadd.f32 %v820, %v832
    %v889 = vadd.f32 %v821, %v832
    %v890 = vadd.f32 %v822, %v832
    %v891 = vadd.f32 %v823, %v832
    %v892 = vadd.f32 %v824, %v832
    %v893 = vadd.f32 %v825, %v832
    %v894 = vadd.f32 %v826, %v832
    %v895 = vadd.f32 %v827, %v832
    %v896 = vadd.f32 %v828, %v832
    %v897 = vadd.f32 %v829, %v832
    %898 = vst [vmem:[%s3] sm:$0xff] %v834
    %899 = vst [vmem:[%s3 + $0x8] sm:$0xff] %v835
    %900 = vst [vmem:[%s3 + $0x10] sm:$0xff] %v836
    %901 = vst [vmem:[%s3 + $0x18] sm:$0xff] %v837
    %902 = vst [vmem:[%s3 + $0x20] sm:$0xff] %v838
    %903 = vst [vmem:[%s3 + $0x28] sm:$0xff] %v839
    %904 = vst [vmem:[%s3 + $0x30] sm:$0xff] %v840
    %905 = vst [vmem:[%s3 + $0x38] sm:$0xff] %v841
    %906 = vst [vmem:[%s3 + $0x40] sm:$0xff] %v842
    %907 = vst [vmem:[%s3 + $0x48] sm:$0xff] %v843
    %908 = vst [vmem:[%s3 + $0x50] sm:$0xff] %v844
    %909 = vst [vmem:[%s3 + $0x58] sm:$0xff] %v845
    %910 = vst [vmem:[%s3 + $0x60] sm:$0xff] %v846
    %911 = vst [vmem:[%s3 + $0x68] sm:$0xff] %v847
    %912 = vst [vmem:[%s3 + $0x70] sm:$0xff] %v848
    %913 = vst [vmem:[%s3 + $0x78] sm:$0xff] %v849
    %914 = vst [vmem:[%s3 + $0x80] sm:$0xff] %v850
    %915 = vst [vmem:[%s3 + $0x88] sm:$0xff] %v851
    %916 = vst [vmem:[%s3 + $0x90] sm:$0xff] %v852
    %917 = vst [vmem:[%s3 + $0x98] sm:$0xff] %v853
    %918 = vst [vmem:[%s3 + $0xa0] sm:$0xff] %v854
    %919 = vst [vmem:[%s3 + $0xa8] sm:$0xff] %v855
    %920 = vst [vmem:[%s3 + $0xb0] sm:$0xff] %v856
    %921 = vst [vmem:[%s3 + $0xb8] sm:$0xff] %v857
    %922 = vst [vmem:[%s3 + $0xc0] sm:$0xff] %v858
    %923 = vst [vmem:[%s3 + $0xc8] sm:$0xff] %v859
    %924 = vst [vmem:[%s3 + $0xd0] sm:$0xff] %v860
    %925 = vst [vmem:[%s3 + $0xd8] sm:$0xff] %v861
    %926 = vst [vmem:[%s3 + $0xe0] sm:$0xff] %v862
    %927 = vst [vmem:[%s3 + $0xe8] sm:$0xff] %v863
    %928 = vst [vmem:[%s3 + $0xf0] sm:$0xff] %v864
    %929 = vst [vmem:[%s3 + $0xf8] sm:$0xff] %v865
    %930 = vst [vmem:[%s3 + $0x100] sm:$0xff] %v866
    %931 = vst [vmem:[%s3 + $0x108] sm:$0xff] %v867
    %932 = vst [vmem:[%s3 + $0x110] sm:$0xff] %v868
    %933 = vst [vmem:[%s3 + $0x118] sm:$0xff] %v869
    %934 = vst [vmem:[%s3 + $0x120] sm:$0xff] %v870
    %935 = vst [vmem:[%s3 + $0x128] sm:$0xff] %v871
    %936 = vst [vmem:[%s3 + $0x130] sm:$0xff] %v872
    %937 = vst [vmem:[%s3 + $0x138] sm:$0xff] %v873
    %938 = vst [vmem:[%s3 + $0x140] sm:$0xff] %v874
    %939 = vst [vmem:[%s3 + $0x148] sm:$0xff] %v875
    %940 = vst [vmem:[%s3 + $0x150] sm:$0xff] %v876
    %941 = vst [vmem:[%s3 + $0x158] sm:$0xff] %v877
    %942 = vst [vmem:[%s3 + $0x160] sm:$0xff] %v878
    %943 = vst [vmem:[%s3 + $0x168] sm:$0xff] %v879
    %944 = vst [vmem:[%s3 + $0x170] sm:$0xff] %v880
    %945 = vst [vmem:[%s3 + $0x178] sm:$0xff] %v881
    %946 = vst [vmem:[%s3 + $0x180] sm:$0xff] %v882
    %947 = vst [vmem:[%s3 + $0x188] sm:$0xff] %v883
    %948 = vst [vmem:[%s3 + $0x190] sm:$0xff] %v884
    %949 = vst [vmem:[%s3 + $0x198] sm:$0xff] %v885
    %950 = vst [vmem:[%s3 + $0x1a0] sm:$0xff] %v886
    %951 = vst [vmem:[%s3 + $0x1a8] sm:$0xff] %v887
    %952 = vst [vmem:[%s3 + $0x1b0] sm:$0xff] %v888
    %953 = vst [vmem:[%s3 + $0x1b8] sm:$0xff] %v889
    %954 = vst [vmem:[%s3 + $0x1c0] sm:$0xff] %v890
    %955 = vst [vmem:[%s3 + $0x1c8] sm:$0xff] %v891
    %956 = vst [vmem:[%s3 + $0x1d0] sm:$0xff] %v892
    %957 = vst [vmem:[%s3 + $0x1d8] sm:$0xff] %v893
    %958 = vst [vmem:[%s3 + $0x1e0] sm:$0xff] %v894
    %959 = vst [vmem:[%s3 + $0x1e8] sm:$0xff] %v895
    %960 = vst [vmem:[%s3 + $0x1f0] sm:$0xff] %v896
    %961 = vst [vmem:[%s3 + $0x1f8] sm:$0xff] %v897
  $region21: #{aspp_head_forward.13} parent=0 // pred_fallthru
    _
  // Predicated region
  $region22: #{aspp_head_forward.13} parent=0 // pred_check
    _
  $region23: #{aspp_head_forward.13} parent=0 // pred_check_branch
    %963 = sbr.rel (0) target = $region25
  $region24: #{aspp_head_forward.13} parent=0 // pred_region
    _
  $region25: #{aspp_head_forward.13} parent=0 // pred_fallthru
    _
  // Predicated region
  $region26: #{aspp_head_forward.13} parent=0 // pred_check
    _
  $region27: #{aspp_head_forward.13} parent=0 // pred_check_branch
    %965 = sbr.rel (0) target = $region29
  $region28: #{aspp_head_forward.13} parent=0 // pred_region
    _
  $region29: #{aspp_head_forward.13} parent=0 // pred_fallthru
    _

</llo_original>
